<compile_context>
chip_gen: v5e
topology: v5e:2x2
jax: 0.10.0
libtpu: 0.0.40
codegen_flags: <defaults>
</compile_context>

<pallas_src>
import functools

import jax
import jax.numpy as jnp
from jax.experimental import pallas as pl
from jax.experimental.pallas import tpu as pltpu


def _round_up(x, m):
    return ((x + m - 1) // m) * m


def _vmem_limit_bytes():
    """Per-generation scoped-VMEM cap (v7x has 64 MiB physical, v5e/v6e 128)."""
    cap = 64 * 1024 * 1024            # conservative fallback (safe on v7x)
    try:
        info = pltpu.get_tpu_info()
        cap = int(getattr(info, "vmem_capacity_bytes", cap))
    except Exception:
        pass
    # ~7/8 of physical, capped at 100 MiB: 56 MiB on v7x, 96-100 MiB on v5e/v6e.
    return min((cap * 7) // 8, 100 * 1024 * 1024)


def _choose_tiles(M, V, H, vmem_limit, tm_target, tv_target):
    """Pick (tm, tv) so the double-buffered working set fits the VMEM budget."""
    tm = min(tm_target, _round_up(M, 128))
    tv = min(tv_target, _round_up(V, 128))

    def working_set(tm_, tv_):
        x_buf = 2 * tm_ * H * 2                    # bf16 x, double-buffered
        w_buf = 2 * H * tv_ * 2                    # bf16 W tile, double-buffered
        io_buf = 2 * tm_ * 4 + 2 * tm_ * 4         # tok + out blocks
        scratch = 3 * tm_ * 4                      # m / l / tgt accumulators
        temps = min(tm_, 256) * tv_ * 4 * 2        # logits + exp temporaries
        return x_buf + w_buf + io_buf + scratch + temps

    budget = int(0.70 * vmem_limit)
    while working_set(tm, tv) > budget and tv > 256:
        tv //= 2
    while working_set(tm, tv) > budget and tm > 128:
        tm //= 2
    return tm, tv


# ----------------------------- Pallas kernel -------------------------------

def _spin_logprob_kernel(x_ref, w_ref, tok_ref, out_ref,
                         m_sc, l_sc, tgt_sc, *, tm_sub, tv, v_actual):
    # x_ref:   (1, TM, H)  bf16   one M tile of gathered embeddings (one model)
    #                             -- resident across the whole vocab sweep
    # w_ref:   (1, H, TV)  bf16   one vocab tile of the output projection
    # tok_ref: (TM, 1)     int32  target token ids for this M tile
    # out_ref: (1, TM, 1)  f32    per-token log-prob (written at last V step)
    # m_sc/l_sc/tgt_sc: (TM, 1) f32 running max / running sum / target logit
    v_idx = pl.program_id(2)

    @pl.when(v_idx == 0)
    def _():
        m_sc[...] = jnp.full_like(m_sc, -jnp.inf)
        l_sc[...] = jnp.zeros_like(l_sc)
        tgt_sc[...] = jnp.zeros_like(tgt_sc)

    w = w_ref[0]                                   # (H, TV)  bf16
    tm = x_ref.shape[1]
    n_sub = tm // tm_sub
    base_col = v_idx * tv

    # The W vocab tile stays resident in VMEM while we sweep TM_SUB-row
    # sub-tiles of the (already resident) x block -> W HBM traffic is
    # amortized over the full TM rows, not per matmul sub-tile.
    for s in range(n_sub):                         # static, short, unrolled
        r0, r1 = s * tm_sub, (s + 1) * tm_sub
        x = x_ref[0, r0:r1, :]                     # (TM_SUB, H) bf16

        # MXU: bf16 x bf16 -> f32 accumulate
        logits = jnp.dot(x, w, preferred_element_type=jnp.float32)

        # global vocab column index of each lane in this tile
        col = base_col + jax.lax.broadcasted_iota(jnp.int32, logits.shape, 1)
        if v_actual % tv != 0:
            # mask ghost (padded) vocab lanes out of the logsumexp
            logits = jnp.where(col < v_actual, logits, -jnp.inf)

        # online target-logit gather: fused compare + select + lane reduce
        tok = tok_ref[r0:r1, :]                    # (TM_SUB, 1) int32
        tgt_sc[r0:r1, :] += jnp.sum(jnp.where(col == tok, logits, 0.0),
                                    axis=-1, keepdims=True)

        # online logsumexp over the vocab tiles (all math in f32)
        m_prev = m_sc[r0:r1, :]
        m_new = jnp.maximum(m_prev, jnp.max(logits, axis=-1, keepdims=True))
        alpha = jnp.exp(m_prev - m_new)
        l_sc[r0:r1, :] = alpha * l_sc[r0:r1, :] + jnp.sum(
            jnp.exp(logits - m_new), axis=-1, keepdims=True)
        m_sc[r0:r1, :] = m_new

    @pl.when(v_idx == pl.num_programs(2) - 1)
    def _():
        # TODO(synk): lane-dense (1, TM) output needs a sublane->lane relayout
        # of the (TM,1) accumulator column; kept (TM,1) for lowering safety.
        out_ref[0] = tgt_sc[...] - (m_sc[...] + jnp.log(l_sc[...]))


def spin_token_logprobs(emb_stack, w_stack, seq, *,
                        tm_target=512, compute_dtype=jnp.bfloat16):
    """Per-token log P(token) for every (model, row, position).

    emb_stack: (G, V, H) f32, w_stack: (G, H, V) f32, seq: (R, N) int32 with
    pad already remapped to 0.  Returns (G, R, N) f32.
    """
    G, V, H = emb_stack.shape
    R, N = seq.shape
    M = R * N

    vmem_limit = _vmem_limit_bytes()
    # Bigger vocab tiles on the 128-MiB-VMEM parts (v5e/v6e), 512 on v7x.
    tv_target = 1024 if vmem_limit > 64 * 1024 * 1024 else 512
    tm, tv = _choose_tiles(M, V, H, vmem_limit, tm_target, tv_target)
    tm_sub = 256 if tm % 256 == 0 else 128
    tm_sub = min(tm_sub, tm)

    m_pad = _round_up(M, tm)
    v_pad = _round_up(V, tv)

    seq_flat = jnp.pad(seq.reshape(M).astype(jnp.int32), (0, m_pad - M))
    tok2d = seq_flat[:, None]                                     # (Mp, 1)

    # Embedding gather in bf16 (halves the HBM stream of the gathered acts).
    # TODO(synk): move this gather in-kernel (scalar-prefetch token ids +
    # per-row DMA from an HBM-resident table) to remove the (G, Mp, H)
    # intermediate entirely; at real H/M it is an extra HBM round trip.
    x = jnp.take(emb_stack, seq_flat, axis=1).astype(compute_dtype)  # (G,Mp,H)
    w = w_stack.astype(compute_dtype)                                # (G,H,V)
    if v_pad != V:
        w = jnp.pad(w, ((0, 0), (0, 0), (0, v_pad - V)))

    grid = (G, m_pad // tm, v_pad // tv)

    # TODO(synk): add pipeline_mode=pl.Buffered(3) on the W spec once VMEM
    # headroom is verified per generation (hides the m-tile rollover bubble).
    out = pl.pallas_call(
        functools.partial(_spin_logprob_kernel,
                          tm_sub=tm_sub, tv=tv, v_actual=V),
        out_shape=jax.ShapeDtypeStruct((G, m_pad, 1), jnp.float32),
        grid=grid,
        in_specs=[
            # x tile: resident across the whole vocab sweep (streamed once)
            pl.BlockSpec((1, tm, H), lambda g, m, v: (g, m, 0)),
            # W vocab tile: re-streamed once per (model, M-outer tile)
            pl.BlockSpec((1, H, tv), lambda g, m, v: (g, 0, v)),
            # target ids for this M tile
            pl.BlockSpec((tm, 1), lambda g, m, v: (m, 0)),
        ],
        out_specs=pl.BlockSpec((1, tm, 1), lambda g, m, v: (g, m, 0)),
        scratch_shapes=[pltpu.VMEM((tm, 1), jnp.float32)] * 3,
        compiler_params=pltpu.CompilerParams(
            # G leading + parallel: one model per TensorCore on v7x (2 TCs),
            # so each core streams only its own W. Reduction axis (V) last.
            dimension_semantics=("parallel", "parallel", "arbitrary"),
            vmem_limit_bytes=vmem_limit),
    )(x, w, tok2d)

    return out[:, :M, 0].reshape(G, R, N)


# ----------------------------- SPIN forward --------------------------------

@functools.partial(jax.jit, static_argnames=("pad_id",))
def spin_forward(policy_params, ref_params, generated_seq, real_seq,
                 prompt_len, *, pad_id=-1, lam=0.1):
    """Mirrors SPIN.forward: returns the scalar SPIN loss."""
    B, N = real_seq.shape
    pos = jnp.arange(N, dtype=jnp.int32)

    # prompt_mask_from_len (identical for generated & real: same prompt_len, N)
    prompt_mask = pos[None, :] < prompt_len[:, None]

    # pad handling (pad_id exists branch)
    gen_seq_mask = generated_seq != pad_id
    real_seq_mask = real_seq != pad_id
    gen_clean = jnp.where(gen_seq_mask, generated_seq, 0).astype(jnp.int32)
    real_clean = jnp.where(real_seq_mask, real_seq, 0).astype(jnp.int32)

    # maybe_and_mask(seq_mask, ~prompt_mask)
    gen_mask = (gen_seq_mask & (~prompt_mask)).astype(jnp.float32)
    real_mask = (real_seq_mask & (~prompt_mask)).astype(jnp.float32)

    p_emb, p_w = policy_params
    r_emb, r_w = ref_params

    # Fuse all four log-prob evaluations into ONE pallas_call:
    # rows   = [generated ; real]            (2B rows)
    # models = [policy ; ref] on the leading grid axis
    seq_all = jnp.concatenate([gen_clean, real_clean], axis=0)     # (2B, N)
    mask_all = jnp.concatenate([gen_mask, real_mask], axis=0)      # (2B, N)
    emb_stack = jnp.stack([p_emb, r_emb], axis=0)                  # (2, V, H)
    w_stack = jnp.stack([p_w, r_w], axis=0)                        # (2, H, V)

    # NOTE: operands are bf16 in-kernel (f32 accumulation). If the SPIN margin
    # (policy - ref, nearly identical models early in training) is noisy,
    # pass compute_dtype=jnp.float32 at 2x W HBM traffic.
    lp_tok = spin_token_logprobs(emb_stack, w_stack, seq_all)      # (2, 2B, N)

    # masked mean over the sequence dimension (tiny epilogue, f32)
    num = jnp.sum(lp_tok * mask_all[None], axis=-1)                # (2, 2B)
    den = jnp.maximum(jnp.sum(mask_all, axis=-1), 1e-5)[None]
    per_row = num / den

    pol_gen, pol_real = per_row[0, :B], per_row[0, B:]
    ref_gen, ref_real = per_row[1, :B], per_row[1, B:]

    # Equation 4.7
    margin = (pol_real - ref_real) - (pol_gen - ref_gen)
    losses = -jax.nn.log_sigmoid(lam * margin)
    return losses.mean()


# --------------------------------- main -------------------------------------

if __name__ == "__main__":
    B, N, H, V = 2, 64, 64, 512
    PAD_ID = -1
    LAMBDA = 0.1

    key = jax.random.PRNGKey(0)
    k_emb, k_w, k_real, k_gen, k_ref = jax.random.split(key, 5)

    # deterministic synthetic "policy model" parameters
    policy_emb = jax.random.normal(k_emb, (V, H), dtype=jnp.float32) * 0.05
    policy_w = jax.random.normal(k_w, (H, V), dtype=jnp.float32) * 0.05
    policy_params = (policy_emb, policy_w)

    # reference (EMA) model: copy of policy with a small deterministic
    # perturbation so the loss is non-trivial.
    # TODO(synk): EMA update / copy_params_from_model_to_ema machinery is
    # training-loop state management, not kernel compute; not reproduced here.
    ref_params = (policy_emb + 0.01 * jax.random.normal(k_ref, (V, H),
                                                        dtype=jnp.float32),
                  policy_w)

    # token sequences; trailing tokens of each row padded with PAD_ID
    real_seq = jax.random.randint(k_real, (B, N), 0, V, dtype=jnp.int32)
    generated_seq = jax.random.randint(k_gen, (B, N), 0, V, dtype=jnp.int32)
    real_seq = real_seq.at[:, -3:].set(PAD_ID)
    generated_seq = generated_seq.at[:, -5:].set(PAD_ID)
    prompt_len = jnp.array([7, 5], dtype=jnp.int32)

    loss = spin_forward(policy_params, ref_params, generated_seq, real_seq,
                        prompt_len, pad_id=PAD_ID, lam=LAMBDA)
    loss = jax.block_until_ready(loss)
    assert loss.shape == () and jnp.isfinite(loss)
    print("KERNEL_OK")
</pallas_src>

<mosaic_0001>
module attributes {stable_mosaic.version = 11 : i64} {
  func.func @_spin_logprob_kernel(%arg0: i32, %arg1: i32, %arg2: i32, %arg3: memref<1x256x64xbf16, #tpu.memory_space<vmem>>, %arg4: memref<1x64x512xbf16, #tpu.memory_space<vmem>>, %arg5: memref<256x1xi32, #tpu.memory_space<vmem>>, %arg6: memref<1x256x1xf32, #tpu.memory_space<vmem>>, %arg7: memref<256x1xf32, #tpu.memory_space<vmem>>, %arg8: memref<256x1xf32, #tpu.memory_space<vmem>>, %arg9: memref<256x1xf32, #tpu.memory_space<vmem>>) attributes {dimension_semantics = [#tpu.dimension_semantics<parallel>, #tpu.dimension_semantics<parallel>, #tpu.dimension_semantics<arbitrary>], iteration_bounds = array<i64: 2, 1, 1>, scalar_prefetch = 0 : i64, scratch_operands = 3 : i64, tpu.core_type = #tpu.core_type<tc>, window_params = [{transform_indices = @transform_0, window_bounds = array<i64: 1, 256, 64>}, {transform_indices = @transform_1, window_bounds = array<i64: 1, 64, 512>}, {transform_indices = @transform_2, window_bounds = array<i64: 256, 1>}, {transform_indices = @transform_3, window_bounds = array<i64: 1, 256, 1>}]} {
    %c0_i32 = arith.constant 0 : i32
    %0 = arith.cmpi eq, %arg2, %c0_i32 : i32
    %1 = arith.extui %0 : i1 to i32
    %c0_i32_0 = arith.constant 0 : i32
    %2 = arith.cmpi ne, %1, %c0_i32_0 : i32
    scf.if %2 {
      %cst_26 = arith.constant 0xFF800000 : f32
      %41 = vector.broadcast %cst_26 : f32 to vector<256x1xf32>
      %c0_27 = arith.constant 0 : index
      %c0_28 = arith.constant 0 : index
      %42 = vector.load %arg7[%c0_27, %c0_28] : memref<256x1xf32, #tpu.memory_space<vmem>>, vector<256x1xf32>
      tpu.vector_store %arg7[%c0_27, %c0_28], %41 {strides = array<i32>} : memref<256x1xf32, #tpu.memory_space<vmem>>, vector<256x1xf32>,
      %cst_29 = arith.constant 0.000000e+00 : f32
      %43 = vector.broadcast %cst_29 : f32 to vector<256x1xf32>
      %c0_30 = arith.constant 0 : index
      %c0_31 = arith.constant 0 : index
      %44 = vector.load %arg8[%c0_30, %c0_31] : memref<256x1xf32, #tpu.memory_space<vmem>>, vector<256x1xf32>
      tpu.vector_store %arg8[%c0_30, %c0_31], %43 {strides = array<i32>} : memref<256x1xf32, #tpu.memory_space<vmem>>, vector<256x1xf32>,
      %cst_32 = arith.constant 0.000000e+00 : f32
      %45 = vector.broadcast %cst_32 : f32 to vector<256x1xf32>
      %c0_33 = arith.constant 0 : index
      %c0_34 = arith.constant 0 : index
      %46 = vector.load %arg9[%c0_33, %c0_34] : memref<256x1xf32, #tpu.memory_space<vmem>>, vector<256x1xf32>
      tpu.vector_store %arg9[%c0_33, %c0_34], %45 {strides = array<i32>} : memref<256x1xf32, #tpu.memory_space<vmem>>, vector<256x1xf32>,
    } else {
    }
    %c0 = arith.constant 0 : index
    %c0_1 = arith.constant 0 : index
    %c0_2 = arith.constant 0 : index
    %3 = vector.load %arg4[%c0, %c0_1, %c0_2] : memref<1x64x512xbf16, #tpu.memory_space<vmem>>, vector<1x64x512xbf16>
    %4 = vector.shape_cast %3 : vector<1x64x512xbf16> to vector<64x512xbf16>
    %c512_i32 = arith.constant 512 : i32
    %5 = arith.muli %arg2, %c512_i32 : i32
    %c0_3 = arith.constant 0 : index
    %c0_4 = arith.constant 0 : index
    %c0_5 = arith.constant 0 : index
    %6 = vector.load %arg3[%c0_3, %c0_4, %c0_5] : memref<1x256x64xbf16, #tpu.memory_space<vmem>>, vector<1x256x64xbf16>
    %7 = vector.shape_cast %6 : vector<1x256x64xbf16> to vector<256x64xbf16>
    %cst = arith.constant dense<0.000000e+00> : vector<256x512xf32>
    %8 = tpu.matmul %7, %4, %cst {dimension_numbers = #tpu.dot_dimension_numbers<[1], [0], [0], [1], [0, 0, 1, 1], [], []>} : vector<256x64xbf16>, vector<64x512xbf16>, vector<256x512xf32> -> vector<256x512xf32>
    %9 = tpu.iota {dimensions = array<i32: 1>} : vector<256x512xi32>
    %10 = vector.broadcast %5 : i32 to vector<256x512xi32>
    %11 = arith.addi %10, %9 : vector<256x512xi32>
    %c0_6 = arith.constant 0 : index
    %c0_7 = arith.constant 0 : index
    %12 = vector.load %arg5[%c0_6, %c0_7] : memref<256x1xi32, #tpu.memory_space<vmem>>, vector<256x1xi32>
    %c0_8 = arith.constant 0 : index
    %c0_9 = arith.constant 0 : index
    %13 = vector.load %arg9[%c0_8, %c0_9] : memref<256x1xf32, #tpu.memory_space<vmem>>, vector<256x1xf32>
    %14 = vector.broadcast %12 : vector<256x1xi32> to vector<256x512xi32>
    %15 = arith.cmpi eq, %11, %14 : vector<256x512xi32>
    %cst_10 = arith.constant 0.000000e+00 : f32
    %16 = vector.broadcast %cst_10 : f32 to vector<256x512xf32>
    %17 = arith.select %15, %8, %16 : vector<256x512xi1>, vector<256x512xf32>
    %cst_11 = arith.constant dense<0.000000e+00> : vector<256xf32>
    %18 = vector.multi_reduction <add>, %17, %cst_11 [1] : vector<256x512xf32> to vector<256xf32>
    %19 = vector.shape_cast %18 : vector<256xf32> to vector<256x1xf32>
    %20 = arith.addf %13, %19 : vector<256x1xf32>
    %c0_12 = arith.constant 0 : index
    %c0_13 = arith.constant 0 : index
    %21 = vector.load %arg9[%c0_12, %c0_13] : memref<256x1xf32, #tpu.memory_space<vmem>>, vector<256x1xf32>
    tpu.vector_store %arg9[%c0_12, %c0_13], %20 {strides = array<i32>} : memref<256x1xf32, #tpu.memory_space<vmem>>, vector<256x1xf32>,
    %c0_14 = arith.constant 0 : index
    %c0_15 = arith.constant 0 : index
    %22 = vector.load %arg7[%c0_14, %c0_15] : memref<256x1xf32, #tpu.memory_space<vmem>>, vector<256x1xf32>
    %cst_16 = arith.constant dense<0xFF800000> : vector<256xf32>
    %23 = vector.multi_reduction <maximumf>, %8, %cst_16 [1] : vector<256x512xf32> to vector<256xf32>
    %24 = vector.shape_cast %23 : vector<256xf32> to vector<256x1xf32>
    %25 = arith.maximumf %22, %24 : vector<256x1xf32>
    %26 = arith.subf %22, %25 : vector<256x1xf32>
    %27 = math.exp %26 : vector<256x1xf32>
    %c0_17 = arith.constant 0 : index
    %c0_18 = arith.constant 0 : index
    %28 = vector.load %arg8[%c0_17, %c0_18] : memref<256x1xf32, #tpu.memory_space<vmem>>, vector<256x1xf32>
    %29 = arith.mulf %27, %28 : vector<256x1xf32>
    %30 = vector.broadcast %25 : vector<256x1xf32> to vector<256x512xf32>
    %31 = arith.subf %8, %30 : vector<256x512xf32>
    %32 = math.exp %31 : vector<256x512xf32>
    %cst_19 = arith.constant dense<0.000000e+00> : vector<256xf32>
    %33 = vector.multi_reduction <add>, %32, %cst_19 [1] : vector<256x512xf32> to vector<256xf32>
    %34 = vector.shape_cast %33 : vector<256xf32> to vector<256x1xf32>
    %35 = arith.addf %29, %34 : vector<256x1xf32>
    %c0_20 = arith.constant 0 : index
    %c0_21 = arith.constant 0 : index
    %36 = vector.load %arg8[%c0_20, %c0_21] : memref<256x1xf32, #tpu.memory_space<vmem>>, vector<256x1xf32>
    tpu.vector_store %arg8[%c0_20, %c0_21], %35 {strides = array<i32>} : memref<256x1xf32, #tpu.memory_space<vmem>>, vector<256x1xf32>,
    %c0_22 = arith.constant 0 : index
    %c0_23 = arith.constant 0 : index
    %37 = vector.load %arg7[%c0_22, %c0_23] : memref<256x1xf32, #tpu.memory_space<vmem>>, vector<256x1xf32>
    tpu.vector_store %arg7[%c0_22, %c0_23], %25 {strides = array<i32>} : memref<256x1xf32, #tpu.memory_space<vmem>>, vector<256x1xf32>,
    %c0_i32_24 = arith.constant 0 : i32
    %38 = arith.cmpi eq, %arg2, %c0_i32_24 : i32
    %39 = arith.extui %38 : i1 to i32
    %c0_i32_25 = arith.constant 0 : i32
    %40 = arith.cmpi ne, %39, %c0_i32_25 : i32
    scf.if %40 {
      %c0_26 = arith.constant 0 : index
      %c0_27 = arith.constant 0 : index
      %41 = vector.load %arg9[%c0_26, %c0_27] : memref<256x1xf32, #tpu.memory_space<vmem>>, vector<256x1xf32>
      %c0_28 = arith.constant 0 : index
      %c0_29 = arith.constant 0 : index
      %42 = vector.load %arg7[%c0_28, %c0_29] : memref<256x1xf32, #tpu.memory_space<vmem>>, vector<256x1xf32>
      %c0_30 = arith.constant 0 : index
      %c0_31 = arith.constant 0 : index
      %43 = vector.load %arg8[%c0_30, %c0_31] : memref<256x1xf32, #tpu.memory_space<vmem>>, vector<256x1xf32>
      %44 = math.log %43 : vector<256x1xf32>
      %45 = arith.addf %42, %44 : vector<256x1xf32>
      %46 = arith.subf %41, %45 : vector<256x1xf32>
      %c0_32 = arith.constant 0 : index
      %c0_33 = arith.constant 0 : index
      %c0_34 = arith.constant 0 : index
      %47 = vector.load %arg6[%c0_32, %c0_33, %c0_34] : memref<1x256x1xf32, #tpu.memory_space<vmem>>, vector<1x256x1xf32>
      %48 = vector.shape_cast %47 : vector<1x256x1xf32> to vector<256x1xf32>
      %49 = vector.shape_cast %46 : vector<256x1xf32> to vector<1x256x1xf32>
      tpu.vector_store %arg6[%c0_32, %c0_33, %c0_34], %49 {strides = array<i32>} : memref<1x256x1xf32, #tpu.memory_space<vmem>>, vector<1x256x1xf32>,
    } else {
    }
    return
  }
  func.func @transform_0(%arg0: i32, %arg1: i32, %arg2: i32) -> (i32, i32, i32) {
    %c0_i32 = arith.constant 0 : i32
    %c0_i32_0 = arith.constant 0 : i32
    return %arg0, %arg1, %c0_i32 : i32, i32, i32
  }
  func.func @transform_1(%arg0: i32, %arg1: i32, %arg2: i32) -> (i32, i32, i32) {
    %c0_i32 = arith.constant 0 : i32
    %c0_i32_0 = arith.constant 0 : i32
    return %arg0, %c0_i32, %arg2 : i32, i32, i32
  }
  func.func @transform_2(%arg0: i32, %arg1: i32, %arg2: i32) -> (i32, i32) {
    %c0_i32 = arith.constant 0 : i32
    %c0_i32_0 = arith.constant 0 : i32
    return %arg1, %c0_i32 : i32, i32
  }
  func.func @transform_3(%arg0: i32, %arg1: i32, %arg2: i32) -> (i32, i32, i32) {
    %c0_i32 = arith.constant 0 : i32
    %c0_i32_0 = arith.constant 0 : i32
    return %arg0, %arg1, %c0_i32 : i32, i32, i32
  }
}

</mosaic_0001>

<llo_original>
// kernel: squeeze.5
$region0: #{squeeze.5}
  %s0 = inlined_call_operand.vmem [shape: f32[2,256], index: 0, kind: input, shape index: {}]
  %s1 = inlined_call_operand.vmem [shape: f32[2,4,64], index: 1, kind: output, shape index: {}]
  $region1: #{squeeze.5} parent=0
    #allocation0 [shape = 'u8[8192]{0}', space=vmem, size = 0x2000, scoped, tag = 'scoped mem for output reshape']
    #allocation1 [shape = 'u8[8192]{0}', space=vmem, size = 0x2000, scoped, tag = 'scoped mem for input reshape']
    %s3 = ssub.s32 4, 1
    %s4 = scalar_lea.vmem %s0, 2
    %v5 = vld [vmem:[%s4] sm:%s3]
    %s6 = scalar_lea.vmem [#allocation1], 8
    %7 = vst [vmem:[%s6] sm:%s3] %v5
    %v8 = vld [vmem:[%s0] sm:%s3]
    %9 = vst [vmem:[#allocation1] sm:%s3] %v8
    %v10 = vld [vmem:[#allocation1] sm:$0x3]
    %vm11 = vcmask 523264
    %12 = vst.msk [vmem:[#allocation0] ss:$8 sm:$0x3] %vm11, %v10
    %s13 = scalar_lea.vmem [#allocation1], 8
    %v14 = vld [vmem:[%s13] sm:$0x3]
    %vm15 = vcmask 523264
    %s16 = scalar_lea.vmem [#allocation0], 2
    %17 = vst.msk [vmem:[%s16] ss:$8 sm:$0x3] %vm15, %v14
    %v18 = vld.sshfl [vmem:[#allocation1] sm:$0xff pattern:$0x99999180]
    %19 = vrot.lane.b32.xlu0 %v18, 64
    %v20 = vpop.permute.xlu0 %19
    %vm21 = vcmask 523264
    %s22 = scalar_lea.vmem [#allocation0], 1
    %23 = vst.msk [vmem:[%s22] ss:$2 sm:$0x3] %vm21, %v20
    %s24 = scalar_lea.vmem [#allocation0], 5
    %25 = vst.msk [vmem:[%s24] ss:$2 sm:$0xc] %vm21, %v20
    %s27 = ssub.s32 16, 1
    %v28 = vld [vmem:[#allocation0] sm:%s27]
    %s30 = ssub.s32 16, 1
    %31 = vst [vmem:[%s1] sm:%s30] %v28
    %s32 = scalar_lea.vmem [#allocation0], 8
    %v33 = vld [vmem:[%s32] sm:%s27]
    %s35 = ssub.s32 16, 1
    %s36 = scalar_lea.vmem %s1, 4
    %37 = vst [vmem:[%s36] sm:%s35] %v33

// kernel: spin_forward.1
$region0: #{spin_forward.1}
  #allocation0 [shape = 'u32[]', space=smem, size = 0x4, offset = 0x4, fixed_abs, tag = 'smem constant byte address 0x4 - core index']
  #allocation1 [shape = 'u32[72,128]{1,0:T(1,128)}', space=vmem, size = 0x9000, scoped, tag = 'internal scratch']
  #allocation2 [shape = 'f32[256,1]{1,0:T(8,128)}', space=vmem, size = 0x20000, scoped, tag = 'scratch operand']
  #allocation3 [shape = 'f32[256,1]{1,0:T(8,128)}', space=vmem, size = 0x20000, scoped, tag = 'scratch operand']
  #allocation4 [shape = 'f32[256,1]{1,0:T(8,128)}', space=vmem, size = 0x20000, scoped, tag = 'scratch operand']
  %s0 = inlined_call_operand.vmem [shape: bf16[2,256,64], index: 0, kind: input, shape index: {}]
  %s1 = inlined_call_operand.vmem [shape: bf16[2,64,512], index: 1, kind: input, shape index: {}]
  %s2 = inlined_call_operand.vmem [shape: s32[256,1], index: 2, kind: input, shape index: {}]
  %s3 = inlined_call_operand.vmem [shape: f32[2,256,1], index: 3, kind: output, shape index: {}]
  %s4 = sld [smem:[#allocation0]]
  $region53: #{spin_forward.1} parent=0
    _
  %s6 = ssub.s32 1, %s4
  %s7 = scalar_select 0, %s6, %s4
  loop: start=0, step=1, limit=4
  $region2: #{spin_forward.1} parent=0 // loop_pre_header
    _
  $region3: #{spin_forward.1} parent=0 // loop_header
    %s9 = sphi 0, %s13
    %p10 = scmp.ge.s32.totalorder %s9, 4
    %s16 = sphi 0, %s35
    %s17 = sphi 0, %s31
    %s18 = sphi 0, %s27
    %s19 = sphi 0, %s16
    %s20 = sphi 0, %s17
    %s21 = sphi 0, %s18
    %s22 = sphi 0, %s19
    %s23 = sphi 0, %s20
    %s24 = sphi 0, %s21
    %s40 = sphi 0, %s42
    %s43 = sphi 0, %s40
    %s44 = sphi 0, %s43
    %s60 = sphi 0, %s44
    %s68 = sphi 0, %s70
    %s71 = sphi 0, %s68
    %s72 = sphi 0, %s71
    %s88 = sphi 0, %s72
    %s94 = sphi 0, %s96
    %s97 = sphi 0, %s94
    %s98 = sphi 0, %s97
    %s114 = sphi 0, %s98
    %s122 = sphi 0, %s124
    %s125 = sphi 0, %s122
    %s126 = sphi 0, %s125
    %s142 = sphi 0, %s126
  $region4: #{spin_forward.1} parent=0 // loop_header_branch
    %12 = sbr.rel (%p10) target = $region8
  $region5: #{spin_forward.1} parent=0 // loop_body
    %s14 = ssub.s32 %s9, 1
    %s15 = ssub.s32 %s9, 2
    %s25 = sadd.s32 1, %s18
    %p26 = scmp.ge.s32.totalorder %s25, 1
    %s27 = scalar_select %p26, 0, %s25
    %s28 = sadd.s32 1, %s17
    %s29 = scalar_select %p26, %s28, %s17
    %p30 = scmp.ge.s32.totalorder %s29, 1
    %s31 = scalar_select %p30, 0, %s29
    %s32 = sadd.s32 1, %s16
    %s33 = scalar_select %p30, %s32, %s16
    %p34 = scmp.ge.s32.totalorder %s33, 2
    %s35 = scalar_select %p34, 0, %s33
    %s36 = ssub.s32 %s16, %s35
    %s37 = ssub.s32 %s17, %s31
    %s38 = sor.u32 %s36, %s37
    %p39 = scmp.eq.s32.totalorder %s38, 0
    %s41 = sadd.s32 %s40, 1
    %s42 = scalar_select %p39, %s40, %s41
    %p45 = pneg %p39
    %p46 = scmp.eq.s32.totalorder %s9, 1
    %p47 = por %p45, %p46
    %p48 = scmp.ne.s32.totalorder %s40, %s43
    %p49 = scmp.eq.s32.totalorder %s9, 0
    %p50 = por %p48, %p49
    %p51 = scmp.ne.s32.totalorder %s40, %s43
    %p52 = scmp.eq.s32.totalorder %s14, 1
    %p53 = por %p51, %p52
    %p54 = scmp.ne.s32.totalorder %s43, %s44
    %p55 = scmp.eq.s32.totalorder %s14, 0
    %p56 = por %p54, %p55
    %p57 = scmp.ne.s32.totalorder %s43, %s44
    %p58 = scmp.eq.s32.totalorder %s15, 1
    %p59 = por %p57, %p58
    %p61 = scmp.ne.s32.totalorder %s44, %s60
    %p62 = scmp.eq.s32.totalorder %s15, 0
    %p63 = por %p61, %p62
    %s64 = ssub.s32 %s16, %s35
    %s65 = ssub.s32 %s18, %s27
    %s66 = sor.u32 %s64, %s65
    %p67 = scmp.eq.s32.totalorder %s66, 0
    %s69 = sadd.s32 %s68, 1
    %s70 = scalar_select %p67, %s68, %s69
    %p73 = pneg %p67
    %p74 = scmp.eq.s32.totalorder %s9, 1
    %p75 = por %p73, %p74
    %p76 = scmp.ne.s32.totalorder %s68, %s71
    %p77 = scmp.eq.s32.totalorder %s9, 0
    %p78 = por %p76, %p77
    %p79 = scmp.ne.s32.totalorder %s68, %s71
    %p80 = scmp.eq.s32.totalorder %s14, 1
    %p81 = por %p79, %p80
    %p82 = scmp.ne.s32.totalorder %s71, %s72
    %p83 = scmp.eq.s32.totalorder %s14, 0
    %p84 = por %p82, %p83
    %p85 = scmp.ne.s32.totalorder %s71, %s72
    %p86 = scmp.eq.s32.totalorder %s15, 1
    %p87 = por %p85, %p86
    %p89 = scmp.ne.s32.totalorder %s72, %s88
    %p90 = scmp.eq.s32.totalorder %s15, 0
    %p91 = por %p89, %p90
    %s92 = ssub.s32 %s17, %s31
    %p93 = scmp.eq.s32.totalorder %s92, 0
    %s95 = sadd.s32 %s94, 1
    %s96 = scalar_select %p93, %s94, %s95
    %p99 = pneg %p93
    %p100 = scmp.eq.s32.totalorder %s9, 1
    %p101 = por %p99, %p100
    %p102 = scmp.ne.s32.totalorder %s94, %s97
    %p103 = scmp.eq.s32.totalorder %s9, 0
    %p104 = por %p102, %p103
    %p105 = scmp.ne.s32.totalorder %s94, %s97
    %p106 = scmp.eq.s32.totalorder %s14, 1
    %p107 = por %p105, %p106
    %p108 = scmp.ne.s32.totalorder %s97, %s98
    %p109 = scmp.eq.s32.totalorder %s14, 0
    %p110 = por %p108, %p109
    %p111 = scmp.ne.s32.totalorder %s97, %s98
    %p112 = scmp.eq.s32.totalorder %s15, 1
    %p113 = por %p111, %p112
    %p115 = scmp.ne.s32.totalorder %s98, %s114
    %p116 = scmp.eq.s32.totalorder %s15, 0
    %p117 = por %p115, %p116
    %s118 = ssub.s32 %s16, %s35
    %s119 = ssub.s32 %s17, %s31
    %s120 = sor.u32 %s118, %s119
    %p121 = scmp.eq.s32.totalorder %s120, 0
    %s123 = sadd.s32 %s122, 1
    %s124 = scalar_select %p121, %s122, %s123
    %p127 = pneg %p121
    %p128 = scmp.eq.s32.totalorder %s9, 1
    %p129 = por %p127, %p128
    %p130 = scmp.ne.s32.totalorder %s122, %s125
    %p131 = scmp.eq.s32.totalorder %s9, 0
    %p132 = por %p130, %p131
    %p133 = scmp.ne.s32.totalorder %s122, %s125
    %p134 = scmp.eq.s32.totalorder %s14, 1
    %p135 = por %p133, %p134
    %p136 = scmp.ne.s32.totalorder %s125, %s126
    %p137 = scmp.eq.s32.totalorder %s14, 0
    %p138 = por %p136, %p137
    %p139 = scmp.ne.s32.totalorder %s125, %s126
    %p140 = scmp.eq.s32.totalorder %s15, 1
    %p141 = por %p139, %p140
    %p143 = scmp.ne.s32.totalorder %s126, %s142
    %p144 = scmp.eq.s32.totalorder %s15, 0
    %p145 = por %p143, %p144
    %p146 = scmp.le.s32.totalorder 1, %s9
    %p147 = scmp.lt.s32.totalorder %s9, 3
    %p148 = pnand %p146, %p147
    %p149 = pneg %p148
    // Predicated region
    $region9: #{spin_forward.1} parent=5 // pred_check
      _
    $region10: #{spin_forward.1} parent=5 // pred_check_branch
      %151 = sbr.rel (%p148) target = $region12
    $region11: #{spin_forward.1} parent=5 // pred_region
      %s152 = ssub.s32 %s9, 1
      // Predicated region
      $region13: #{spin_forward.1} parent=11 // pred_check
        %p153 = pneg %p110
      $region14: #{spin_forward.1} parent=11 // pred_check_branch
        %155 = sbr.rel (%p153) target = $region16
      $region15: #{spin_forward.1} parent=11 // pred_region
        %s156 = smul.u32 32, %s20
        %p157 = scmp.lt.s32.totalorder %s156, 31
        %s158 = scalar_select %p157, %s156, 31
        %s159 = smul.addr %s158, 8
        %s160 = scalar_lea.vmem %s2, %s159
        %s161 = smul.u32 32, %s20
      $region16: #{spin_forward.1} parent=11 // pred_fallthru
        _
    $region12: #{spin_forward.1} parent=5 // pred_fallthru
      _
    %p162 = scmp.lt.s32.totalorder %s9, 2
    // Predicated region
    $region17: #{spin_forward.1} parent=5 // pred_check
      %p163 = pneg %p162
    $region18: #{spin_forward.1} parent=5 // pred_check_branch
      %165 = sbr.rel (%p163) target = $region20
    $region19: #{spin_forward.1} parent=5 // pred_region
      // Predicated region
      $region21: #{spin_forward.1} parent=19 // pred_check
        %p166 = pneg %p50
      $region22: #{spin_forward.1} parent=19 // pred_check_branch
        %168 = sbr.rel (%p166) target = $region24
      $region23: #{spin_forward.1} parent=19 // pred_region
        %s169 = smul.u32 32, %s17
        %p170 = scmp.lt.s32.totalorder %s16, 1
        %s171 = scalar_select %p170, %s16, 1
        %p172 = scmp.lt.s32.totalorder %s169, 31
        %s173 = scalar_select %p172, %s169, 31
        %s174 = smul.addr %s171, 32
        %s175 = sadd.s32 %s173, %s174
        %s176 = smul.addr %s175, 4
        %s177 = scalar_lea.vmem %s0, %s176
        %s178 = smul.u32 32, %s17
      $region24: #{spin_forward.1} parent=19 // pred_fallthru
        _
      // Predicated region
      $region25: #{spin_forward.1} parent=19 // pred_check
        %p179 = pneg %p78
      $region26: #{spin_forward.1} parent=19 // pred_check_branch
        %181 = sbr.rel (%p179) target = $region28
      $region27: #{spin_forward.1} parent=19 // pred_region
        %s182 = smul.u32 4, %s18
        %p183 = scmp.lt.s32.totalorder %s16, 1
        %s184 = scalar_select %p183, %s16, 1
        %p185 = scmp.lt.s32.totalorder %s182, 3
        %s186 = scalar_select %p185, %s182, 3
        %s187 = smul.addr %s184, 32
        %s188 = sadd.s32 %s186, %s187
        %s189 = smul.addr %s188, 4
        %s190 = scalar_lea.vmem %s1, %s189
        %s191 = smul.u32 4, %s18
      $region28: #{spin_forward.1} parent=19 // pred_fallthru
        _
    $region20: #{spin_forward.1} parent=5 // pred_fallthru
      _
    %p192 = scmp.le.s32.totalorder 1, %s9
    %p193 = scmp.lt.s32.totalorder %s9, 3
    %p194 = pnand %p192, %p193
    %p195 = pneg %p194
    // Predicated region
    $region29: #{spin_forward.1} parent=5 // pred_check
      _
    $region30: #{spin_forward.1} parent=5 // pred_check_branch
      %197 = sbr.rel (%p194) target = $region32
    $region31: #{spin_forward.1} parent=5 // pred_region
      %s198 = ssub.s32 %s9, 1
      %s199 = smul.u32 32, %s20
      %p200 = scmp.lt.s32.totalorder %s19, 1
      %s201 = scalar_select %p200, %s19, 1
      %p202 = scmp.lt.s32.totalorder %s199, 31
      %s203 = scalar_select %p202, %s199, 31
      %s204 = smul.addr %s201, 32
      %s205 = sadd.s32 %s203, %s204
      %s206 = smul.addr %s205, 4
      %s207 = scalar_lea.vmem %s0, %s206
      %p208 = pneg %p56
      %p209 = pneg %p53
      %s210 = smul.u32 4, %s21
      %p211 = scmp.lt.s32.totalorder %s19, 1
      %s212 = scalar_select %p211, %s19, 1
      %p213 = scmp.lt.s32.totalorder %s210, 3
      %s214 = scalar_select %p213, %s210, 3
      %s215 = smul.addr %s212, 32
      %s216 = sadd.s32 %s214, %s215
      %s217 = smul.addr %s216, 4
      %s218 = scalar_lea.vmem %s1, %s217
      %p219 = pneg %p84
      %p220 = pneg %p81
      %s221 = smul.u32 32, %s20
      %p222 = scmp.lt.s32.totalorder %s221, 31
      %s223 = scalar_select %p222, %s221, 31
      %s224 = smul.addr %s223, 8
      %s225 = scalar_lea.vmem %s2, %s224
      %p226 = pneg %p110
      %p227 = pneg %p107
      %p228 = pneg %p138
      %p229 = pneg %p135
      %s230 = smul.u32 32, %s20
      %p231 = scmp.lt.s32.totalorder %s19, 1
      %s232 = scalar_select %p231, %s19, 1
      %p233 = scmp.lt.s32.totalorder %s230, 31
      %s234 = scalar_select %p233, %s230, 31
      %s235 = smul.addr %s232, 32
      %s236 = sadd.s32 %s234, %s235
      %s237 = smul.addr %s236, 8
      %s238 = scalar_lea.vmem %s3, %s237
      %s239 = smul.u32 32, %s20
      %p240 = scmp.lt.s32.totalorder %s19, 1
      %s241 = scalar_select %p240, %s19, 1
      %p242 = scmp.lt.s32.totalorder %s239, 31
      %s243 = scalar_select %p242, %s239, 31
      %s244 = smul.addr %s241, 32
      %s245 = sadd.s32 %s243, %s244
      %s246 = smul.addr %s245, 4
      %s247 = scalar_lea.vmem %s0, %s246
      %s248 = smul.u32 32, %s20
      %s249 = smul.u32 4, %s21
      %p250 = scmp.lt.s32.totalorder %s19, 1
      %s251 = scalar_select %p250, %s19, 1
      %p252 = scmp.lt.s32.totalorder %s249, 3
      %s253 = scalar_select %p252, %s249, 3
      %s254 = smul.addr %s251, 32
      %s255 = sadd.s32 %s253, %s254
      %s256 = smul.addr %s255, 4
      %s257 = scalar_lea.vmem %s1, %s256
      %s258 = smul.u32 4, %s21
      %s259 = smul.u32 32, %s20
      %p260 = scmp.lt.s32.totalorder %s259, 31
      %s261 = scalar_select %p260, %s259, 31
      %s262 = smul.addr %s261, 8
      %s263 = scalar_lea.vmem %s2, %s262
      %s264 = smul.u32 32, %s20
      %s265 = smul.u32 32, %s20
      %p266 = scmp.lt.s32.totalorder %s19, 1
      %s267 = scalar_select %p266, %s19, 1
      %p268 = scmp.lt.s32.totalorder %s265, 31
      %s269 = scalar_select %p268, %s265, 31
      %s270 = smul.addr %s267, 32
      %s271 = sadd.s32 %s269, %s270
      %s272 = smul.addr %s271, 8
      %s273 = scalar_lea.vmem %s3, %s272
      %s274 = smul.u32 32, %s20
      %p276 = scmp.eq.s32.totalorder %s21, 0
      // Predicated region
      $region33: #{spin_forward.1} parent=31 // pred_check
        %p277 = pneg %p276
      $region34: #{spin_forward.1} parent=31 // pred_check_branch
        %279 = sbr.rel (%p277) target = $region36
      $region35: #{spin_forward.1} parent=31 // pred_region
        %vm280 = vcmask 7168
        %281 = vst.msk [vmem:[#allocation2] sm:$0xff] %vm280, -inf
        %282 = vst.msk [vmem:[#allocation2 + $0x8] sm:$0xff] %vm280, -inf
        %283 = vst.msk [vmem:[#allocation2 + $0x10] sm:$0xff] %vm280, -inf
        %284 = vst.msk [vmem:[#allocation2 + $0x18] sm:$0xff] %vm280, -inf
        %285 = vst.msk [vmem:[#allocation2 + $0x20] sm:$0xff] %vm280, -inf
        %286 = vst.msk [vmem:[#allocation2 + $0x28] sm:$0xff] %vm280, -inf
        %287 = vst.msk [vmem:[#allocation2 + $0x30] sm:$0xff] %vm280, -inf
        %288 = vst.msk [vmem:[#allocation2 + $0x38] sm:$0xff] %vm280, -inf
        %289 = vst.msk [vmem:[#allocation2 + $0x40] sm:$0xff] %vm280, -inf
        %290 = vst.msk [vmem:[#allocation2 + $0x48] sm:$0xff] %vm280, -inf
        %291 = vst.msk [vmem:[#allocation2 + $0x50] sm:$0xff] %vm280, -inf
        %292 = vst.msk [vmem:[#allocation2 + $0x58] sm:$0xff] %vm280, -inf
        %293 = vst.msk [vmem:[#allocation2 + $0x60] sm:$0xff] %vm280, -inf
        %294 = vst.msk [vmem:[#allocation2 + $0x68] sm:$0xff] %vm280, -inf
        %295 = vst.msk [vmem:[#allocation2 + $0x70] sm:$0xff] %vm280, -inf
        %296 = vst.msk [vmem:[#allocation2 + $0x78] sm:$0xff] %vm280, -inf
        %297 = vst.msk [vmem:[#allocation2 + $0x80] sm:$0xff] %vm280, -inf
        %298 = vst.msk [vmem:[#allocation2 + $0x88] sm:$0xff] %vm280, -inf
        %299 = vst.msk [vmem:[#allocation2 + $0x90] sm:$0xff] %vm280, -inf
        %300 = vst.msk [vmem:[#allocation2 + $0x98] sm:$0xff] %vm280, -inf
        %301 = vst.msk [vmem:[#allocation2 + $0xa0] sm:$0xff] %vm280, -inf
        %302 = vst.msk [vmem:[#allocation2 + $0xa8] sm:$0xff] %vm280, -inf
        %303 = vst.msk [vmem:[#allocation2 + $0xb0] sm:$0xff] %vm280, -inf
        %304 = vst.msk [vmem:[#allocation2 + $0xb8] sm:$0xff] %vm280, -inf
        %305 = vst.msk [vmem:[#allocation2 + $0xc0] sm:$0xff] %vm280, -inf
        %306 = vst.msk [vmem:[#allocation2 + $0xc8] sm:$0xff] %vm280, -inf
        %307 = vst.msk [vmem:[#allocation2 + $0xd0] sm:$0xff] %vm280, -inf
        %308 = vst.msk [vmem:[#allocation2 + $0xd8] sm:$0xff] %vm280, -inf
        %309 = vst.msk [vmem:[#allocation2 + $0xe0] sm:$0xff] %vm280, -inf
        %310 = vst.msk [vmem:[#allocation2 + $0xe8] sm:$0xff] %vm280, -inf
        %311 = vst.msk [vmem:[#allocation2 + $0xf0] sm:$0xff] %vm280, -inf
        %312 = vst.msk [vmem:[#allocation2 + $0xf8] sm:$0xff] %vm280, -inf
        %313 = vst.msk [vmem:[#allocation3] sm:$0xff] %vm280, 0.0
        %314 = vst.msk [vmem:[#allocation3 + $0x8] sm:$0xff] %vm280, 0.0
        %315 = vst.msk [vmem:[#allocation3 + $0x10] sm:$0xff] %vm280, 0.0
        %316 = vst.msk [vmem:[#allocation3 + $0x18] sm:$0xff] %vm280, 0.0
        %317 = vst.msk [vmem:[#allocation3 + $0x20] sm:$0xff] %vm280, 0.0
        %318 = vst.msk [vmem:[#allocation3 + $0x28] sm:$0xff] %vm280, 0.0
        %319 = vst.msk [vmem:[#allocation3 + $0x30] sm:$0xff] %vm280, 0.0
        %320 = vst.msk [vmem:[#allocation3 + $0x38] sm:$0xff] %vm280, 0.0
        %321 = vst.msk [vmem:[#allocation3 + $0x40] sm:$0xff] %vm280, 0.0
        %322 = vst.msk [vmem:[#allocation3 + $0x48] sm:$0xff] %vm280, 0.0
        %323 = vst.msk [vmem:[#allocation3 + $0x50] sm:$0xff] %vm280, 0.0
        %324 = vst.msk [vmem:[#allocation3 + $0x58] sm:$0xff] %vm280, 0.0
        %325 = vst.msk [vmem:[#allocation3 + $0x60] sm:$0xff] %vm280, 0.0
        %326 = vst.msk [vmem:[#allocation3 + $0x68] sm:$0xff] %vm280, 0.0
        %327 = vst.msk [vmem:[#allocation3 + $0x70] sm:$0xff] %vm280, 0.0
        %328 = vst.msk [vmem:[#allocation3 + $0x78] sm:$0xff] %vm280, 0.0
        %329 = vst.msk [vmem:[#allocation3 + $0x80] sm:$0xff] %vm280, 0.0
        %330 = vst.msk [vmem:[#allocation3 + $0x88] sm:$0xff] %vm280, 0.0
        %331 = vst.msk [vmem:[#allocation3 + $0x90] sm:$0xff] %vm280, 0.0
        %332 = vst.msk [vmem:[#allocation3 + $0x98] sm:$0xff] %vm280, 0.0
        %333 = vst.msk [vmem:[#allocation3 + $0xa0] sm:$0xff] %vm280, 0.0
        %334 = vst.msk [vmem:[#allocation3 + $0xa8] sm:$0xff] %vm280, 0.0
        %335 = vst.msk [vmem:[#allocation3 + $0xb0] sm:$0xff] %vm280, 0.0
        %336 = vst.msk [vmem:[#allocation3 + $0xb8] sm:$0xff] %vm280, 0.0
        %337 = vst.msk [vmem:[#allocation3 + $0xc0] sm:$0xff] %vm280, 0.0
        %338 = vst.msk [vmem:[#allocation3 + $0xc8] sm:$0xff] %vm280, 0.0
        %339 = vst.msk [vmem:[#allocation3 + $0xd0] sm:$0xff] %vm280, 0.0
        %340 = vst.msk [vmem:[#allocation3 + $0xd8] sm:$0xff] %vm280, 0.0
        %341 = vst.msk [vmem:[#allocation3 + $0xe0] sm:$0xff] %vm280, 0.0
        %342 = vst.msk [vmem:[#allocation3 + $0xe8] sm:$0xff] %vm280, 0.0
        %343 = vst.msk [vmem:[#allocation3 + $0xf0] sm:$0xff] %vm280, 0.0
        %344 = vst.msk [vmem:[#allocation3 + $0xf8] sm:$0xff] %vm280, 0.0
        %345 = vst.msk [vmem:[#allocation4] sm:$0xff] %vm280, 0.0
        %346 = vst.msk [vmem:[#allocation4 + $0x8] sm:$0xff] %vm280, 0.0
        %347 = vst.msk [vmem:[#allocation4 + $0x10] sm:$0xff] %vm280, 0.0
        %348 = vst.msk [vmem:[#allocation4 + $0x18] sm:$0xff] %vm280, 0.0
        %349 = vst.msk [vmem:[#allocation4 + $0x20] sm:$0xff] %vm280, 0.0
        %350 = vst.msk [vmem:[#allocation4 + $0x28] sm:$0xff] %vm280, 0.0
        %351 = vst.msk [vmem:[#allocation4 + $0x30] sm:$0xff] %vm280, 0.0
        %352 = vst.msk [vmem:[#allocation4 + $0x38] sm:$0xff] %vm280, 0.0
        %353 = vst.msk [vmem:[#allocation4 + $0x40] sm:$0xff] %vm280, 0.0
        %354 = vst.msk [vmem:[#allocation4 + $0x48] sm:$0xff] %vm280, 0.0
        %355 = vst.msk [vmem:[#allocation4 + $0x50] sm:$0xff] %vm280, 0.0
        %356 = vst.msk [vmem:[#allocation4 + $0x58] sm:$0xff] %vm280, 0.0
        %357 = vst.msk [vmem:[#allocation4 + $0x60] sm:$0xff] %vm280, 0.0
        %358 = vst.msk [vmem:[#allocation4 + $0x68] sm:$0xff] %vm280, 0.0
        %359 = vst.msk [vmem:[#allocation4 + $0x70] sm:$0xff] %vm280, 0.0
        %360 = vst.msk [vmem:[#allocation4 + $0x78] sm:$0xff] %vm280, 0.0
        %361 = vst.msk [vmem:[#allocation4 + $0x80] sm:$0xff] %vm280, 0.0
        %362 = vst.msk [vmem:[#allocation4 + $0x88] sm:$0xff] %vm280, 0.0
        %363 = vst.msk [vmem:[#allocation4 + $0x90] sm:$0xff] %vm280, 0.0
        %364 = vst.msk [vmem:[#allocation4 + $0x98] sm:$0xff] %vm280, 0.0
        %365 = vst.msk [vmem:[#allocation4 + $0xa0] sm:$0xff] %vm280, 0.0
        %366 = vst.msk [vmem:[#allocation4 + $0xa8] sm:$0xff] %vm280, 0.0
        %367 = vst.msk [vmem:[#allocation4 + $0xb0] sm:$0xff] %vm280, 0.0
        %368 = vst.msk [vmem:[#allocation4 + $0xb8] sm:$0xff] %vm280, 0.0
        %369 = vst.msk [vmem:[#allocation4 + $0xc0] sm:$0xff] %vm280, 0.0
        %370 = vst.msk [vmem:[#allocation4 + $0xc8] sm:$0xff] %vm280, 0.0
        %371 = vst.msk [vmem:[#allocation4 + $0xd0] sm:$0xff] %vm280, 0.0
        %372 = vst.msk [vmem:[#allocation4 + $0xd8] sm:$0xff] %vm280, 0.0
        %373 = vst.msk [vmem:[#allocation4 + $0xe0] sm:$0xff] %vm280, 0.0
        %374 = vst.msk [vmem:[#allocation4 + $0xe8] sm:$0xff] %vm280, 0.0
        %375 = vst.msk [vmem:[#allocation4 + $0xf0] sm:$0xff] %vm280, 0.0
        %376 = vst.msk [vmem:[#allocation4 + $0xf8] sm:$0xff] %vm280, 0.0
      $region36: #{spin_forward.1} parent=31 // pred_fallthru
        _
      %v377 = vld [vmem:[%s257] sm:$0xff]
      %v378 = vld [vmem:[%s257 + $0x8] sm:$0xff]
      %v379 = vld [vmem:[%s257 + $0x10] sm:$0xff]
      %v380 = vld [vmem:[%s257 + $0x18] sm:$0xff]
      %v381 = vld [vmem:[%s257 + $0x20] sm:$0xff]
      %v382 = vld [vmem:[%s257 + $0x28] sm:$0xff]
      %v383 = vld [vmem:[%s257 + $0x30] sm:$0xff]
      %v384 = vld [vmem:[%s257 + $0x38] sm:$0xff]
      %v385 = vld [vmem:[%s257 + $0x40] sm:$0xff]
      %v386 = vld [vmem:[%s257 + $0x48] sm:$0xff]
      %v387 = vld [vmem:[%s257 + $0x50] sm:$0xff]
      %v388 = vld [vmem:[%s257 + $0x58] sm:$0xff]
      %v389 = vld [vmem:[%s257 + $0x60] sm:$0xff]
      %v390 = vld [vmem:[%s257 + $0x68] sm:$0xff]
      %v391 = vld [vmem:[%s257 + $0x70] sm:$0xff]
      %v392 = vld [vmem:[%s257 + $0x78] sm:$0xff]
      %s393 = smul.u32 %s21, 512
      %v394 = vld [vmem:[%s247] sm:$0xf]
      %v395 = vld [vmem:[%s247 + $0x4] sm:$0xf]
      %v396 = vld [vmem:[%s247 + $0x8] sm:$0xf]
      %v397 = vld [vmem:[%s247 + $0xc] sm:$0xf]
      %v398 = vld [vmem:[%s247 + $0x10] sm:$0xf]
      %v399 = vld [vmem:[%s247 + $0x14] sm:$0xf]
      %v400 = vld [vmem:[%s247 + $0x18] sm:$0xf]
      %v401 = vld [vmem:[%s247 + $0x1c] sm:$0xf]
      %v402 = vld [vmem:[%s247 + $0x20] sm:$0xf]
      %v403 = vld [vmem:[%s247 + $0x24] sm:$0xf]
      %v404 = vld [vmem:[%s247 + $0x28] sm:$0xf]
      %v405 = vld [vmem:[%s247 + $0x2c] sm:$0xf]
      %v406 = vld [vmem:[%s247 + $0x30] sm:$0xf]
      %v407 = vld [vmem:[%s247 + $0x34] sm:$0xf]
      %v408 = vld [vmem:[%s247 + $0x38] sm:$0xf]
      %v409 = vld [vmem:[%s247 + $0x3c] sm:$0xf]
      %v410 = vld [vmem:[%s247 + $0x40] sm:$0xf]
      %v411 = vld [vmem:[%s247 + $0x44] sm:$0xf]
      %v412 = vld [vmem:[%s247 + $0x48] sm:$0xf]
      %v413 = vld [vmem:[%s247 + $0x4c] sm:$0xf]
      %v414 = vld [vmem:[%s247 + $0x50] sm:$0xf]
      %v415 = vld [vmem:[%s247 + $0x54] sm:$0xf]
      %v416 = vld [vmem:[%s247 + $0x58] sm:$0xf]
      %v417 = vld [vmem:[%s247 + $0x5c] sm:$0xf]
      %v418 = vld [vmem:[%s247 + $0x60] sm:$0xf]
      %v419 = vld [vmem:[%s247 + $0x64] sm:$0xf]
      %v420 = vld [vmem:[%s247 + $0x68] sm:$0xf]
      %v421 = vld [vmem:[%s247 + $0x6c] sm:$0xf]
      %v422 = vld [vmem:[%s247 + $0x70] sm:$0xf]
      %v423 = vld [vmem:[%s247 + $0x74] sm:$0xf]
      %v424 = vld [vmem:[%s247 + $0x78] sm:$0xf]
      %v425 = vld [vmem:[%s247 + $0x7c] sm:$0xf]
      %v458 = vunpack.c.l.b16 %v394
      %v459 = vunpack.c.l.b16 %v395
      %v460 = vunpack.c.l.b16 %v396
      %v461 = vunpack.c.l.b16 %v397
      %v462 = vunpack.c.l.b16 %v398
      %v463 = vunpack.c.l.b16 %v399
      %v464 = vunpack.c.l.b16 %v400
      %v465 = vunpack.c.l.b16 %v401
      %v466 = vunpack.c.l.b16 %v402
      %v467 = vunpack.c.l.b16 %v403
      %v468 = vunpack.c.l.b16 %v404
      %v469 = vunpack.c.l.b16 %v405
      %v470 = vunpack.c.l.b16 %v406
      %v471 = vunpack.c.l.b16 %v407
      %v472 = vunpack.c.l.b16 %v408
      %v473 = vunpack.c.l.b16 %v409
      %v474 = vunpack.c.l.b16 %v410
      %v475 = vunpack.c.l.b16 %v411
      %v476 = vunpack.c.l.b16 %v412
      %v477 = vunpack.c.l.b16 %v413
      %v478 = vunpack.c.l.b16 %v414
      %v479 = vunpack.c.l.b16 %v415
      %v480 = vunpack.c.l.b16 %v416
      %v481 = vunpack.c.l.b16 %v417
      %v482 = vunpack.c.l.b16 %v418
      %v483 = vunpack.c.l.b16 %v419
      %v484 = vunpack.c.l.b16 %v420
      %v485 = vunpack.c.l.b16 %v421
      %v486 = vunpack.c.l.b16 %v422
      %v487 = vunpack.c.l.b16 %v423
      %v488 = vunpack.c.l.b16 %v424
      %v489 = vunpack.c.l.b16 %v425
      %v490 = vpack.c.b16 %v459, %v458
      %v491 = vpack.c.b16 %v461, %v460
      %v492 = vpack.c.b16 %v463, %v462
      %v493 = vpack.c.b16 %v465, %v464
      %v494 = vpack.c.b16 %v467, %v466
      %v495 = vpack.c.b16 %v469, %v468
      %v496 = vpack.c.b16 %v471, %v470
      %v497 = vpack.c.b16 %v473, %v472
      %v498 = vpack.c.b16 %v475, %v474
      %v499 = vpack.c.b16 %v477, %v476
      %v500 = vpack.c.b16 %v479, %v478
      %v501 = vpack.c.b16 %v481, %v480
      %v502 = vpack.c.b16 %v483, %v482
      %v503 = vpack.c.b16 %v485, %v484
      %v504 = vpack.c.b16 %v487, %v486
      %v505 = vpack.c.b16 %v489, %v488
      %v522 = vunpack.c.l.b16 %v377
      %v523 = vunpack.c.h.b16 %v377
      %v524 = vunpack.c.l.b16 %v378
      %v525 = vunpack.c.h.b16 %v378
      %v526 = vunpack.c.l.b16 %v379
      %v527 = vunpack.c.h.b16 %v379
      %v528 = vunpack.c.l.b16 %v380
      %v529 = vunpack.c.h.b16 %v380
      %v530 = vunpack.c.l.b16 %v381
      %v531 = vunpack.c.h.b16 %v381
      %v532 = vunpack.c.l.b16 %v382
      %v533 = vunpack.c.h.b16 %v382
      %v534 = vunpack.c.l.b16 %v383
      %v535 = vunpack.c.h.b16 %v383
      %v536 = vunpack.c.l.b16 %v384
      %v537 = vunpack.c.h.b16 %v384
      %v538 = vunpack.c.l.b16 %v385
      %v539 = vunpack.c.h.b16 %v385
      %v540 = vunpack.c.l.b16 %v386
      %v541 = vunpack.c.h.b16 %v386
      %v542 = vunpack.c.l.b16 %v387
      %v543 = vunpack.c.h.b16 %v387
      %v544 = vunpack.c.l.b16 %v388
      %v545 = vunpack.c.h.b16 %v388
      %v546 = vunpack.c.l.b16 %v389
      %v547 = vunpack.c.h.b16 %v389
      %v548 = vunpack.c.l.b16 %v390
      %v549 = vunpack.c.h.b16 %v390
      %v550 = vunpack.c.l.b16 %v391
      %v551 = vunpack.c.h.b16 %v391
      %v552 = vunpack.c.l.b16 %v392
      %v553 = vunpack.c.h.b16 %v392
      %v554 = vpack.c.b16 %v526, %v522
      %v555 = vpack.c.b16 %v527, %v523
      %v556 = vpack.c.b16 %v528, %v524
      %v557 = vpack.c.b16 %v529, %v525
      %v558 = vpack.c.b16 %v534, %v530
      %v559 = vpack.c.b16 %v535, %v531
      %v560 = vpack.c.b16 %v536, %v532
      %v561 = vpack.c.b16 %v537, %v533
      %v562 = vpack.c.b16 %v542, %v538
      %v563 = vpack.c.b16 %v543, %v539
      %v564 = vpack.c.b16 %v544, %v540
      %v565 = vpack.c.b16 %v545, %v541
      %v566 = vpack.c.b16 %v550, %v546
      %v567 = vpack.c.b16 %v551, %v547
      %v568 = vpack.c.b16 %v552, %v548
      %v569 = vpack.c.b16 %v553, %v549
      %vm586 = vcmask 523264
      %v588 = vsel %vm586, %v490, 0
      %v591 = vsel %vm586, %v491, 0
      %v594 = vsel %vm586, %v492, 0
      %v597 = vsel %vm586, %v493, 0
      %v600 = vsel %vm586, %v494, 0
      %v603 = vsel %vm586, %v495, 0
      %v606 = vsel %vm586, %v496, 0
      %v609 = vsel %vm586, %v497, 0
      %v612 = vsel %vm586, %v498, 0
      %v615 = vsel %vm586, %v499, 0
      %v618 = vsel %vm586, %v500, 0
      %v621 = vsel %vm586, %v501, 0
      %v624 = vsel %vm586, %v502, 0
      %v627 = vsel %vm586, %v503, 0
      %v630 = vsel %vm586, %v504, 0
      %v633 = vsel %vm586, %v505, 0
      %635 = vmatpush.bf16.msra.mxu0 0
      %636 = vmatpush.bf16.msra.mxu0 0
      %637 = vmatpush.bf16.msra.mxu0 0
      %638 = vmatpush.bf16.msra.mxu0 0
      %639 = vmatpush.bf16.msra.mxu0 %v566
      %640 = vmatpush.bf16.msra.mxu0 %v562
      %641 = vmatpush.bf16.msra.mxu0 %v558
      %642 = vmatpush.bf16.msra.mxu0 %v554
      %643 = vmatmul.bf16.gmra.mxu0 %v588
      %v644 = vpop.f32.mrf.mxu0
      %v645 = vadd.f32 0.0, %v644
      %v646 = vpop.f32.mrf.mxu0
      %v647 = vadd.f32 0.0, %v646
      %648 = vmatmul.bf16.gmra.mxu0 %v591
      %v649 = vpop.f32.mrf.mxu0
      %v650 = vadd.f32 0.0, %v649
      %v651 = vpop.f32.mrf.mxu0
      %v652 = vadd.f32 0.0, %v651
      %653 = vmatmul.bf16.gmra.mxu0 %v594
      %v654 = vpop.f32.mrf.mxu0
      %v655 = vadd.f32 0.0, %v654
      %v656 = vpop.f32.mrf.mxu0
      %v657 = vadd.f32 0.0, %v656
      %658 = vmatmul.bf16.gmra.mxu0 %v597
      %v659 = vpop.f32.mrf.mxu0
      %v660 = vadd.f32 0.0, %v659
      %v661 = vpop.f32.mrf.mxu0
      %v662 = vadd.f32 0.0, %v661
      %663 = vmatmul.bf16.gmra.mxu0 %v600
      %v664 = vpop.f32.mrf.mxu0
      %v665 = vadd.f32 0.0, %v664
      %v666 = vpop.f32.mrf.mxu0
      %v667 = vadd.f32 0.0, %v666
      %668 = vmatmul.bf16.gmra.mxu0 %v603
      %v669 = vpop.f32.mrf.mxu0
      %v670 = vadd.f32 0.0, %v669
      %v671 = vpop.f32.mrf.mxu0
      %v672 = vadd.f32 0.0, %v671
      %673 = vmatmul.bf16.gmra.mxu0 %v606
      %v674 = vpop.f32.mrf.mxu0
      %v675 = vadd.f32 0.0, %v674
      %v676 = vpop.f32.mrf.mxu0
      %v677 = vadd.f32 0.0, %v676
      %678 = vmatmul.bf16.gmra.mxu0 %v609
      %v679 = vpop.f32.mrf.mxu0
      %v680 = vadd.f32 0.0, %v679
      %v681 = vpop.f32.mrf.mxu0
      %v682 = vadd.f32 0.0, %v681
      %683 = vmatmul.bf16.gmra.mxu0 %v612
      %v684 = vpop.f32.mrf.mxu0
      %v685 = vadd.f32 0.0, %v684
      %v686 = vpop.f32.mrf.mxu0
      %v687 = vadd.f32 0.0, %v686
      %688 = vmatmul.bf16.gmra.mxu0 %v615
      %v689 = vpop.f32.mrf.mxu0
      %v690 = vadd.f32 0.0, %v689
      %v691 = vpop.f32.mrf.mxu0
      %v692 = vadd.f32 0.0, %v691
      %693 = vmatmul.bf16.gmra.mxu0 %v618
      %v694 = vpop.f32.mrf.mxu0
      %v695 = vadd.f32 0.0, %v694
      %v696 = vpop.f32.mrf.mxu0
      %v697 = vadd.f32 0.0, %v696
      %698 = vmatmul.bf16.gmra.mxu0 %v621
      %v699 = vpop.f32.mrf.mxu0
      %v700 = vadd.f32 0.0, %v699
      %v701 = vpop.f32.mrf.mxu0
      %v702 = vadd.f32 0.0, %v701
      %703 = vmatmul.bf16.gmra.mxu0 %v624
      %v704 = vpop.f32.mrf.mxu0
      %v705 = vadd.f32 0.0, %v704
      %v706 = vpop.f32.mrf.mxu0
      %v707 = vadd.f32 0.0, %v706
      %708 = vmatmul.bf16.gmra.mxu0 %v627
      %v709 = vpop.f32.mrf.mxu0
      %v710 = vadd.f32 0.0, %v709
      %v711 = vpop.f32.mrf.mxu0
      %v712 = vadd.f32 0.0, %v711
      %713 = vmatmul.bf16.gmra.mxu0 %v630
      %v714 = vpop.f32.mrf.mxu0
      %v715 = vadd.f32 0.0, %v714
      %v716 = vpop.f32.mrf.mxu0
      %v717 = vadd.f32 0.0, %v716
      %718 = vmatmul.bf16.gmra.mxu0 %v633
      %v719 = vpop.f32.mrf.mxu0
      %v720 = vadd.f32 0.0, %v719
      %v721 = vpop.f32.mrf.mxu0
      %v722 = vadd.f32 0.0, %v721
      %723 = vdwg.mxu0
      %724 = vmatpush.bf16.msra.mxu0 0
      %725 = vmatpush.bf16.msra.mxu0 0
      %726 = vmatpush.bf16.msra.mxu0 0
      %727 = vmatpush.bf16.msra.mxu0 0
      %728 = vmatpush.bf16.msra.mxu0 %v567
      %729 = vmatpush.bf16.msra.mxu0 %v563
      %730 = vmatpush.bf16.msra.mxu0 %v559
      %731 = vmatpush.bf16.msra.mxu0 %v555
      %732 = vmatmul.bf16.gmra.mxu0 %v588
      %v733 = vpop.f32.mrf.mxu0
      %v734 = vadd.f32 0.0, %v733
      %v735 = vpop.f32.mrf.mxu0
      %v736 = vadd.f32 0.0, %v735
      %737 = vmatmul.bf16.gmra.mxu0 %v591
      %v738 = vpop.f32.mrf.mxu0
      %v739 = vadd.f32 0.0, %v738
      %v740 = vpop.f32.mrf.mxu0
      %v741 = vadd.f32 0.0, %v740
      %742 = vmatmul.bf16.gmra.mxu0 %v594
      %v743 = vpop.f32.mrf.mxu0
      %v744 = vadd.f32 0.0, %v743
      %v745 = vpop.f32.mrf.mxu0
      %v746 = vadd.f32 0.0, %v745
      %747 = vmatmul.bf16.gmra.mxu0 %v597
      %v748 = vpop.f32.mrf.mxu0
      %v749 = vadd.f32 0.0, %v748
      %v750 = vpop.f32.mrf.mxu0
      %v751 = vadd.f32 0.0, %v750
      %752 = vmatmul.bf16.gmra.mxu0 %v600
      %v753 = vpop.f32.mrf.mxu0
      %v754 = vadd.f32 0.0, %v753
      %v755 = vpop.f32.mrf.mxu0
      %v756 = vadd.f32 0.0, %v755
      %757 = vmatmul.bf16.gmra.mxu0 %v603
      %v758 = vpop.f32.mrf.mxu0
      %v759 = vadd.f32 0.0, %v758
      %v760 = vpop.f32.mrf.mxu0
      %v761 = vadd.f32 0.0, %v760
      %762 = vmatmul.bf16.gmra.mxu0 %v606
      %v763 = vpop.f32.mrf.mxu0
      %v764 = vadd.f32 0.0, %v763
      %v765 = vpop.f32.mrf.mxu0
      %v766 = vadd.f32 0.0, %v765
      %767 = vmatmul.bf16.gmra.mxu0 %v609
      %v768 = vpop.f32.mrf.mxu0
      %v769 = vadd.f32 0.0, %v768
      %v770 = vpop.f32.mrf.mxu0
      %v771 = vadd.f32 0.0, %v770
      %772 = vmatmul.bf16.gmra.mxu0 %v612
      %v773 = vpop.f32.mrf.mxu0
      %v774 = vadd.f32 0.0, %v773
      %v775 = vpop.f32.mrf.mxu0
      %v776 = vadd.f32 0.0, %v775
      %777 = vmatmul.bf16.gmra.mxu0 %v615
      %v778 = vpop.f32.mrf.mxu0
      %v779 = vadd.f32 0.0, %v778
      %v780 = vpop.f32.mrf.mxu0
      %v781 = vadd.f32 0.0, %v780
      %782 = vmatmul.bf16.gmra.mxu0 %v618
      %v783 = vpop.f32.mrf.mxu0
      %v784 = vadd.f32 0.0, %v783
      %v785 = vpop.f32.mrf.mxu0
      %v786 = vadd.f32 0.0, %v785
      %787 = vmatmul.bf16.gmra.mxu0 %v621
      %v788 = vpop.f32.mrf.mxu0
      %v789 = vadd.f32 0.0, %v788
      %v790 = vpop.f32.mrf.mxu0
      %v791 = vadd.f32 0.0, %v790
      %792 = vmatmul.bf16.gmra.mxu0 %v624
      %v793 = vpop.f32.mrf.mxu0
      %v794 = vadd.f32 0.0, %v793
      %v795 = vpop.f32.mrf.mxu0
      %v796 = vadd.f32 0.0, %v795
      %797 = vmatmul.bf16.gmra.mxu0 %v627
      %v798 = vpop.f32.mrf.mxu0
      %v799 = vadd.f32 0.0, %v798
      %v800 = vpop.f32.mrf.mxu0
      %v801 = vadd.f32 0.0, %v800
      %802 = vmatmul.bf16.gmra.mxu0 %v630
      %v803 = vpop.f32.mrf.mxu0
      %v804 = vadd.f32 0.0, %v803
      %v805 = vpop.f32.mrf.mxu0
      %v806 = vadd.f32 0.0, %v805
      %807 = vmatmul.bf16.gmra.mxu0 %v633
      %v808 = vpop.f32.mrf.mxu0
      %v809 = vadd.f32 0.0, %v808
      %v810 = vpop.f32.mrf.mxu0
      %v811 = vadd.f32 0.0, %v810
      %812 = vdwg.mxu0
      %813 = vmatpush.bf16.msra.mxu0 0
      %814 = vmatpush.bf16.msra.mxu0 0
      %815 = vmatpush.bf16.msra.mxu0 0
      %816 = vmatpush.bf16.msra.mxu0 0
      %817 = vmatpush.bf16.msra.mxu0 %v568
      %818 = vmatpush.bf16.msra.mxu0 %v564
      %819 = vmatpush.bf16.msra.mxu0 %v560
      %820 = vmatpush.bf16.msra.mxu0 %v556
      %821 = vmatmul.bf16.gmra.mxu0 %v588
      %v822 = vpop.f32.mrf.mxu0
      %v823 = vadd.f32 0.0, %v822
      %v824 = vpop.f32.mrf.mxu0
      %v825 = vadd.f32 0.0, %v824
      %826 = vmatmul.bf16.gmra.mxu0 %v591
      %v827 = vpop.f32.mrf.mxu0
      %v828 = vadd.f32 0.0, %v827
      %v829 = vpop.f32.mrf.mxu0
      %v830 = vadd.f32 0.0, %v829
      %831 = vmatmul.bf16.gmra.mxu0 %v594
      %v832 = vpop.f32.mrf.mxu0
      %v833 = vadd.f32 0.0, %v832
      %v834 = vpop.f32.mrf.mxu0
      %v835 = vadd.f32 0.0, %v834
      %836 = vmatmul.bf16.gmra.mxu0 %v597
      %v837 = vpop.f32.mrf.mxu0
      %v838 = vadd.f32 0.0, %v837
      %v839 = vpop.f32.mrf.mxu0
      %v840 = vadd.f32 0.0, %v839
      %841 = vmatmul.bf16.gmra.mxu0 %v600
      %v842 = vpop.f32.mrf.mxu0
      %v843 = vadd.f32 0.0, %v842
      %v844 = vpop.f32.mrf.mxu0
      %v845 = vadd.f32 0.0, %v844
      %846 = vmatmul.bf16.gmra.mxu0 %v603
      %v847 = vpop.f32.mrf.mxu0
      %v848 = vadd.f32 0.0, %v847
      %v849 = vpop.f32.mrf.mxu0
      %v850 = vadd.f32 0.0, %v849
      %851 = vmatmul.bf16.gmra.mxu0 %v606
      %v852 = vpop.f32.mrf.mxu0
      %v853 = vadd.f32 0.0, %v852
      %v854 = vpop.f32.mrf.mxu0
      %v855 = vadd.f32 0.0, %v854
      %856 = vmatmul.bf16.gmra.mxu0 %v609
      %v857 = vpop.f32.mrf.mxu0
      %v858 = vadd.f32 0.0, %v857
      %v859 = vpop.f32.mrf.mxu0
      %v860 = vadd.f32 0.0, %v859
      %861 = vmatmul.bf16.gmra.mxu0 %v612
      %v862 = vpop.f32.mrf.mxu0
      %v863 = vadd.f32 0.0, %v862
      %v864 = vpop.f32.mrf.mxu0
      %v865 = vadd.f32 0.0, %v864
      %866 = vmatmul.bf16.gmra.mxu0 %v615
      %v867 = vpop.f32.mrf.mxu0
      %v868 = vadd.f32 0.0, %v867
      %v869 = vpop.f32.mrf.mxu0
      %v870 = vadd.f32 0.0, %v869
      %871 = vmatmul.bf16.gmra.mxu0 %v618
      %v872 = vpop.f32.mrf.mxu0
      %v873 = vadd.f32 0.0, %v872
      %v874 = vpop.f32.mrf.mxu0
      %v875 = vadd.f32 0.0, %v874
      %876 = vmatmul.bf16.gmra.mxu0 %v621
      %v877 = vpop.f32.mrf.mxu0
      %v878 = vadd.f32 0.0, %v877
      %v879 = vpop.f32.mrf.mxu0
      %v880 = vadd.f32 0.0, %v879
      %881 = vmatmul.bf16.gmra.mxu0 %v624
      %v882 = vpop.f32.mrf.mxu0
      %v883 = vadd.f32 0.0, %v882
      %v884 = vpop.f32.mrf.mxu0
      %v885 = vadd.f32 0.0, %v884
      %886 = vmatmul.bf16.gmra.mxu0 %v627
      %v887 = vpop.f32.mrf.mxu0
      %v888 = vadd.f32 0.0, %v887
      %v889 = vpop.f32.mrf.mxu0
      %v890 = vadd.f32 0.0, %v889
      %891 = vmatmul.bf16.gmra.mxu0 %v630
      %v892 = vpop.f32.mrf.mxu0
      %v893 = vadd.f32 0.0, %v892
      %v894 = vpop.f32.mrf.mxu0
      %v895 = vadd.f32 0.0, %v894
      %896 = vmatmul.bf16.gmra.mxu0 %v633
      %v897 = vpop.f32.mrf.mxu0
      %v898 = vadd.f32 0.0, %v897
      %v899 = vpop.f32.mrf.mxu0
      %v900 = vadd.f32 0.0, %v899
      %901 = vdwg.mxu0
      %902 = vmatpush.bf16.msra.mxu0 0
      %903 = vmatpush.bf16.msra.mxu0 0
      %904 = vmatpush.bf16.msra.mxu0 0
      %905 = vmatpush.bf16.msra.mxu0 0
      %906 = vmatpush.bf16.msra.mxu0 %v569
      %907 = vmatpush.bf16.msra.mxu0 %v565
      %908 = vmatpush.bf16.msra.mxu0 %v561
      %909 = vmatpush.bf16.msra.mxu0 %v557
      %910 = vmatmul.bf16.gmra.mxu0 %v588
      %v911 = vpop.f32.mrf.mxu0
      %v912 = vadd.f32 0.0, %v911
      %v913 = vpop.f32.mrf.mxu0
      %v914 = vadd.f32 0.0, %v913
      %915 = vmatmul.bf16.gmra.mxu0 %v591
      %v916 = vpop.f32.mrf.mxu0
      %v917 = vadd.f32 0.0, %v916
      %v918 = vpop.f32.mrf.mxu0
      %v919 = vadd.f32 0.0, %v918
      %920 = vmatmul.bf16.gmra.mxu0 %v594
      %v921 = vpop.f32.mrf.mxu0
      %v922 = vadd.f32 0.0, %v921
      %v923 = vpop.f32.mrf.mxu0
      %v924 = vadd.f32 0.0, %v923
      %925 = vmatmul.bf16.gmra.mxu0 %v597
      %v926 = vpop.f32.mrf.mxu0
      %v927 = vadd.f32 0.0, %v926
      %v928 = vpop.f32.mrf.mxu0
      %v929 = vadd.f32 0.0, %v928
      %930 = vmatmul.bf16.gmra.mxu0 %v600
      %v931 = vpop.f32.mrf.mxu0
      %v932 = vadd.f32 0.0, %v931
      %v933 = vpop.f32.mrf.mxu0
      %v934 = vadd.f32 0.0, %v933
      %935 = vmatmul.bf16.gmra.mxu0 %v603
      %v936 = vpop.f32.mrf.mxu0
      %v937 = vadd.f32 0.0, %v936
      %v938 = vpop.f32.mrf.mxu0
      %v939 = vadd.f32 0.0, %v938
      %940 = vmatmul.bf16.gmra.mxu0 %v606
      %v941 = vpop.f32.mrf.mxu0
      %v942 = vadd.f32 0.0, %v941
      %v943 = vpop.f32.mrf.mxu0
      %v944 = vadd.f32 0.0, %v943
      %945 = vmatmul.bf16.gmra.mxu0 %v609
      %v946 = vpop.f32.mrf.mxu0
      %v947 = vadd.f32 0.0, %v946
      %v948 = vpop.f32.mrf.mxu0
      %v949 = vadd.f32 0.0, %v948
      %950 = vmatmul.bf16.gmra.mxu0 %v612
      %v951 = vpop.f32.mrf.mxu0
      %v952 = vadd.f32 0.0, %v951
      %v953 = vpop.f32.mrf.mxu0
      %v954 = vadd.f32 0.0, %v953
      %955 = vmatmul.bf16.gmra.mxu0 %v615
      %v956 = vpop.f32.mrf.mxu0
      %v957 = vadd.f32 0.0, %v956
      %v958 = vpop.f32.mrf.mxu0
      %v959 = vadd.f32 0.0, %v958
      %960 = vmatmul.bf16.gmra.mxu0 %v618
      %v961 = vpop.f32.mrf.mxu0
      %v962 = vadd.f32 0.0, %v961
      %v963 = vpop.f32.mrf.mxu0
      %v964 = vadd.f32 0.0, %v963
      %965 = vmatmul.bf16.gmra.mxu0 %v621
      %v966 = vpop.f32.mrf.mxu0
      %v967 = vadd.f32 0.0, %v966
      %v968 = vpop.f32.mrf.mxu0
      %v969 = vadd.f32 0.0, %v968
      %970 = vmatmul.bf16.gmra.mxu0 %v624
      %v971 = vpop.f32.mrf.mxu0
      %v972 = vadd.f32 0.0, %v971
      %v973 = vpop.f32.mrf.mxu0
      %v974 = vadd.f32 0.0, %v973
      %975 = vmatmul.bf16.gmra.mxu0 %v627
      %v976 = vpop.f32.mrf.mxu0
      %v977 = vadd.f32 0.0, %v976
      %v978 = vpop.f32.mrf.mxu0
      %v979 = vadd.f32 0.0, %v978
      %980 = vmatmul.bf16.gmra.mxu0 %v630
      %v981 = vpop.f32.mrf.mxu0
      %v982 = vadd.f32 0.0, %v981
      %v983 = vpop.f32.mrf.mxu0
      %v984 = vadd.f32 0.0, %v983
      %985 = vmatmul.bf16.gmra.mxu0 %v633
      %v986 = vpop.f32.mrf.mxu0
      %v987 = vadd.f32 0.0, %v986
      %v988 = vpop.f32.mrf.mxu0
      %v989 = vadd.f32 0.0, %v988
      %990 = vdwg.mxu0
      %v991 = vlaneseq
      %v992 = vand.u32 %v991, 127
      %v993 = vadd.s32 %v992, 128
      %v994 = vadd.s32 %v992, 256
      %v995 = vadd.s32 %v992, 384
      %v996 = vstv %s393
      %v997 = vadd.s32 %v996, %v992
      %v998 = vadd.s32 %v996, %v993
      %v999 = vadd.s32 %v996, %v994
      %v1000 = vadd.s32 %v996, %v995
      %v1001 = vld [vmem:[%s263] sm:$0xff]
      %v1002 = vld [vmem:[%s263 + $0x8] sm:$0xff]
      %v1003 = vld [vmem:[%s263 + $0x10] sm:$0xff]
      %v1004 = vld [vmem:[%s263 + $0x18] sm:$0xff]
      %v1005 = vld [vmem:[%s263 + $0x20] sm:$0xff]
      %v1006 = vld [vmem:[%s263 + $0x28] sm:$0xff]
      %v1007 = vld [vmem:[%s263 + $0x30] sm:$0xff]
      %v1008 = vld [vmem:[%s263 + $0x38] sm:$0xff]
      %v1009 = vld [vmem:[%s263 + $0x40] sm:$0xff]
      %v1010 = vld [vmem:[%s263 + $0x48] sm:$0xff]
      %v1011 = vld [vmem:[%s263 + $0x50] sm:$0xff]
      %v1012 = vld [vmem:[%s263 + $0x58] sm:$0xff]
      %v1013 = vld [vmem:[%s263 + $0x60] sm:$0xff]
      %v1014 = vld [vmem:[%s263 + $0x68] sm:$0xff]
      %v1015 = vld [vmem:[%s263 + $0x70] sm:$0xff]
      %v1016 = vld [vmem:[%s263 + $0x78] sm:$0xff]
      %v1017 = vld [vmem:[%s263 + $0x80] sm:$0xff]
      %v1018 = vld [vmem:[%s263 + $0x88] sm:$0xff]
      %v1019 = vld [vmem:[%s263 + $0x90] sm:$0xff]
      %v1020 = vld [vmem:[%s263 + $0x98] sm:$0xff]
      %v1021 = vld [vmem:[%s263 + $0xa0] sm:$0xff]
      %v1022 = vld [vmem:[%s263 + $0xa8] sm:$0xff]
      %v1023 = vld [vmem:[%s263 + $0xb0] sm:$0xff]
      %v1024 = vld [vmem:[%s263 + $0xb8] sm:$0xff]
      %v1025 = vld [vmem:[%s263 + $0xc0] sm:$0xff]
      %v1026 = vld [vmem:[%s263 + $0xc8] sm:$0xff]
      %v1027 = vld [vmem:[%s263 + $0xd0] sm:$0xff]
      %v1028 = vld [vmem:[%s263 + $0xd8] sm:$0xff]
      %v1029 = vld [vmem:[%s263 + $0xe0] sm:$0xff]
      %v1030 = vld [vmem:[%s263 + $0xe8] sm:$0xff]
      %v1031 = vld [vmem:[%s263 + $0xf0] sm:$0xff]
      %v1032 = vld [vmem:[%s263 + $0xf8] sm:$0xff]
      %v1033 = vld [vmem:[#allocation4] sm:$0xff]
      %v1034 = vld [vmem:[#allocation4 + $0x8] sm:$0xff]
      %v1035 = vld [vmem:[#allocation4 + $0x10] sm:$0xff]
      %v1036 = vld [vmem:[#allocation4 + $0x18] sm:$0xff]
      %v1037 = vld [vmem:[#allocation4 + $0x20] sm:$0xff]
      %v1038 = vld [vmem:[#allocation4 + $0x28] sm:$0xff]
      %v1039 = vld [vmem:[#allocation4 + $0x30] sm:$0xff]
      %v1040 = vld [vmem:[#allocation4 + $0x38] sm:$0xff]
      %v1041 = vld [vmem:[#allocation4 + $0x40] sm:$0xff]
      %v1042 = vld [vmem:[#allocation4 + $0x48] sm:$0xff]
      %v1043 = vld [vmem:[#allocation4 + $0x50] sm:$0xff]
      %v1044 = vld [vmem:[#allocation4 + $0x58] sm:$0xff]
      %v1045 = vld [vmem:[#allocation4 + $0x60] sm:$0xff]
      %v1046 = vld [vmem:[#allocation4 + $0x68] sm:$0xff]
      %v1047 = vld [vmem:[#allocation4 + $0x70] sm:$0xff]
      %v1048 = vld [vmem:[#allocation4 + $0x78] sm:$0xff]
      %v1049 = vld [vmem:[#allocation4 + $0x80] sm:$0xff]
      %v1050 = vld [vmem:[#allocation4 + $0x88] sm:$0xff]
      %v1051 = vld [vmem:[#allocation4 + $0x90] sm:$0xff]
      %v1052 = vld [vmem:[#allocation4 + $0x98] sm:$0xff]
      %v1053 = vld [vmem:[#allocation4 + $0xa0] sm:$0xff]
      %v1054 = vld [vmem:[#allocation4 + $0xa8] sm:$0xff]
      %v1055 = vld [vmem:[#allocation4 + $0xb0] sm:$0xff]
      %v1056 = vld [vmem:[#allocation4 + $0xb8] sm:$0xff]
      %v1057 = vld [vmem:[#allocation4 + $0xc0] sm:$0xff]
      %v1058 = vld [vmem:[#allocation4 + $0xc8] sm:$0xff]
      %v1059 = vld [vmem:[#allocation4 + $0xd0] sm:$0xff]
      %v1060 = vld [vmem:[#allocation4 + $0xd8] sm:$0xff]
      %v1061 = vld [vmem:[#allocation4 + $0xe0] sm:$0xff]
      %v1062 = vld [vmem:[#allocation4 + $0xe8] sm:$0xff]
      %v1063 = vld [vmem:[#allocation4 + $0xf0] sm:$0xff]
      %v1064 = vld [vmem:[#allocation4 + $0xf8] sm:$0xff]
      %1065 = vset.pattern.permute.xlu0 0
      %1066 = vperm.xlu0 %1065, %v1001
      %v1067 = vpop.permute.xlu0 %1066
      %1068 = vset.pattern.permute.xlu0 0
      %1069 = vperm.xlu0 %1068, %v1002
      %v1070 = vpop.permute.xlu0 %1069
      %1071 = vset.pattern.permute.xlu0 0
      %1072 = vperm.xlu0 %1071, %v1003
      %v1073 = vpop.permute.xlu0 %1072
      %1074 = vset.pattern.permute.xlu0 0
      %1075 = vperm.xlu0 %1074, %v1004
      %v1076 = vpop.permute.xlu0 %1075
      %1077 = vset.pattern.permute.xlu0 0
      %1078 = vperm.xlu0 %1077, %v1005
      %v1079 = vpop.permute.xlu0 %1078
      %1080 = vset.pattern.permute.xlu0 0
      %1081 = vperm.xlu0 %1080, %v1006
      %v1082 = vpop.permute.xlu0 %1081
      %1083 = vset.pattern.permute.xlu0 0
      %1084 = vperm.xlu0 %1083, %v1007
      %v1085 = vpop.permute.xlu0 %1084
      %1086 = vset.pattern.permute.xlu0 0
      %1087 = vperm.xlu0 %1086, %v1008
      %v1088 = vpop.permute.xlu0 %1087
      %1089 = vset.pattern.permute.xlu0 0
      %1090 = vperm.xlu0 %1089, %v1009
      %v1091 = vpop.permute.xlu0 %1090
      %1092 = vset.pattern.permute.xlu0 0
      %1093 = vperm.xlu0 %1092, %v1010
      %v1094 = vpop.permute.xlu0 %1093
      %1095 = vset.pattern.permute.xlu0 0
      %1096 = vperm.xlu0 %1095, %v1011
      %v1097 = vpop.permute.xlu0 %1096
      %1098 = vset.pattern.permute.xlu0 0
      %1099 = vperm.xlu0 %1098, %v1012
      %v1100 = vpop.permute.xlu0 %1099
      %1101 = vset.pattern.permute.xlu0 0
      %1102 = vperm.xlu0 %1101, %v1013
      %v1103 = vpop.permute.xlu0 %1102
      %1104 = vset.pattern.permute.xlu0 0
      %1105 = vperm.xlu0 %1104, %v1014
      %v1106 = vpop.permute.xlu0 %1105
      %1107 = vset.pattern.permute.xlu0 0
      %1108 = vperm.xlu0 %1107, %v1015
      %v1109 = vpop.permute.xlu0 %1108
      %1110 = vset.pattern.permute.xlu0 0
      %1111 = vperm.xlu0 %1110, %v1016
      %v1112 = vpop.permute.xlu0 %1111
      %1113 = vset.pattern.permute.xlu0 0
      %1114 = vperm.xlu0 %1113, %v1017
      %v1115 = vpop.permute.xlu0 %1114
      %1116 = vset.pattern.permute.xlu0 0
      %1117 = vperm.xlu0 %1116, %v1018
      %v1118 = vpop.permute.xlu0 %1117
      %1119 = vset.pattern.permute.xlu0 0
      %1120 = vperm.xlu0 %1119, %v1019
      %v1121 = vpop.permute.xlu0 %1120
      %1122 = vset.pattern.permute.xlu0 0
      %1123 = vperm.xlu0 %1122, %v1020
      %v1124 = vpop.permute.xlu0 %1123
      %1125 = vset.pattern.permute.xlu0 0
      %1126 = vperm.xlu0 %1125, %v1021
      %v1127 = vpop.permute.xlu0 %1126
      %1128 = vset.pattern.permute.xlu0 0
      %1129 = vperm.xlu0 %1128, %v1022
      %v1130 = vpop.permute.xlu0 %1129
      %1131 = vset.pattern.permute.xlu0 0
      %1132 = vperm.xlu0 %1131, %v1023
      %v1133 = vpop.permute.xlu0 %1132
      %1134 = vset.pattern.permute.xlu0 0
      %1135 = vperm.xlu0 %1134, %v1024
      %v1136 = vpop.permute.xlu0 %1135
      %1137 = vset.pattern.permute.xlu0 0
      %1138 = vperm.xlu0 %1137, %v1025
      %v1139 = vpop.permute.xlu0 %1138
      %1140 = vset.pattern.permute.xlu0 0
      %1141 = vperm.xlu0 %1140, %v1026
      %v1142 = vpop.permute.xlu0 %1141
      %1143 = vset.pattern.permute.xlu0 0
      %1144 = vperm.xlu0 %1143, %v1027
      %v1145 = vpop.permute.xlu0 %1144
      %1146 = vset.pattern.permute.xlu0 0
      %1147 = vperm.xlu0 %1146, %v1028
      %v1148 = vpop.permute.xlu0 %1147
      %1149 = vset.pattern.permute.xlu0 0
      %1150 = vperm.xlu0 %1149, %v1029
      %v1151 = vpop.permute.xlu0 %1150
      %1152 = vset.pattern.permute.xlu0 0
      %1153 = vperm.xlu0 %1152, %v1030
      %v1154 = vpop.permute.xlu0 %1153
      %1155 = vset.pattern.permute.xlu0 0
      %1156 = vperm.xlu0 %1155, %v1031
      %v1157 = vpop.permute.xlu0 %1156
      %1158 = vset.pattern.permute.xlu0 0
      %1159 = vperm.xlu0 %1158, %v1032
      %v1160 = vpop.permute.xlu0 %1159
      %vm1161 = vcmp.eq.s32.totalorder %v997, %v1067
      %vm1162 = vcmp.eq.s32.totalorder %v998, %v1067
      %vm1163 = vcmp.eq.s32.totalorder %v999, %v1067
      %vm1164 = vcmp.eq.s32.totalorder %v1000, %v1067
      %vm1165 = vcmp.eq.s32.totalorder %v997, %v1070
      %vm1166 = vcmp.eq.s32.totalorder %v998, %v1070
      %vm1167 = vcmp.eq.s32.totalorder %v999, %v1070
      %vm1168 = vcmp.eq.s32.totalorder %v1000, %v1070
      %vm1169 = vcmp.eq.s32.totalorder %v997, %v1073
      %vm1170 = vcmp.eq.s32.totalorder %v998, %v1073
      %vm1171 = vcmp.eq.s32.totalorder %v999, %v1073
      %vm1172 = vcmp.eq.s32.totalorder %v1000, %v1073
      %vm1173 = vcmp.eq.s32.totalorder %v997, %v1076
      %vm1174 = vcmp.eq.s32.totalorder %v998, %v1076
      %vm1175 = vcmp.eq.s32.totalorder %v999, %v1076
      %vm1176 = vcmp.eq.s32.totalorder %v1000, %v1076
      %vm1177 = vcmp.eq.s32.totalorder %v997, %v1079
      %vm1178 = vcmp.eq.s32.totalorder %v998, %v1079
      %vm1179 = vcmp.eq.s32.totalorder %v999, %v1079
      %vm1180 = vcmp.eq.s32.totalorder %v1000, %v1079
      %vm1181 = vcmp.eq.s32.totalorder %v997, %v1082
      %vm1182 = vcmp.eq.s32.totalorder %v998, %v1082
      %vm1183 = vcmp.eq.s32.totalorder %v999, %v1082
      %vm1184 = vcmp.eq.s32.totalorder %v1000, %v1082
      %vm1185 = vcmp.eq.s32.totalorder %v997, %v1085
      %vm1186 = vcmp.eq.s32.totalorder %v998, %v1085
      %vm1187 = vcmp.eq.s32.totalorder %v999, %v1085
      %vm1188 = vcmp.eq.s32.totalorder %v1000, %v1085
      %vm1189 = vcmp.eq.s32.totalorder %v997, %v1088
      %vm1190 = vcmp.eq.s32.totalorder %v998, %v1088
      %vm1191 = vcmp.eq.s32.totalorder %v999, %v1088
      %vm1192 = vcmp.eq.s32.totalorder %v1000, %v1088
      %vm1193 = vcmp.eq.s32.totalorder %v997, %v1091
      %vm1194 = vcmp.eq.s32.totalorder %v998, %v1091
      %vm1195 = vcmp.eq.s32.totalorder %v999, %v1091
      %vm1196 = vcmp.eq.s32.totalorder %v1000, %v1091
      %vm1197 = vcmp.eq.s32.totalorder %v997, %v1094
      %vm1198 = vcmp.eq.s32.totalorder %v998, %v1094
      %vm1199 = vcmp.eq.s32.totalorder %v999, %v1094
      %vm1200 = vcmp.eq.s32.totalorder %v1000, %v1094
      %vm1201 = vcmp.eq.s32.totalorder %v997, %v1097
      %vm1202 = vcmp.eq.s32.totalorder %v998, %v1097
      %vm1203 = vcmp.eq.s32.totalorder %v999, %v1097
      %vm1204 = vcmp.eq.s32.totalorder %v1000, %v1097
      %vm1205 = vcmp.eq.s32.totalorder %v997, %v1100
      %vm1206 = vcmp.eq.s32.totalorder %v998, %v1100
      %vm1207 = vcmp.eq.s32.totalorder %v999, %v1100
      %vm1208 = vcmp.eq.s32.totalorder %v1000, %v1100
      %vm1209 = vcmp.eq.s32.totalorder %v997, %v1103
      %vm1210 = vcmp.eq.s32.totalorder %v998, %v1103
      %vm1211 = vcmp.eq.s32.totalorder %v999, %v1103
      %vm1212 = vcmp.eq.s32.totalorder %v1000, %v1103
      %vm1213 = vcmp.eq.s32.totalorder %v997, %v1106
      %vm1214 = vcmp.eq.s32.totalorder %v998, %v1106
      %vm1215 = vcmp.eq.s32.totalorder %v999, %v1106
      %vm1216 = vcmp.eq.s32.totalorder %v1000, %v1106
      %vm1217 = vcmp.eq.s32.totalorder %v997, %v1109
      %vm1218 = vcmp.eq.s32.totalorder %v998, %v1109
      %vm1219 = vcmp.eq.s32.totalorder %v999, %v1109
      %vm1220 = vcmp.eq.s32.totalorder %v1000, %v1109
      %vm1221 = vcmp.eq.s32.totalorder %v997, %v1112
      %vm1222 = vcmp.eq.s32.totalorder %v998, %v1112
      %vm1223 = vcmp.eq.s32.totalorder %v999, %v1112
      %vm1224 = vcmp.eq.s32.totalorder %v1000, %v1112
      %vm1225 = vcmp.eq.s32.totalorder %v997, %v1115
      %vm1226 = vcmp.eq.s32.totalorder %v998, %v1115
      %vm1227 = vcmp.eq.s32.totalorder %v999, %v1115
      %vm1228 = vcmp.eq.s32.totalorder %v1000, %v1115
      %vm1229 = vcmp.eq.s32.totalorder %v997, %v1118
      %vm1230 = vcmp.eq.s32.totalorder %v998, %v1118
      %vm1231 = vcmp.eq.s32.totalorder %v999, %v1118
      %vm1232 = vcmp.eq.s32.totalorder %v1000, %v1118
      %vm1233 = vcmp.eq.s32.totalorder %v997, %v1121
      %vm1234 = vcmp.eq.s32.totalorder %v998, %v1121
      %vm1235 = vcmp.eq.s32.totalorder %v999, %v1121
      %vm1236 = vcmp.eq.s32.totalorder %v1000, %v1121
      %vm1237 = vcmp.eq.s32.totalorder %v997, %v1124
      %vm1238 = vcmp.eq.s32.totalorder %v998, %v1124
      %vm1239 = vcmp.eq.s32.totalorder %v999, %v1124
      %vm1240 = vcmp.eq.s32.totalorder %v1000, %v1124
      %vm1241 = vcmp.eq.s32.totalorder %v997, %v1127
      %vm1242 = vcmp.eq.s32.totalorder %v998, %v1127
      %vm1243 = vcmp.eq.s32.totalorder %v999, %v1127
      %vm1244 = vcmp.eq.s32.totalorder %v1000, %v1127
      %vm1245 = vcmp.eq.s32.totalorder %v997, %v1130
      %vm1246 = vcmp.eq.s32.totalorder %v998, %v1130
      %vm1247 = vcmp.eq.s32.totalorder %v999, %v1130
      %vm1248 = vcmp.eq.s32.totalorder %v1000, %v1130
      %vm1249 = vcmp.eq.s32.totalorder %v997, %v1133
      %vm1250 = vcmp.eq.s32.totalorder %v998, %v1133
      %vm1251 = vcmp.eq.s32.totalorder %v999, %v1133
      %vm1252 = vcmp.eq.s32.totalorder %v1000, %v1133
      %vm1253 = vcmp.eq.s32.totalorder %v997, %v1136
      %vm1254 = vcmp.eq.s32.totalorder %v998, %v1136
      %vm1255 = vcmp.eq.s32.totalorder %v999, %v1136
      %vm1256 = vcmp.eq.s32.totalorder %v1000, %v1136
      %vm1257 = vcmp.eq.s32.totalorder %v997, %v1139
      %vm1258 = vcmp.eq.s32.totalorder %v998, %v1139
      %vm1259 = vcmp.eq.s32.totalorder %v999, %v1139
      %vm1260 = vcmp.eq.s32.totalorder %v1000, %v1139
      %vm1261 = vcmp.eq.s32.totalorder %v997, %v1142
      %vm1262 = vcmp.eq.s32.totalorder %v998, %v1142
      %vm1263 = vcmp.eq.s32.totalorder %v999, %v1142
      %vm1264 = vcmp.eq.s32.totalorder %v1000, %v1142
      %vm1265 = vcmp.eq.s32.totalorder %v997, %v1145
      %vm1266 = vcmp.eq.s32.totalorder %v998, %v1145
      %vm1267 = vcmp.eq.s32.totalorder %v999, %v1145
      %vm1268 = vcmp.eq.s32.totalorder %v1000, %v1145
      %vm1269 = vcmp.eq.s32.totalorder %v997, %v1148
      %vm1270 = vcmp.eq.s32.totalorder %v998, %v1148
      %vm1271 = vcmp.eq.s32.totalorder %v999, %v1148
      %vm1272 = vcmp.eq.s32.totalorder %v1000, %v1148
      %vm1273 = vcmp.eq.s32.totalorder %v997, %v1151
      %vm1274 = vcmp.eq.s32.totalorder %v998, %v1151
      %vm1275 = vcmp.eq.s32.totalorder %v999, %v1151
      %vm1276 = vcmp.eq.s32.totalorder %v1000, %v1151
      %vm1277 = vcmp.eq.s32.totalorder %v997, %v1154
      %vm1278 = vcmp.eq.s32.totalorder %v998, %v1154
      %vm1279 = vcmp.eq.s32.totalorder %v999, %v1154
      %vm1280 = vcmp.eq.s32.totalorder %v1000, %v1154
      %vm1281 = vcmp.eq.s32.totalorder %v997, %v1157
      %vm1282 = vcmp.eq.s32.totalorder %v998, %v1157
      %vm1283 = vcmp.eq.s32.totalorder %v999, %v1157
      %vm1284 = vcmp.eq.s32.totalorder %v1000, %v1157
      %vm1285 = vcmp.eq.s32.totalorder %v997, %v1160
      %vm1286 = vcmp.eq.s32.totalorder %v998, %v1160
      %vm1287 = vcmp.eq.s32.totalorder %v999, %v1160
      %vm1288 = vcmp.eq.s32.totalorder %v1000, %v1160
      %v1289 = vsel %vm1161, %v645, 0.0
      %v1290 = vsel %vm1162, %v734, 0.0
      %v1291 = vsel %vm1163, %v823, 0.0
      %v1292 = vsel %vm1164, %v912, 0.0
      %v1293 = vsel %vm1165, %v647, 0.0
      %v1294 = vsel %vm1166, %v736, 0.0
      %v1295 = vsel %vm1167, %v825, 0.0
      %v1296 = vsel %vm1168, %v914, 0.0
      %v1297 = vsel %vm1169, %v650, 0.0
      %v1298 = vsel %vm1170, %v739, 0.0
      %v1299 = vsel %vm1171, %v828, 0.0
      %v1300 = vsel %vm1172, %v917, 0.0
      %v1301 = vsel %vm1173, %v652, 0.0
      %v1302 = vsel %vm1174, %v741, 0.0
      %v1303 = vsel %vm1175, %v830, 0.0
      %v1304 = vsel %vm1176, %v919, 0.0
      %v1305 = vsel %vm1177, %v655, 0.0
      %v1306 = vsel %vm1178, %v744, 0.0
      %v1307 = vsel %vm1179, %v833, 0.0
      %v1308 = vsel %vm1180, %v922, 0.0
      %v1309 = vsel %vm1181, %v657, 0.0
      %v1310 = vsel %vm1182, %v746, 0.0
      %v1311 = vsel %vm1183, %v835, 0.0
      %v1312 = vsel %vm1184, %v924, 0.0
      %v1313 = vsel %vm1185, %v660, 0.0
      %v1314 = vsel %vm1186, %v749, 0.0
      %v1315 = vsel %vm1187, %v838, 0.0
      %v1316 = vsel %vm1188, %v927, 0.0
      %v1317 = vsel %vm1189, %v662, 0.0
      %v1318 = vsel %vm1190, %v751, 0.0
      %v1319 = vsel %vm1191, %v840, 0.0
      %v1320 = vsel %vm1192, %v929, 0.0
      %v1321 = vsel %vm1193, %v665, 0.0
      %v1322 = vsel %vm1194, %v754, 0.0
      %v1323 = vsel %vm1195, %v843, 0.0
      %v1324 = vsel %vm1196, %v932, 0.0
      %v1325 = vsel %vm1197, %v667, 0.0
      %v1326 = vsel %vm1198, %v756, 0.0
      %v1327 = vsel %vm1199, %v845, 0.0
      %v1328 = vsel %vm1200, %v934, 0.0
      %v1329 = vsel %vm1201, %v670, 0.0
      %v1330 = vsel %vm1202, %v759, 0.0
      %v1331 = vsel %vm1203, %v848, 0.0
      %v1332 = vsel %vm1204, %v937, 0.0
      %v1333 = vsel %vm1205, %v672, 0.0
      %v1334 = vsel %vm1206, %v761, 0.0
      %v1335 = vsel %vm1207, %v850, 0.0
      %v1336 = vsel %vm1208, %v939, 0.0
      %v1337 = vsel %vm1209, %v675, 0.0
      %v1338 = vsel %vm1210, %v764, 0.0
      %v1339 = vsel %vm1211, %v853, 0.0
      %v1340 = vsel %vm1212, %v942, 0.0
      %v1341 = vsel %vm1213, %v677, 0.0
      %v1342 = vsel %vm1214, %v766, 0.0
      %v1343 = vsel %vm1215, %v855, 0.0
      %v1344 = vsel %vm1216, %v944, 0.0
      %v1345 = vsel %vm1217, %v680, 0.0
      %v1346 = vsel %vm1218, %v769, 0.0
      %v1347 = vsel %vm1219, %v858, 0.0
      %v1348 = vsel %vm1220, %v947, 0.0
      %v1349 = vsel %vm1221, %v682, 0.0
      %v1350 = vsel %vm1222, %v771, 0.0
      %v1351 = vsel %vm1223, %v860, 0.0
      %v1352 = vsel %vm1224, %v949, 0.0
      %v1353 = vsel %vm1225, %v685, 0.0
      %v1354 = vsel %vm1226, %v774, 0.0
      %v1355 = vsel %vm1227, %v863, 0.0
      %v1356 = vsel %vm1228, %v952, 0.0
      %v1357 = vsel %vm1229, %v687, 0.0
      %v1358 = vsel %vm1230, %v776, 0.0
      %v1359 = vsel %vm1231, %v865, 0.0
      %v1360 = vsel %vm1232, %v954, 0.0
      %v1361 = vsel %vm1233, %v690, 0.0
      %v1362 = vsel %vm1234, %v779, 0.0
      %v1363 = vsel %vm1235, %v868, 0.0
      %v1364 = vsel %vm1236, %v957, 0.0
      %v1365 = vsel %vm1237, %v692, 0.0
      %v1366 = vsel %vm1238, %v781, 0.0
      %v1367 = vsel %vm1239, %v870, 0.0
      %v1368 = vsel %vm1240, %v959, 0.0
      %v1369 = vsel %vm1241, %v695, 0.0
      %v1370 = vsel %vm1242, %v784, 0.0
      %v1371 = vsel %vm1243, %v873, 0.0
      %v1372 = vsel %vm1244, %v962, 0.0
      %v1373 = vsel %vm1245, %v697, 0.0
      %v1374 = vsel %vm1246, %v786, 0.0
      %v1375 = vsel %vm1247, %v875, 0.0
      %v1376 = vsel %vm1248, %v964, 0.0
      %v1377 = vsel %vm1249, %v700, 0.0
      %v1378 = vsel %vm1250, %v789, 0.0
      %v1379 = vsel %vm1251, %v878, 0.0
      %v1380 = vsel %vm1252, %v967, 0.0
      %v1381 = vsel %vm1253, %v702, 0.0
      %v1382 = vsel %vm1254, %v791, 0.0
      %v1383 = vsel %vm1255, %v880, 0.0
      %v1384 = vsel %vm1256, %v969, 0.0
      %v1385 = vsel %vm1257, %v705, 0.0
      %v1386 = vsel %vm1258, %v794, 0.0
      %v1387 = vsel %vm1259, %v883, 0.0
      %v1388 = vsel %vm1260, %v972, 0.0
      %v1389 = vsel %vm1261, %v707, 0.0
      %v1390 = vsel %vm1262, %v796, 0.0
      %v1391 = vsel %vm1263, %v885, 0.0
      %v1392 = vsel %vm1264, %v974, 0.0
      %v1393 = vsel %vm1265, %v710, 0.0
      %v1394 = vsel %vm1266, %v799, 0.0
      %v1395 = vsel %vm1267, %v888, 0.0
      %v1396 = vsel %vm1268, %v977, 0.0
      %v1397 = vsel %vm1269, %v712, 0.0
      %v1398 = vsel %vm1270, %v801, 0.0
      %v1399 = vsel %vm1271, %v890, 0.0
      %v1400 = vsel %vm1272, %v979, 0.0
      %v1401 = vsel %vm1273, %v715, 0.0
      %v1402 = vsel %vm1274, %v804, 0.0
      %v1403 = vsel %vm1275, %v893, 0.0
      %v1404 = vsel %vm1276, %v982, 0.0
      %v1405 = vsel %vm1277, %v717, 0.0
      %v1406 = vsel %vm1278, %v806, 0.0
      %v1407 = vsel %vm1279, %v895, 0.0
      %v1408 = vsel %vm1280, %v984, 0.0
      %v1409 = vsel %vm1281, %v720, 0.0
      %v1410 = vsel %vm1282, %v809, 0.0
      %v1411 = vsel %vm1283, %v898, 0.0
      %v1412 = vsel %vm1284, %v987, 0.0
      %v1413 = vsel %vm1285, %v722, 0.0
      %v1414 = vsel %vm1286, %v811, 0.0
      %v1415 = vsel %vm1287, %v900, 0.0
      %v1416 = vsel %vm1288, %v989, 0.0
      %v1417 = vadd.f32 %v1289, %v1290
      %v1418 = vadd.f32 %v1417, %v1291
      %v1419 = vadd.f32 %v1418, %v1292
      %1420 = vadd.xlane.f32.xlu0 %v1419
      %v1421 = vpop.xlane.xlu0 %1420
      %v1422 = vadd.f32 %v1293, %v1294
      %v1423 = vadd.f32 %v1422, %v1295
      %v1424 = vadd.f32 %v1423, %v1296
      %1425 = vadd.xlane.f32.xlu0 %v1424
      %v1426 = vpop.xlane.xlu0 %1425
      %v1427 = vadd.f32 %v1297, %v1298
      %v1428 = vadd.f32 %v1427, %v1299
      %v1429 = vadd.f32 %v1428, %v1300
      %1430 = vadd.xlane.f32.xlu0 %v1429
      %v1431 = vpop.xlane.xlu0 %1430
      %v1432 = vadd.f32 %v1301, %v1302
      %v1433 = vadd.f32 %v1432, %v1303
      %v1434 = vadd.f32 %v1433, %v1304
      %1435 = vadd.xlane.f32.xlu0 %v1434
      %v1436 = vpop.xlane.xlu0 %1435
      %v1437 = vadd.f32 %v1305, %v1306
      %v1438 = vadd.f32 %v1437, %v1307
      %v1439 = vadd.f32 %v1438, %v1308
      %1440 = vadd.xlane.f32.xlu0 %v1439
      %v1441 = vpop.xlane.xlu0 %1440
      %v1442 = vadd.f32 %v1309, %v1310
      %v1443 = vadd.f32 %v1442, %v1311
      %v1444 = vadd.f32 %v1443, %v1312
      %1445 = vadd.xlane.f32.xlu0 %v1444
      %v1446 = vpop.xlane.xlu0 %1445
      %v1447 = vadd.f32 %v1313, %v1314
      %v1448 = vadd.f32 %v1447, %v1315
      %v1449 = vadd.f32 %v1448, %v1316
      %1450 = vadd.xlane.f32.xlu0 %v1449
      %v1451 = vpop.xlane.xlu0 %1450
      %v1452 = vadd.f32 %v1317, %v1318
      %v1453 = vadd.f32 %v1452, %v1319
      %v1454 = vadd.f32 %v1453, %v1320
      %1455 = vadd.xlane.f32.xlu0 %v1454
      %v1456 = vpop.xlane.xlu0 %1455
      %v1457 = vadd.f32 %v1321, %v1322
      %v1458 = vadd.f32 %v1457, %v1323
      %v1459 = vadd.f32 %v1458, %v1324
      %1460 = vadd.xlane.f32.xlu0 %v1459
      %v1461 = vpop.xlane.xlu0 %1460
      %v1462 = vadd.f32 %v1325, %v1326
      %v1463 = vadd.f32 %v1462, %v1327
      %v1464 = vadd.f32 %v1463, %v1328
      %1465 = vadd.xlane.f32.xlu0 %v1464
      %v1466 = vpop.xlane.xlu0 %1465
      %v1467 = vadd.f32 %v1329, %v1330
      %v1468 = vadd.f32 %v1467, %v1331
      %v1469 = vadd.f32 %v1468, %v1332
      %1470 = vadd.xlane.f32.xlu0 %v1469
      %v1471 = vpop.xlane.xlu0 %1470
      %v1472 = vadd.f32 %v1333, %v1334
      %v1473 = vadd.f32 %v1472, %v1335
      %v1474 = vadd.f32 %v1473, %v1336
      %1475 = vadd.xlane.f32.xlu0 %v1474
      %v1476 = vpop.xlane.xlu0 %1475
      %v1477 = vadd.f32 %v1337, %v1338
      %v1478 = vadd.f32 %v1477, %v1339
      %v1479 = vadd.f32 %v1478, %v1340
      %1480 = vadd.xlane.f32.xlu0 %v1479
      %v1481 = vpop.xlane.xlu0 %1480
      %v1482 = vadd.f32 %v1341, %v1342
      %v1483 = vadd.f32 %v1482, %v1343
      %v1484 = vadd.f32 %v1483, %v1344
      %1485 = vadd.xlane.f32.xlu0 %v1484
      %v1486 = vpop.xlane.xlu0 %1485
      %v1487 = vadd.f32 %v1345, %v1346
      %v1488 = vadd.f32 %v1487, %v1347
      %v1489 = vadd.f32 %v1488, %v1348
      %1490 = vadd.xlane.f32.xlu0 %v1489
      %v1491 = vpop.xlane.xlu0 %1490
      %v1492 = vadd.f32 %v1349, %v1350
      %v1493 = vadd.f32 %v1492, %v1351
      %v1494 = vadd.f32 %v1493, %v1352
      %1495 = vadd.xlane.f32.xlu0 %v1494
      %v1496 = vpop.xlane.xlu0 %1495
      %v1497 = vadd.f32 %v1353, %v1354
      %v1498 = vadd.f32 %v1497, %v1355
      %v1499 = vadd.f32 %v1498, %v1356
      %1500 = vadd.xlane.f32.xlu0 %v1499
      %v1501 = vpop.xlane.xlu0 %1500
      %v1502 = vadd.f32 %v1357, %v1358
      %v1503 = vadd.f32 %v1502, %v1359
      %v1504 = vadd.f32 %v1503, %v1360
      %1505 = vadd.xlane.f32.xlu0 %v1504
      %v1506 = vpop.xlane.xlu0 %1505
      %v1507 = vadd.f32 %v1361, %v1362
      %v1508 = vadd.f32 %v1507, %v1363
      %v1509 = vadd.f32 %v1508, %v1364
      %1510 = vadd.xlane.f32.xlu0 %v1509
      %v1511 = vpop.xlane.xlu0 %1510
      %v1512 = vadd.f32 %v1365, %v1366
      %v1513 = vadd.f32 %v1512, %v1367
      %v1514 = vadd.f32 %v1513, %v1368
      %1515 = vadd.xlane.f32.xlu0 %v1514
      %v1516 = vpop.xlane.xlu0 %1515
      %v1517 = vadd.f32 %v1369, %v1370
      %v1518 = vadd.f32 %v1517, %v1371
      %v1519 = vadd.f32 %v1518, %v1372
      %1520 = vadd.xlane.f32.xlu0 %v1519
      %v1521 = vpop.xlane.xlu0 %1520
      %v1522 = vadd.f32 %v1373, %v1374
      %v1523 = vadd.f32 %v1522, %v1375
      %v1524 = vadd.f32 %v1523, %v1376
      %1525 = vadd.xlane.f32.xlu0 %v1524
      %v1526 = vpop.xlane.xlu0 %1525
      %v1527 = vadd.f32 %v1377, %v1378
      %v1528 = vadd.f32 %v1527, %v1379
      %v1529 = vadd.f32 %v1528, %v1380
      %1530 = vadd.xlane.f32.xlu0 %v1529
      %v1531 = vpop.xlane.xlu0 %1530
      %v1532 = vadd.f32 %v1381, %v1382
      %v1533 = vadd.f32 %v1532, %v1383
      %v1534 = vadd.f32 %v1533, %v1384
      %1535 = vadd.xlane.f32.xlu0 %v1534
      %v1536 = vpop.xlane.xlu0 %1535
      %v1537 = vadd.f32 %v1385, %v1386
      %v1538 = vadd.f32 %v1537, %v1387
      %v1539 = vadd.f32 %v1538, %v1388
      %1540 = vadd.xlane.f32.xlu0 %v1539
      %v1541 = vpop.xlane.xlu0 %1540
      %v1542 = vadd.f32 %v1389, %v1390
      %v1543 = vadd.f32 %v1542, %v1391
      %v1544 = vadd.f32 %v1543, %v1392
      %1545 = vadd.xlane.f32.xlu0 %v1544
      %v1546 = vpop.xlane.xlu0 %1545
      %v1547 = vadd.f32 %v1393, %v1394
      %v1548 = vadd.f32 %v1547, %v1395
      %v1549 = vadd.f32 %v1548, %v1396
      %1550 = vadd.xlane.f32.xlu0 %v1549
      %v1551 = vpop.xlane.xlu0 %1550
      %v1552 = vadd.f32 %v1397, %v1398
      %v1553 = vadd.f32 %v1552, %v1399
      %v1554 = vadd.f32 %v1553, %v1400
      %1555 = vadd.xlane.f32.xlu0 %v1554
      %v1556 = vpop.xlane.xlu0 %1555
      %v1557 = vadd.f32 %v1401, %v1402
      %v1558 = vadd.f32 %v1557, %v1403
      %v1559 = vadd.f32 %v1558, %v1404
      %1560 = vadd.xlane.f32.xlu0 %v1559
      %v1561 = vpop.xlane.xlu0 %1560
      %v1562 = vadd.f32 %v1405, %v1406
      %v1563 = vadd.f32 %v1562, %v1407
      %v1564 = vadd.f32 %v1563, %v1408
      %1565 = vadd.xlane.f32.xlu0 %v1564
      %v1566 = vpop.xlane.xlu0 %1565
      %v1567 = vadd.f32 %v1409, %v1410
      %v1568 = vadd.f32 %v1567, %v1411
      %v1569 = vadd.f32 %v1568, %v1412
      %1570 = vadd.xlane.f32.xlu0 %v1569
      %v1571 = vpop.xlane.xlu0 %1570
      %v1572 = vadd.f32 %v1413, %v1414
      %v1573 = vadd.f32 %v1572, %v1415
      %v1574 = vadd.f32 %v1573, %v1416
      %1575 = vadd.xlane.f32.xlu0 %v1574
      %v1576 = vpop.xlane.xlu0 %1575
      %v1577 = vadd.f32 %v1033, %v1421
      %v1578 = vadd.f32 %v1034, %v1426
      %v1579 = vadd.f32 %v1035, %v1431
      %v1580 = vadd.f32 %v1036, %v1436
      %v1581 = vadd.f32 %v1037, %v1441
      %v1582 = vadd.f32 %v1038, %v1446
      %v1583 = vadd.f32 %v1039, %v1451
      %v1584 = vadd.f32 %v1040, %v1456
      %v1585 = vadd.f32 %v1041, %v1461
      %v1586 = vadd.f32 %v1042, %v1466
      %v1587 = vadd.f32 %v1043, %v1471
      %v1588 = vadd.f32 %v1044, %v1476
      %v1589 = vadd.f32 %v1045, %v1481
      %v1590 = vadd.f32 %v1046, %v1486
      %v1591 = vadd.f32 %v1047, %v1491
      %v1592 = vadd.f32 %v1048, %v1496
      %v1593 = vadd.f32 %v1049, %v1501
      %v1594 = vadd.f32 %v1050, %v1506
      %v1595 = vadd.f32 %v1051, %v1511
      %v1596 = vadd.f32 %v1052, %v1516
      %v1597 = vadd.f32 %v1053, %v1521
      %v1598 = vadd.f32 %v1054, %v1526
      %v1599 = vadd.f32 %v1055, %v1531
      %v1600 = vadd.f32 %v1056, %v1536
      %v1601 = vadd.f32 %v1057, %v1541
      %v1602 = vadd.f32 %v1058, %v1546
      %v1603 = vadd.f32 %v1059, %v1551
      %v1604 = vadd.f32 %v1060, %v1556
      %v1605 = vadd.f32 %v1061, %v1561
      %v1606 = vadd.f32 %v1062, %v1566
      %v1607 = vadd.f32 %v1063, %v1571
      %v1608 = vadd.f32 %v1064, %v1576
      %vm1609 = vcmask 7168
      %1610 = vst.msk [vmem:[#allocation4] sm:$0xff] %vm1609, %v1577
      %1611 = vst.msk [vmem:[#allocation4 + $0x8] sm:$0xff] %vm1609, %v1578
      %1612 = vst.msk [vmem:[#allocation4 + $0x10] sm:$0xff] %vm1609, %v1579
      %1613 = vst.msk [vmem:[#allocation4 + $0x18] sm:$0xff] %vm1609, %v1580
      %1614 = vst.msk [vmem:[#allocation4 + $0x20] sm:$0xff] %vm1609, %v1581
      %1615 = vst.msk [vmem:[#allocation4 + $0x28] sm:$0xff] %vm1609, %v1582
      %1616 = vst.msk [vmem:[#allocation4 + $0x30] sm:$0xff] %vm1609, %v1583
      %1617 = vst.msk [vmem:[#allocation4 + $0x38] sm:$0xff] %vm1609, %v1584
      %1618 = vst.msk [vmem:[#allocation4 + $0x40] sm:$0xff] %vm1609, %v1585
      %1619 = vst.msk [vmem:[#allocation4 + $0x48] sm:$0xff] %vm1609, %v1586
      %1620 = vst.msk [vmem:[#allocation4 + $0x50] sm:$0xff] %vm1609, %v1587
      %1621 = vst.msk [vmem:[#allocation4 + $0x58] sm:$0xff] %vm1609, %v1588
      %1622 = vst.msk [vmem:[#allocation4 + $0x60] sm:$0xff] %vm1609, %v1589
      %1623 = vst.msk [vmem:[#allocation4 + $0x68] sm:$0xff] %vm1609, %v1590
      %1624 = vst.msk [vmem:[#allocation4 + $0x70] sm:$0xff] %vm1609, %v1591
      %1625 = vst.msk [vmem:[#allocation4 + $0x78] sm:$0xff] %vm1609, %v1592
      %1626 = vst.msk [vmem:[#allocation4 + $0x80] sm:$0xff] %vm1609, %v1593
      %1627 = vst.msk [vmem:[#allocation4 + $0x88] sm:$0xff] %vm1609, %v1594
      %1628 = vst.msk [vmem:[#allocation4 + $0x90] sm:$0xff] %vm1609, %v1595
      %1629 = vst.msk [vmem:[#allocation4 + $0x98] sm:$0xff] %vm1609, %v1596
      %1630 = vst.msk [vmem:[#allocation4 + $0xa0] sm:$0xff] %vm1609, %v1597
      %1631 = vst.msk [vmem:[#allocation4 + $0xa8] sm:$0xff] %vm1609, %v1598
      %1632 = vst.msk [vmem:[#allocation4 + $0xb0] sm:$0xff] %vm1609, %v1599
      %1633 = vst.msk [vmem:[#allocation4 + $0xb8] sm:$0xff] %vm1609, %v1600
      %1634 = vst.msk [vmem:[#allocation4 + $0xc0] sm:$0xff] %vm1609, %v1601
      %1635 = vst.msk [vmem:[#allocation4 + $0xc8] sm:$0xff] %vm1609, %v1602
      %1636 = vst.msk [vmem:[#allocation4 + $0xd0] sm:$0xff] %vm1609, %v1603
      %1637 = vst.msk [vmem:[#allocation4 + $0xd8] sm:$0xff] %vm1609, %v1604
      %1638 = vst.msk [vmem:[#allocation4 + $0xe0] sm:$0xff] %vm1609, %v1605
      %1639 = vst.msk [vmem:[#allocation4 + $0xe8] sm:$0xff] %vm1609, %v1606
      %1640 = vst.msk [vmem:[#allocation4 + $0xf0] sm:$0xff] %vm1609, %v1607
      %1641 = vst.msk [vmem:[#allocation4 + $0xf8] sm:$0xff] %vm1609, %v1608
      %v1642 = vld [vmem:[#allocation2] sm:$0xff]
      %v1643 = vld [vmem:[#allocation2 + $0x8] sm:$0xff]
      %v1644 = vld [vmem:[#allocation2 + $0x10] sm:$0xff]
      %v1645 = vld [vmem:[#allocation2 + $0x18] sm:$0xff]
      %v1646 = vld [vmem:[#allocation2 + $0x20] sm:$0xff]
      %v1647 = vld [vmem:[#allocation2 + $0x28] sm:$0xff]
      %v1648 = vld [vmem:[#allocation2 + $0x30] sm:$0xff]
      %v1649 = vld [vmem:[#allocation2 + $0x38] sm:$0xff]
      %v1650 = vld [vmem:[#allocation2 + $0x40] sm:$0xff]
      %v1651 = vld [vmem:[#allocation2 + $0x48] sm:$0xff]
      %v1652 = vld [vmem:[#allocation2 + $0x50] sm:$0xff]
      %v1653 = vld [vmem:[#allocation2 + $0x58] sm:$0xff]
      %v1654 = vld [vmem:[#allocation2 + $0x60] sm:$0xff]
      %v1655 = vld [vmem:[#allocation2 + $0x68] sm:$0xff]
      %v1656 = vld [vmem:[#allocation2 + $0x70] sm:$0xff]
      %v1657 = vld [vmem:[#allocation2 + $0x78] sm:$0xff]
      %v1658 = vld [vmem:[#allocation2 + $0x80] sm:$0xff]
      %v1659 = vld [vmem:[#allocation2 + $0x88] sm:$0xff]
      %v1660 = vld [vmem:[#allocation2 + $0x90] sm:$0xff]
      %v1661 = vld [vmem:[#allocation2 + $0x98] sm:$0xff]
      %v1662 = vld [vmem:[#allocation2 + $0xa0] sm:$0xff]
      %v1663 = vld [vmem:[#allocation2 + $0xa8] sm:$0xff]
      %v1664 = vld [vmem:[#allocation2 + $0xb0] sm:$0xff]
      %v1665 = vld [vmem:[#allocation2 + $0xb8] sm:$0xff]
      %v1666 = vld [vmem:[#allocation2 + $0xc0] sm:$0xff]
      %v1667 = vld [vmem:[#allocation2 + $0xc8] sm:$0xff]
      %v1668 = vld [vmem:[#allocation2 + $0xd0] sm:$0xff]
      %v1669 = vld [vmem:[#allocation2 + $0xd8] sm:$0xff]
      %v1670 = vld [vmem:[#allocation2 + $0xe0] sm:$0xff]
      %v1671 = vld [vmem:[#allocation2 + $0xe8] sm:$0xff]
      %v1672 = vld [vmem:[#allocation2 + $0xf0] sm:$0xff]
      %v1673 = vld [vmem:[#allocation2 + $0xf8] sm:$0xff]
      %v1674 = vmax.f32 %v645, %v734
      %v1675 = vmax.f32 %v1674, %v823
      %v1676 = vmax.f32 %v1675, %v912
      %1677 = vmax.xlane.f32.xlu0 %v1676
      %v1678 = vpop.xlane.xlu0 %1677
      %v1679 = vmax.f32 %v647, %v736
      %v1680 = vmax.f32 %v1679, %v825
      %v1681 = vmax.f32 %v1680, %v914
      %1682 = vmax.xlane.f32.xlu0 %v1681
      %v1683 = vpop.xlane.xlu0 %1682
      %v1684 = vmax.f32 %v650, %v739
      %v1685 = vmax.f32 %v1684, %v828
      %v1686 = vmax.f32 %v1685, %v917
      %1687 = vmax.xlane.f32.xlu0 %v1686
      %v1688 = vpop.xlane.xlu0 %1687
      %v1689 = vmax.f32 %v652, %v741
      %v1690 = vmax.f32 %v1689, %v830
      %v1691 = vmax.f32 %v1690, %v919
      %1692 = vmax.xlane.f32.xlu0 %v1691
      %v1693 = vpop.xlane.xlu0 %1692
      %v1694 = vmax.f32 %v655, %v744
      %v1695 = vmax.f32 %v1694, %v833
      %v1696 = vmax.f32 %v1695, %v922
      %1697 = vmax.xlane.f32.xlu0 %v1696
      %v1698 = vpop.xlane.xlu0 %1697
      %v1699 = vmax.f32 %v657, %v746
      %v1700 = vmax.f32 %v1699, %v835
      %v1701 = vmax.f32 %v1700, %v924
      %1702 = vmax.xlane.f32.xlu0 %v1701
      %v1703 = vpop.xlane.xlu0 %1702
      %v1704 = vmax.f32 %v660, %v749
      %v1705 = vmax.f32 %v1704, %v838
      %v1706 = vmax.f32 %v1705, %v927
      %1707 = vmax.xlane.f32.xlu0 %v1706
      %v1708 = vpop.xlane.xlu0 %1707
      %v1709 = vmax.f32 %v662, %v751
      %v1710 = vmax.f32 %v1709, %v840
      %v1711 = vmax.f32 %v1710, %v929
      %1712 = vmax.xlane.f32.xlu0 %v1711
      %v1713 = vpop.xlane.xlu0 %1712
      %v1714 = vmax.f32 %v665, %v754
      %v1715 = vmax.f32 %v1714, %v843
      %v1716 = vmax.f32 %v1715, %v932
      %1717 = vmax.xlane.f32.xlu0 %v1716
      %v1718 = vpop.xlane.xlu0 %1717
      %v1719 = vmax.f32 %v667, %v756
      %v1720 = vmax.f32 %v1719, %v845
      %v1721 = vmax.f32 %v1720, %v934
      %1722 = vmax.xlane.f32.xlu0 %v1721
      %v1723 = vpop.xlane.xlu0 %1722
      %v1724 = vmax.f32 %v670, %v759
      %v1725 = vmax.f32 %v1724, %v848
      %v1726 = vmax.f32 %v1725, %v937
      %1727 = vmax.xlane.f32.xlu0 %v1726
      %v1728 = vpop.xlane.xlu0 %1727
      %v1729 = vmax.f32 %v672, %v761
      %v1730 = vmax.f32 %v1729, %v850
      %v1731 = vmax.f32 %v1730, %v939
      %1732 = vmax.xlane.f32.xlu0 %v1731
      %v1733 = vpop.xlane.xlu0 %1732
      %v1734 = vmax.f32 %v675, %v764
      %v1735 = vmax.f32 %v1734, %v853
      %v1736 = vmax.f32 %v1735, %v942
      %1737 = vmax.xlane.f32.xlu0 %v1736
      %v1738 = vpop.xlane.xlu0 %1737
      %v1739 = vmax.f32 %v677, %v766
      %v1740 = vmax.f32 %v1739, %v855
      %v1741 = vmax.f32 %v1740, %v944
      %1742 = vmax.xlane.f32.xlu0 %v1741
      %v1743 = vpop.xlane.xlu0 %1742
      %v1744 = vmax.f32 %v680, %v769
      %v1745 = vmax.f32 %v1744, %v858
      %v1746 = vmax.f32 %v1745, %v947
      %1747 = vmax.xlane.f32.xlu0 %v1746
      %v1748 = vpop.xlane.xlu0 %1747
      %v1749 = vmax.f32 %v682, %v771
      %v1750 = vmax.f32 %v1749, %v860
      %v1751 = vmax.f32 %v1750, %v949
      %1752 = vmax.xlane.f32.xlu0 %v1751
      %v1753 = vpop.xlane.xlu0 %1752
      %v1754 = vmax.f32 %v685, %v774
      %v1755 = vmax.f32 %v1754, %v863
      %v1756 = vmax.f32 %v1755, %v952
      %1757 = vmax.xlane.f32.xlu0 %v1756
      %v1758 = vpop.xlane.xlu0 %1757
      %v1759 = vmax.f32 %v687, %v776
      %v1760 = vmax.f32 %v1759, %v865
      %v1761 = vmax.f32 %v1760, %v954
      %1762 = vmax.xlane.f32.xlu0 %v1761
      %v1763 = vpop.xlane.xlu0 %1762
      %v1764 = vmax.f32 %v690, %v779
      %v1765 = vmax.f32 %v1764, %v868
      %v1766 = vmax.f32 %v1765, %v957
      %1767 = vmax.xlane.f32.xlu0 %v1766
      %v1768 = vpop.xlane.xlu0 %1767
      %v1769 = vmax.f32 %v692, %v781
      %v1770 = vmax.f32 %v1769, %v870
      %v1771 = vmax.f32 %v1770, %v959
      %1772 = vmax.xlane.f32.xlu0 %v1771
      %v1773 = vpop.xlane.xlu0 %1772
      %v1774 = vmax.f32 %v695, %v784
      %v1775 = vmax.f32 %v1774, %v873
      %v1776 = vmax.f32 %v1775, %v962
      %1777 = vmax.xlane.f32.xlu0 %v1776
      %v1778 = vpop.xlane.xlu0 %1777
      %v1779 = vmax.f32 %v697, %v786
      %v1780 = vmax.f32 %v1779, %v875
      %v1781 = vmax.f32 %v1780, %v964
      %1782 = vmax.xlane.f32.xlu0 %v1781
      %v1783 = vpop.xlane.xlu0 %1782
      %v1784 = vmax.f32 %v700, %v789
      %v1785 = vmax.f32 %v1784, %v878
      %v1786 = vmax.f32 %v1785, %v967
      %1787 = vmax.xlane.f32.xlu0 %v1786
      %v1788 = vpop.xlane.xlu0 %1787
      %v1789 = vmax.f32 %v702, %v791
      %v1790 = vmax.f32 %v1789, %v880
      %v1791 = vmax.f32 %v1790, %v969
      %1792 = vmax.xlane.f32.xlu0 %v1791
      %v1793 = vpop.xlane.xlu0 %1792
      %v1794 = vmax.f32 %v705, %v794
      %v1795 = vmax.f32 %v1794, %v883
      %v1796 = vmax.f32 %v1795, %v972
      %1797 = vmax.xlane.f32.xlu0 %v1796
      %v1798 = vpop.xlane.xlu0 %1797
      %v1799 = vmax.f32 %v707, %v796
      %v1800 = vmax.f32 %v1799, %v885
      %v1801 = vmax.f32 %v1800, %v974
      %1802 = vmax.xlane.f32.xlu0 %v1801
      %v1803 = vpop.xlane.xlu0 %1802
      %v1804 = vmax.f32 %v710, %v799
      %v1805 = vmax.f32 %v1804, %v888
      %v1806 = vmax.f32 %v1805, %v977
      %1807 = vmax.xlane.f32.xlu0 %v1806
      %v1808 = vpop.xlane.xlu0 %1807
      %v1809 = vmax.f32 %v712, %v801
      %v1810 = vmax.f32 %v1809, %v890
      %v1811 = vmax.f32 %v1810, %v979
      %1812 = vmax.xlane.f32.xlu0 %v1811
      %v1813 = vpop.xlane.xlu0 %1812
      %v1814 = vmax.f32 %v715, %v804
      %v1815 = vmax.f32 %v1814, %v893
      %v1816 = vmax.f32 %v1815, %v982
      %1817 = vmax.xlane.f32.xlu0 %v1816
      %v1818 = vpop.xlane.xlu0 %1817
      %v1819 = vmax.f32 %v717, %v806
      %v1820 = vmax.f32 %v1819, %v895
      %v1821 = vmax.f32 %v1820, %v984
      %1822 = vmax.xlane.f32.xlu0 %v1821
      %v1823 = vpop.xlane.xlu0 %1822
      %v1824 = vmax.f32 %v720, %v809
      %v1825 = vmax.f32 %v1824, %v898
      %v1826 = vmax.f32 %v1825, %v987
      %1827 = vmax.xlane.f32.xlu0 %v1826
      %v1828 = vpop.xlane.xlu0 %1827
      %v1829 = vmax.f32 %v722, %v811
      %v1830 = vmax.f32 %v1829, %v900
      %v1831 = vmax.f32 %v1830, %v989
      %1832 = vmax.xlane.f32.xlu0 %v1831
      %v1833 = vpop.xlane.xlu0 %1832
      %v1834 = vmax.f32 %v1642, %v1678
      %v1835 = vmax.f32 %v1643, %v1683
      %v1836 = vmax.f32 %v1644, %v1688
      %v1837 = vmax.f32 %v1645, %v1693
      %v1838 = vmax.f32 %v1646, %v1698
      %v1839 = vmax.f32 %v1647, %v1703
      %v1840 = vmax.f32 %v1648, %v1708
      %v1841 = vmax.f32 %v1649, %v1713
      %v1842 = vmax.f32 %v1650, %v1718
      %v1843 = vmax.f32 %v1651, %v1723
      %v1844 = vmax.f32 %v1652, %v1728
      %v1845 = vmax.f32 %v1653, %v1733
      %v1846 = vmax.f32 %v1654, %v1738
      %v1847 = vmax.f32 %v1655, %v1743
      %v1848 = vmax.f32 %v1656, %v1748
      %v1849 = vmax.f32 %v1657, %v1753
      %v1850 = vmax.f32 %v1658, %v1758
      %v1851 = vmax.f32 %v1659, %v1763
      %v1852 = vmax.f32 %v1660, %v1768
      %v1853 = vmax.f32 %v1661, %v1773
      %v1854 = vmax.f32 %v1662, %v1778
      %v1855 = vmax.f32 %v1663, %v1783
      %v1856 = vmax.f32 %v1664, %v1788
      %v1857 = vmax.f32 %v1665, %v1793
      %v1858 = vmax.f32 %v1666, %v1798
      %v1859 = vmax.f32 %v1667, %v1803
      %v1860 = vmax.f32 %v1668, %v1808
      %v1861 = vmax.f32 %v1669, %v1813
      %v1862 = vmax.f32 %v1670, %v1818
      %v1863 = vmax.f32 %v1671, %v1823
      %v1864 = vmax.f32 %v1672, %v1828
      %v1865 = vmax.f32 %v1673, %v1833
      %v1866 = vsub.f32 %v1642, %v1834
      %v1867 = vsub.f32 %v1643, %v1835
      %v1868 = vsub.f32 %v1644, %v1836
      %v1869 = vsub.f32 %v1645, %v1837
      %v1870 = vsub.f32 %v1646, %v1838
      %v1871 = vsub.f32 %v1647, %v1839
      %v1872 = vsub.f32 %v1648, %v1840
      %v1873 = vsub.f32 %v1649, %v1841
      %v1874 = vsub.f32 %v1650, %v1842
      %v1875 = vsub.f32 %v1651, %v1843
      %v1876 = vsub.f32 %v1652, %v1844
      %v1877 = vsub.f32 %v1653, %v1845
      %v1878 = vsub.f32 %v1654, %v1846
      %v1879 = vsub.f32 %v1655, %v1847
      %v1880 = vsub.f32 %v1656, %v1848
      %v1881 = vsub.f32 %v1657, %v1849
      %v1882 = vsub.f32 %v1658, %v1850
      %v1883 = vsub.f32 %v1659, %v1851
      %v1884 = vsub.f32 %v1660, %v1852
      %v1885 = vsub.f32 %v1661, %v1853
      %v1886 = vsub.f32 %v1662, %v1854
      %v1887 = vsub.f32 %v1663, %v1855
      %v1888 = vsub.f32 %v1664, %v1856
      %v1889 = vsub.f32 %v1665, %v1857
      %v1890 = vsub.f32 %v1666, %v1858
      %v1891 = vsub.f32 %v1667, %v1859
      %v1892 = vsub.f32 %v1668, %v1860
      %v1893 = vsub.f32 %v1669, %v1861
      %v1894 = vsub.f32 %v1670, %v1862
      %v1895 = vsub.f32 %v1671, %v1863
      %v1896 = vsub.f32 %v1672, %v1864
      %v1897 = vsub.f32 %v1673, %v1865
      %v1898 = vmul.f32 %v1866, 1.442695
      %v1899 = vpow.pop %v1898
      %v1900 = vmul.f32 %v1867, 1.442695
      %v1901 = vpow.pop %v1900
      %v1902 = vmul.f32 %v1868, 1.442695
      %v1903 = vpow.pop %v1902
      %v1904 = vmul.f32 %v1869, 1.442695
      %v1905 = vpow.pop %v1904
      %v1906 = vmul.f32 %v1870, 1.442695
      %v1907 = vpow.pop %v1906
      %v1908 = vmul.f32 %v1871, 1.442695
      %v1909 = vpow.pop %v1908
      %v1910 = vmul.f32 %v1872, 1.442695
      %v1911 = vpow.pop %v1910
      %v1912 = vmul.f32 %v1873, 1.442695
      %v1913 = vpow.pop %v1912
      %v1914 = vmul.f32 %v1874, 1.442695
      %v1915 = vpow.pop %v1914
      %v1916 = vmul.f32 %v1875, 1.442695
      %v1917 = vpow.pop %v1916
      %v1918 = vmul.f32 %v1876, 1.442695
      %v1919 = vpow.pop %v1918
      %v1920 = vmul.f32 %v1877, 1.442695
      %v1921 = vpow.pop %v1920
      %v1922 = vmul.f32 %v1878, 1.442695
      %v1923 = vpow.pop %v1922
      %v1924 = vmul.f32 %v1879, 1.442695
      %v1925 = vpow.pop %v1924
      %v1926 = vmul.f32 %v1880, 1.442695
      %v1927 = vpow.pop %v1926
      %v1928 = vmul.f32 %v1881, 1.442695
      %v1929 = vpow.pop %v1928
      %v1930 = vmul.f32 %v1882, 1.442695
      %v1931 = vpow.pop %v1930
      %v1932 = vmul.f32 %v1883, 1.442695
      %v1933 = vpow.pop %v1932
      %v1934 = vmul.f32 %v1884, 1.442695
      %v1935 = vpow.pop %v1934
      %v1936 = vmul.f32 %v1885, 1.442695
      %v1937 = vpow.pop %v1936
      %v1938 = vmul.f32 %v1886, 1.442695
      %v1939 = vpow.pop %v1938
      %v1940 = vmul.f32 %v1887, 1.442695
      %v1941 = vpow.pop %v1940
      %v1942 = vmul.f32 %v1888, 1.442695
      %v1943 = vpow.pop %v1942
      %v1944 = vmul.f32 %v1889, 1.442695
      %v1945 = vpow.pop %v1944
      %v1946 = vmul.f32 %v1890, 1.442695
      %v1947 = vpow.pop %v1946
      %v1948 = vmul.f32 %v1891, 1.442695
      %v1949 = vpow.pop %v1948
      %v1950 = vmul.f32 %v1892, 1.442695
      %v1951 = vpow.pop %v1950
      %v1952 = vmul.f32 %v1893, 1.442695
      %v1953 = vpow.pop %v1952
      %v1954 = vmul.f32 %v1894, 1.442695
      %v1955 = vpow.pop %v1954
      %v1956 = vmul.f32 %v1895, 1.442695
      %v1957 = vpow.pop %v1956
      %v1958 = vmul.f32 %v1896, 1.442695
      %v1959 = vpow.pop %v1958
      %v1960 = vmul.f32 %v1897, 1.442695
      %v1961 = vpow.pop %v1960
      %v1962 = vld [vmem:[#allocation3] sm:$0xff]
      %v1963 = vld [vmem:[#allocation3 + $0x8] sm:$0xff]
      %v1964 = vld [vmem:[#allocation3 + $0x10] sm:$0xff]
      %v1965 = vld [vmem:[#allocation3 + $0x18] sm:$0xff]
      %v1966 = vld [vmem:[#allocation3 + $0x20] sm:$0xff]
      %v1967 = vld [vmem:[#allocation3 + $0x28] sm:$0xff]
      %v1968 = vld [vmem:[#allocation3 + $0x30] sm:$0xff]
      %v1969 = vld [vmem:[#allocation3 + $0x38] sm:$0xff]
      %v1970 = vld [vmem:[#allocation3 + $0x40] sm:$0xff]
      %v1971 = vld [vmem:[#allocation3 + $0x48] sm:$0xff]
      %v1972 = vld [vmem:[#allocation3 + $0x50] sm:$0xff]
      %v1973 = vld [vmem:[#allocation3 + $0x58] sm:$0xff]
      %v1974 = vld [vmem:[#allocation3 + $0x60] sm:$0xff]
      %v1975 = vld [vmem:[#allocation3 + $0x68] sm:$0xff]
      %v1976 = vld [vmem:[#allocation3 + $0x70] sm:$0xff]
      %v1977 = vld [vmem:[#allocation3 + $0x78] sm:$0xff]
      %v1978 = vld [vmem:[#allocation3 + $0x80] sm:$0xff]
      %v1979 = vld [vmem:[#allocation3 + $0x88] sm:$0xff]
      %v1980 = vld [vmem:[#allocation3 + $0x90] sm:$0xff]
      %v1981 = vld [vmem:[#allocation3 + $0x98] sm:$0xff]
      %v1982 = vld [vmem:[#allocation3 + $0xa0] sm:$0xff]
      %v1983 = vld [vmem:[#allocation3 + $0xa8] sm:$0xff]
      %v1984 = vld [vmem:[#allocation3 + $0xb0] sm:$0xff]
      %v1985 = vld [vmem:[#allocation3 + $0xb8] sm:$0xff]
      %v1986 = vld [vmem:[#allocation3 + $0xc0] sm:$0xff]
      %v1987 = vld [vmem:[#allocation3 + $0xc8] sm:$0xff]
      %v1988 = vld [vmem:[#allocation3 + $0xd0] sm:$0xff]
      %v1989 = vld [vmem:[#allocation3 + $0xd8] sm:$0xff]
      %v1990 = vld [vmem:[#allocation3 + $0xe0] sm:$0xff]
      %v1991 = vld [vmem:[#allocation3 + $0xe8] sm:$0xff]
      %v1992 = vld [vmem:[#allocation3 + $0xf0] sm:$0xff]
      %v1993 = vld [vmem:[#allocation3 + $0xf8] sm:$0xff]
      %v1994 = vmul.f32 %v1899, %v1962
      %v1995 = vmul.f32 %v1901, %v1963
      %v1996 = vmul.f32 %v1903, %v1964
      %v1997 = vmul.f32 %v1905, %v1965
      %v1998 = vmul.f32 %v1907, %v1966
      %v1999 = vmul.f32 %v1909, %v1967
      %v2000 = vmul.f32 %v1911, %v1968
      %v2001 = vmul.f32 %v1913, %v1969
      %v2002 = vmul.f32 %v1915, %v1970
      %v2003 = vmul.f32 %v1917, %v1971
      %v2004 = vmul.f32 %v1919, %v1972
      %v2005 = vmul.f32 %v1921, %v1973
      %v2006 = vmul.f32 %v1923, %v1974
      %v2007 = vmul.f32 %v1925, %v1975
      %v2008 = vmul.f32 %v1927, %v1976
      %v2009 = vmul.f32 %v1929, %v1977
      %v2010 = vmul.f32 %v1931, %v1978
      %v2011 = vmul.f32 %v1933, %v1979
      %v2012 = vmul.f32 %v1935, %v1980
      %v2013 = vmul.f32 %v1937, %v1981
      %v2014 = vmul.f32 %v1939, %v1982
      %v2015 = vmul.f32 %v1941, %v1983
      %v2016 = vmul.f32 %v1943, %v1984
      %v2017 = vmul.f32 %v1945, %v1985
      %v2018 = vmul.f32 %v1947, %v1986
      %v2019 = vmul.f32 %v1949, %v1987
      %v2020 = vmul.f32 %v1951, %v1988
      %v2021 = vmul.f32 %v1953, %v1989
      %v2022 = vmul.f32 %v1955, %v1990
      %v2023 = vmul.f32 %v1957, %v1991
      %v2024 = vmul.f32 %v1959, %v1992
      %v2025 = vmul.f32 %v1961, %v1993
      %2027 = vset.pattern.permute.xlu0 0
      %2028 = vperm.xlu0 %2027, %v1834
      %v2029 = vpop.permute.xlu0 %2028
      %2032 = vset.pattern.permute.xlu0 0
      %2033 = vperm.xlu0 %2032, %v1835
      %v2034 = vpop.permute.xlu0 %2033
      %2037 = vset.pattern.permute.xlu0 0
      %2038 = vperm.xlu0 %2037, %v1836
      %v2039 = vpop.permute.xlu0 %2038
      %2042 = vset.pattern.permute.xlu0 0
      %2043 = vperm.xlu0 %2042, %v1837
      %v2044 = vpop.permute.xlu0 %2043
      %2047 = vset.pattern.permute.xlu0 0
      %2048 = vperm.xlu0 %2047, %v1838
      %v2049 = vpop.permute.xlu0 %2048
      %2052 = vset.pattern.permute.xlu0 0
      %2053 = vperm.xlu0 %2052, %v1839
      %v2054 = vpop.permute.xlu0 %2053
      %2057 = vset.pattern.permute.xlu0 0
      %2058 = vperm.xlu0 %2057, %v1840
      %v2059 = vpop.permute.xlu0 %2058
      %2062 = vset.pattern.permute.xlu0 0
      %2063 = vperm.xlu0 %2062, %v1841
      %v2064 = vpop.permute.xlu0 %2063
      %2067 = vset.pattern.permute.xlu0 0
      %2068 = vperm.xlu0 %2067, %v1842
      %v2069 = vpop.permute.xlu0 %2068
      %2072 = vset.pattern.permute.xlu0 0
      %2073 = vperm.xlu0 %2072, %v1843
      %v2074 = vpop.permute.xlu0 %2073
      %2077 = vset.pattern.permute.xlu0 0
      %2078 = vperm.xlu0 %2077, %v1844
      %v2079 = vpop.permute.xlu0 %2078
      %2082 = vset.pattern.permute.xlu0 0
      %2083 = vperm.xlu0 %2082, %v1845
      %v2084 = vpop.permute.xlu0 %2083
      %2087 = vset.pattern.permute.xlu0 0
      %2088 = vperm.xlu0 %2087, %v1846
      %v2089 = vpop.permute.xlu0 %2088
      %2092 = vset.pattern.permute.xlu0 0
      %2093 = vperm.xlu0 %2092, %v1847
      %v2094 = vpop.permute.xlu0 %2093
      %2097 = vset.pattern.permute.xlu0 0
      %2098 = vperm.xlu0 %2097, %v1848
      %v2099 = vpop.permute.xlu0 %2098
      %2102 = vset.pattern.permute.xlu0 0
      %2103 = vperm.xlu0 %2102, %v1849
      %v2104 = vpop.permute.xlu0 %2103
      %2107 = vset.pattern.permute.xlu0 0
      %2108 = vperm.xlu0 %2107, %v1850
      %v2109 = vpop.permute.xlu0 %2108
      %2112 = vset.pattern.permute.xlu0 0
      %2113 = vperm.xlu0 %2112, %v1851
      %v2114 = vpop.permute.xlu0 %2113
      %2117 = vset.pattern.permute.xlu0 0
      %2118 = vperm.xlu0 %2117, %v1852
      %v2119 = vpop.permute.xlu0 %2118
      %2122 = vset.pattern.permute.xlu0 0
      %2123 = vperm.xlu0 %2122, %v1853
      %v2124 = vpop.permute.xlu0 %2123
      %2127 = vset.pattern.permute.xlu0 0
      %2128 = vperm.xlu0 %2127, %v1854
      %v2129 = vpop.permute.xlu0 %2128
      %2132 = vset.pattern.permute.xlu0 0
      %2133 = vperm.xlu0 %2132, %v1855
      %v2134 = vpop.permute.xlu0 %2133
      %2137 = vset.pattern.permute.xlu0 0
      %2138 = vperm.xlu0 %2137, %v1856
      %v2139 = vpop.permute.xlu0 %2138
      %2142 = vset.pattern.permute.xlu0 0
      %2143 = vperm.xlu0 %2142, %v1857
      %v2144 = vpop.permute.xlu0 %2143
      %2147 = vset.pattern.permute.xlu0 0
      %2148 = vperm.xlu0 %2147, %v1858
      %v2149 = vpop.permute.xlu0 %2148
      %2152 = vset.pattern.permute.xlu0 0
      %2153 = vperm.xlu0 %2152, %v1859
      %v2154 = vpop.permute.xlu0 %2153
      %2157 = vset.pattern.permute.xlu0 0
      %2158 = vperm.xlu0 %2157, %v1860
      %v2159 = vpop.permute.xlu0 %2158
      %2162 = vset.pattern.permute.xlu0 0
      %2163 = vperm.xlu0 %2162, %v1861
      %v2164 = vpop.permute.xlu0 %2163
      %2167 = vset.pattern.permute.xlu0 0
      %2168 = vperm.xlu0 %2167, %v1862
      %v2169 = vpop.permute.xlu0 %2168
      %2172 = vset.pattern.permute.xlu0 0
      %2173 = vperm.xlu0 %2172, %v1863
      %v2174 = vpop.permute.xlu0 %2173
      %2177 = vset.pattern.permute.xlu0 0
      %2178 = vperm.xlu0 %2177, %v1864
      %v2179 = vpop.permute.xlu0 %2178
      %2182 = vset.pattern.permute.xlu0 0
      %2183 = vperm.xlu0 %2182, %v1865
      %v2184 = vpop.permute.xlu0 %2183
      %v2186 = vsub.f32 %v645, %v2029
      %v2187 = vsub.f32 %v734, %v2029
      %v2188 = vsub.f32 %v823, %v2029
      %v2189 = vsub.f32 %v912, %v2029
      %v2190 = vsub.f32 %v647, %v2034
      %v2191 = vsub.f32 %v736, %v2034
      %v2192 = vsub.f32 %v825, %v2034
      %v2193 = vsub.f32 %v914, %v2034
      %v2194 = vsub.f32 %v650, %v2039
      %v2195 = vsub.f32 %v739, %v2039
      %v2196 = vsub.f32 %v828, %v2039
      %v2197 = vsub.f32 %v917, %v2039
      %v2198 = vsub.f32 %v652, %v2044
      %v2199 = vsub.f32 %v741, %v2044
      %v2200 = vsub.f32 %v830, %v2044
      %v2201 = vsub.f32 %v919, %v2044
      %v2202 = vsub.f32 %v655, %v2049
      %v2203 = vsub.f32 %v744, %v2049
      %v2204 = vsub.f32 %v833, %v2049
      %v2205 = vsub.f32 %v922, %v2049
      %v2206 = vsub.f32 %v657, %v2054
      %v2207 = vsub.f32 %v746, %v2054
      %v2208 = vsub.f32 %v835, %v2054
      %v2209 = vsub.f32 %v924, %v2054
      %v2210 = vsub.f32 %v660, %v2059
      %v2211 = vsub.f32 %v749, %v2059
      %v2212 = vsub.f32 %v838, %v2059
      %v2213 = vsub.f32 %v927, %v2059
      %v2214 = vsub.f32 %v662, %v2064
      %v2215 = vsub.f32 %v751, %v2064
      %v2216 = vsub.f32 %v840, %v2064
      %v2217 = vsub.f32 %v929, %v2064
      %v2218 = vsub.f32 %v665, %v2069
      %v2219 = vsub.f32 %v754, %v2069
      %v2220 = vsub.f32 %v843, %v2069
      %v2221 = vsub.f32 %v932, %v2069
      %v2222 = vsub.f32 %v667, %v2074
      %v2223 = vsub.f32 %v756, %v2074
      %v2224 = vsub.f32 %v845, %v2074
      %v2225 = vsub.f32 %v934, %v2074
      %v2226 = vsub.f32 %v670, %v2079
      %v2227 = vsub.f32 %v759, %v2079
      %v2228 = vsub.f32 %v848, %v2079
      %v2229 = vsub.f32 %v937, %v2079
      %v2230 = vsub.f32 %v672, %v2084
      %v2231 = vsub.f32 %v761, %v2084
      %v2232 = vsub.f32 %v850, %v2084
      %v2233 = vsub.f32 %v939, %v2084
      %v2234 = vsub.f32 %v675, %v2089
      %v2235 = vsub.f32 %v764, %v2089
      %v2236 = vsub.f32 %v853, %v2089
      %v2237 = vsub.f32 %v942, %v2089
      %v2238 = vsub.f32 %v677, %v2094
      %v2239 = vsub.f32 %v766, %v2094
      %v2240 = vsub.f32 %v855, %v2094
      %v2241 = vsub.f32 %v944, %v2094
      %v2242 = vsub.f32 %v680, %v2099
      %v2243 = vsub.f32 %v769, %v2099
      %v2244 = vsub.f32 %v858, %v2099
      %v2245 = vsub.f32 %v947, %v2099
      %v2246 = vsub.f32 %v682, %v2104
      %v2247 = vsub.f32 %v771, %v2104
      %v2248 = vsub.f32 %v860, %v2104
      %v2249 = vsub.f32 %v949, %v2104
      %v2250 = vsub.f32 %v685, %v2109
      %v2251 = vsub.f32 %v774, %v2109
      %v2252 = vsub.f32 %v863, %v2109
      %v2253 = vsub.f32 %v952, %v2109
      %v2254 = vsub.f32 %v687, %v2114
      %v2255 = vsub.f32 %v776, %v2114
      %v2256 = vsub.f32 %v865, %v2114
      %v2257 = vsub.f32 %v954, %v2114
      %v2258 = vsub.f32 %v690, %v2119
      %v2259 = vsub.f32 %v779, %v2119
      %v2260 = vsub.f32 %v868, %v2119
      %v2261 = vsub.f32 %v957, %v2119
      %v2262 = vsub.f32 %v692, %v2124
      %v2263 = vsub.f32 %v781, %v2124
      %v2264 = vsub.f32 %v870, %v2124
      %v2265 = vsub.f32 %v959, %v2124
      %v2266 = vsub.f32 %v695, %v2129
      %v2267 = vsub.f32 %v784, %v2129
      %v2268 = vsub.f32 %v873, %v2129
      %v2269 = vsub.f32 %v962, %v2129
      %v2270 = vsub.f32 %v697, %v2134
      %v2271 = vsub.f32 %v786, %v2134
      %v2272 = vsub.f32 %v875, %v2134
      %v2273 = vsub.f32 %v964, %v2134
      %v2274 = vsub.f32 %v700, %v2139
      %v2275 = vsub.f32 %v789, %v2139
      %v2276 = vsub.f32 %v878, %v2139
      %v2277 = vsub.f32 %v967, %v2139
      %v2278 = vsub.f32 %v702, %v2144
      %v2279 = vsub.f32 %v791, %v2144
      %v2280 = vsub.f32 %v880, %v2144
      %v2281 = vsub.f32 %v969, %v2144
      %v2282 = vsub.f32 %v705, %v2149
      %v2283 = vsub.f32 %v794, %v2149
      %v2284 = vsub.f32 %v883, %v2149
      %v2285 = vsub.f32 %v972, %v2149
      %v2286 = vsub.f32 %v707, %v2154
      %v2287 = vsub.f32 %v796, %v2154
      %v2288 = vsub.f32 %v885, %v2154
      %v2289 = vsub.f32 %v974, %v2154
      %v2290 = vsub.f32 %v710, %v2159
      %v2291 = vsub.f32 %v799, %v2159
      %v2292 = vsub.f32 %v888, %v2159
      %v2293 = vsub.f32 %v977, %v2159
      %v2294 = vsub.f32 %v712, %v2164
      %v2295 = vsub.f32 %v801, %v2164
      %v2296 = vsub.f32 %v890, %v2164
      %v2297 = vsub.f32 %v979, %v2164
      %v2298 = vsub.f32 %v715, %v2169
      %v2299 = vsub.f32 %v804, %v2169
      %v2300 = vsub.f32 %v893, %v2169
      %v2301 = vsub.f32 %v982, %v2169
      %v2302 = vsub.f32 %v717, %v2174
      %v2303 = vsub.f32 %v806, %v2174
      %v2304 = vsub.f32 %v895, %v2174
      %v2305 = vsub.f32 %v984, %v2174
      %v2306 = vsub.f32 %v720, %v2179
      %v2307 = vsub.f32 %v809, %v2179
      %v2308 = vsub.f32 %v898, %v2179
      %v2309 = vsub.f32 %v987, %v2179
      %v2310 = vsub.f32 %v722, %v2184
      %v2311 = vsub.f32 %v811, %v2184
      %v2312 = vsub.f32 %v900, %v2184
      %v2313 = vsub.f32 %v989, %v2184
      %v2314 = vmul.f32 %v2186, 1.442695
      %v2315 = vpow.pop %v2314
      %v2316 = vmul.f32 %v2187, 1.442695
      %v2317 = vpow.pop %v2316
      %v2318 = vmul.f32 %v2188, 1.442695
      %v2319 = vpow.pop %v2318
      %v2320 = vmul.f32 %v2189, 1.442695
      %v2321 = vpow.pop %v2320
      %v2322 = vmul.f32 %v2190, 1.442695
      %v2323 = vpow.pop %v2322
      %v2324 = vmul.f32 %v2191, 1.442695
      %v2325 = vpow.pop %v2324
      %v2326 = vmul.f32 %v2192, 1.442695
      %v2327 = vpow.pop %v2326
      %v2328 = vmul.f32 %v2193, 1.442695
      %v2329 = vpow.pop %v2328
      %v2330 = vmul.f32 %v2194, 1.442695
      %v2331 = vpow.pop %v2330
      %v2332 = vmul.f32 %v2195, 1.442695
      %v2333 = vpow.pop %v2332
      %v2334 = vmul.f32 %v2196, 1.442695
      %v2335 = vpow.pop %v2334
      %v2336 = vmul.f32 %v2197, 1.442695
      %v2337 = vpow.pop %v2336
      %v2338 = vmul.f32 %v2198, 1.442695
      %v2339 = vpow.pop %v2338
      %v2340 = vmul.f32 %v2199, 1.442695
      %v2341 = vpow.pop %v2340
      %v2342 = vmul.f32 %v2200, 1.442695
      %v2343 = vpow.pop %v2342
      %v2344 = vmul.f32 %v2201, 1.442695
      %v2345 = vpow.pop %v2344
      %v2346 = vmul.f32 %v2202, 1.442695
      %v2347 = vpow.pop %v2346
      %v2348 = vmul.f32 %v2203, 1.442695
      %v2349 = vpow.pop %v2348
      %v2350 = vmul.f32 %v2204, 1.442695
      %v2351 = vpow.pop %v2350
      %v2352 = vmul.f32 %v2205, 1.442695
      %v2353 = vpow.pop %v2352
      %v2354 = vmul.f32 %v2206, 1.442695
      %v2355 = vpow.pop %v2354
      %v2356 = vmul.f32 %v2207, 1.442695
      %v2357 = vpow.pop %v2356
      %v2358 = vmul.f32 %v2208, 1.442695
      %v2359 = vpow.pop %v2358
      %v2360 = vmul.f32 %v2209, 1.442695
      %v2361 = vpow.pop %v2360
      %v2362 = vmul.f32 %v2210, 1.442695
      %v2363 = vpow.pop %v2362
      %v2364 = vmul.f32 %v2211, 1.442695
      %v2365 = vpow.pop %v2364
      %v2366 = vmul.f32 %v2212, 1.442695
      %v2367 = vpow.pop %v2366
      %v2368 = vmul.f32 %v2213, 1.442695
      %v2369 = vpow.pop %v2368
      %v2370 = vmul.f32 %v2214, 1.442695
      %v2371 = vpow.pop %v2370
      %v2372 = vmul.f32 %v2215, 1.442695
      %v2373 = vpow.pop %v2372
      %v2374 = vmul.f32 %v2216, 1.442695
      %v2375 = vpow.pop %v2374
      %v2376 = vmul.f32 %v2217, 1.442695
      %v2377 = vpow.pop %v2376
      %v2378 = vmul.f32 %v2218, 1.442695
      %v2379 = vpow.pop %v2378
      %v2380 = vmul.f32 %v2219, 1.442695
      %v2381 = vpow.pop %v2380
      %v2382 = vmul.f32 %v2220, 1.442695
      %v2383 = vpow.pop %v2382
      %v2384 = vmul.f32 %v2221, 1.442695
      %v2385 = vpow.pop %v2384
      %v2386 = vmul.f32 %v2222, 1.442695
      %v2387 = vpow.pop %v2386
      %v2388 = vmul.f32 %v2223, 1.442695
      %v2389 = vpow.pop %v2388
      %v2390 = vmul.f32 %v2224, 1.442695
      %v2391 = vpow.pop %v2390
      %v2392 = vmul.f32 %v2225, 1.442695
      %v2393 = vpow.pop %v2392
      %v2394 = vmul.f32 %v2226, 1.442695
      %v2395 = vpow.pop %v2394
      %v2396 = vmul.f32 %v2227, 1.442695
      %v2397 = vpow.pop %v2396
      %v2398 = vmul.f32 %v2228, 1.442695
      %v2399 = vpow.pop %v2398
      %v2400 = vmul.f32 %v2229, 1.442695
      %v2401 = vpow.pop %v2400
      %v2402 = vmul.f32 %v2230, 1.442695
      %v2403 = vpow.pop %v2402
      %v2404 = vmul.f32 %v2231, 1.442695
      %v2405 = vpow.pop %v2404
      %v2406 = vmul.f32 %v2232, 1.442695
      %v2407 = vpow.pop %v2406
      %v2408 = vmul.f32 %v2233, 1.442695
      %v2409 = vpow.pop %v2408
      %v2410 = vmul.f32 %v2234, 1.442695
      %v2411 = vpow.pop %v2410
      %v2412 = vmul.f32 %v2235, 1.442695
      %v2413 = vpow.pop %v2412
      %v2414 = vmul.f32 %v2236, 1.442695
      %v2415 = vpow.pop %v2414
      %v2416 = vmul.f32 %v2237, 1.442695
      %v2417 = vpow.pop %v2416
      %v2418 = vmul.f32 %v2238, 1.442695
      %v2419 = vpow.pop %v2418
      %v2420 = vmul.f32 %v2239, 1.442695
      %v2421 = vpow.pop %v2420
      %v2422 = vmul.f32 %v2240, 1.442695
      %v2423 = vpow.pop %v2422
      %v2424 = vmul.f32 %v2241, 1.442695
      %v2425 = vpow.pop %v2424
      %v2426 = vmul.f32 %v2242, 1.442695
      %v2427 = vpow.pop %v2426
      %v2428 = vmul.f32 %v2243, 1.442695
      %v2429 = vpow.pop %v2428
      %v2430 = vmul.f32 %v2244, 1.442695
      %v2431 = vpow.pop %v2430
      %v2432 = vmul.f32 %v2245, 1.442695
      %v2433 = vpow.pop %v2432
      %v2434 = vmul.f32 %v2246, 1.442695
      %v2435 = vpow.pop %v2434
      %v2436 = vmul.f32 %v2247, 1.442695
      %v2437 = vpow.pop %v2436
      %v2438 = vmul.f32 %v2248, 1.442695
      %v2439 = vpow.pop %v2438
      %v2440 = vmul.f32 %v2249, 1.442695
      %v2441 = vpow.pop %v2440
      %v2442 = vmul.f32 %v2250, 1.442695
      %v2443 = vpow.pop %v2442
      %v2444 = vmul.f32 %v2251, 1.442695
      %v2445 = vpow.pop %v2444
      %v2446 = vmul.f32 %v2252, 1.442695
      %v2447 = vpow.pop %v2446
      %v2448 = vmul.f32 %v2253, 1.442695
      %v2449 = vpow.pop %v2448
      %v2450 = vmul.f32 %v2254, 1.442695
      %v2451 = vpow.pop %v2450
      %v2452 = vmul.f32 %v2255, 1.442695
      %v2453 = vpow.pop %v2452
      %v2454 = vmul.f32 %v2256, 1.442695
      %v2455 = vpow.pop %v2454
      %v2456 = vmul.f32 %v2257, 1.442695
      %v2457 = vpow.pop %v2456
      %v2458 = vmul.f32 %v2258, 1.442695
      %v2459 = vpow.pop %v2458
      %v2460 = vmul.f32 %v2259, 1.442695
      %v2461 = vpow.pop %v2460
      %v2462 = vmul.f32 %v2260, 1.442695
      %v2463 = vpow.pop %v2462
      %v2464 = vmul.f32 %v2261, 1.442695
      %v2465 = vpow.pop %v2464
      %v2466 = vmul.f32 %v2262, 1.442695
      %v2467 = vpow.pop %v2466
      %v2468 = vmul.f32 %v2263, 1.442695
      %v2469 = vpow.pop %v2468
      %v2470 = vmul.f32 %v2264, 1.442695
      %v2471 = vpow.pop %v2470
      %v2472 = vmul.f32 %v2265, 1.442695
      %v2473 = vpow.pop %v2472
      %v2474 = vmul.f32 %v2266, 1.442695
      %v2475 = vpow.pop %v2474
      %v2476 = vmul.f32 %v2267, 1.442695
      %v2477 = vpow.pop %v2476
      %v2478 = vmul.f32 %v2268, 1.442695
      %v2479 = vpow.pop %v2478
      %v2480 = vmul.f32 %v2269, 1.442695
      %v2481 = vpow.pop %v2480
      %v2482 = vmul.f32 %v2270, 1.442695
      %v2483 = vpow.pop %v2482
      %v2484 = vmul.f32 %v2271, 1.442695
      %v2485 = vpow.pop %v2484
      %v2486 = vmul.f32 %v2272, 1.442695
      %v2487 = vpow.pop %v2486
      %v2488 = vmul.f32 %v2273, 1.442695
      %v2489 = vpow.pop %v2488
      %v2490 = vmul.f32 %v2274, 1.442695
      %v2491 = vpow.pop %v2490
      %v2492 = vmul.f32 %v2275, 1.442695
      %v2493 = vpow.pop %v2492
      %v2494 = vmul.f32 %v2276, 1.442695
      %v2495 = vpow.pop %v2494
      %v2496 = vmul.f32 %v2277, 1.442695
      %v2497 = vpow.pop %v2496
      %v2498 = vmul.f32 %v2278, 1.442695
      %v2499 = vpow.pop %v2498
      %v2500 = vmul.f32 %v2279, 1.442695
      %v2501 = vpow.pop %v2500
      %v2502 = vmul.f32 %v2280, 1.442695
      %v2503 = vpow.pop %v2502
      %v2504 = vmul.f32 %v2281, 1.442695
      %v2505 = vpow.pop %v2504
      %v2506 = vmul.f32 %v2282, 1.442695
      %v2507 = vpow.pop %v2506
      %v2508 = vmul.f32 %v2283, 1.442695
      %v2509 = vpow.pop %v2508
      %v2510 = vmul.f32 %v2284, 1.442695
      %v2511 = vpow.pop %v2510
      %v2512 = vmul.f32 %v2285, 1.442695
      %v2513 = vpow.pop %v2512
      %v2514 = vmul.f32 %v2286, 1.442695
      %v2515 = vpow.pop %v2514
      %v2516 = vmul.f32 %v2287, 1.442695
      %v2517 = vpow.pop %v2516
      %v2518 = vmul.f32 %v2288, 1.442695
      %v2519 = vpow.pop %v2518
      %v2520 = vmul.f32 %v2289, 1.442695
      %v2521 = vpow.pop %v2520
      %v2522 = vmul.f32 %v2290, 1.442695
      %v2523 = vpow.pop %v2522
      %v2524 = vmul.f32 %v2291, 1.442695
      %v2525 = vpow.pop %v2524
      %v2526 = vmul.f32 %v2292, 1.442695
      %v2527 = vpow.pop %v2526
      %v2528 = vmul.f32 %v2293, 1.442695
      %v2529 = vpow.pop %v2528
      %v2530 = vmul.f32 %v2294, 1.442695
      %v2531 = vpow.pop %v2530
      %v2532 = vmul.f32 %v2295, 1.442695
      %v2533 = vpow.pop %v2532
      %v2534 = vmul.f32 %v2296, 1.442695
      %v2535 = vpow.pop %v2534
      %v2536 = vmul.f32 %v2297, 1.442695
      %v2537 = vpow.pop %v2536
      %v2538 = vmul.f32 %v2298, 1.442695
      %v2539 = vpow.pop %v2538
      %v2540 = vmul.f32 %v2299, 1.442695
      %v2541 = vpow.pop %v2540
      %v2542 = vmul.f32 %v2300, 1.442695
      %v2543 = vpow.pop %v2542
      %v2544 = vmul.f32 %v2301, 1.442695
      %v2545 = vpow.pop %v2544
      %v2546 = vmul.f32 %v2302, 1.442695
      %v2547 = vpow.pop %v2546
      %v2548 = vmul.f32 %v2303, 1.442695
      %v2549 = vpow.pop %v2548
      %v2550 = vmul.f32 %v2304, 1.442695
      %v2551 = vpow.pop %v2550
      %v2552 = vmul.f32 %v2305, 1.442695
      %v2553 = vpow.pop %v2552
      %v2554 = vmul.f32 %v2306, 1.442695
      %v2555 = vpow.pop %v2554
      %v2556 = vmul.f32 %v2307, 1.442695
      %v2557 = vpow.pop %v2556
      %v2558 = vmul.f32 %v2308, 1.442695
      %v2559 = vpow.pop %v2558
      %v2560 = vmul.f32 %v2309, 1.442695
      %v2561 = vpow.pop %v2560
      %v2562 = vmul.f32 %v2310, 1.442695
      %v2563 = vpow.pop %v2562
      %v2564 = vmul.f32 %v2311, 1.442695
      %v2565 = vpow.pop %v2564
      %v2566 = vmul.f32 %v2312, 1.442695
      %v2567 = vpow.pop %v2566
      %v2568 = vmul.f32 %v2313, 1.442695
      %v2569 = vpow.pop %v2568
      %v2570 = vadd.f32 %v2315, %v2317
      %v2571 = vadd.f32 %v2570, %v2319
      %v2572 = vadd.f32 %v2571, %v2321
      %2573 = vadd.xlane.f32.xlu0 %v2572
      %v2574 = vpop.xlane.xlu0 %2573
      %v2575 = vadd.f32 %v2323, %v2325
      %v2576 = vadd.f32 %v2575, %v2327
      %v2577 = vadd.f32 %v2576, %v2329
      %2578 = vadd.xlane.f32.xlu0 %v2577
      %v2579 = vpop.xlane.xlu0 %2578
      %v2580 = vadd.f32 %v2331, %v2333
      %v2581 = vadd.f32 %v2580, %v2335
      %v2582 = vadd.f32 %v2581, %v2337
      %2583 = vadd.xlane.f32.xlu0 %v2582
      %v2584 = vpop.xlane.xlu0 %2583
      %v2585 = vadd.f32 %v2339, %v2341
      %v2586 = vadd.f32 %v2585, %v2343
      %v2587 = vadd.f32 %v2586, %v2345
      %2588 = vadd.xlane.f32.xlu0 %v2587
      %v2589 = vpop.xlane.xlu0 %2588
      %v2590 = vadd.f32 %v2347, %v2349
      %v2591 = vadd.f32 %v2590, %v2351
      %v2592 = vadd.f32 %v2591, %v2353
      %2593 = vadd.xlane.f32.xlu0 %v2592
      %v2594 = vpop.xlane.xlu0 %2593
      %v2595 = vadd.f32 %v2355, %v2357
      %v2596 = vadd.f32 %v2595, %v2359
      %v2597 = vadd.f32 %v2596, %v2361
      %2598 = vadd.xlane.f32.xlu0 %v2597
      %v2599 = vpop.xlane.xlu0 %2598
      %v2600 = vadd.f32 %v2363, %v2365
      %v2601 = vadd.f32 %v2600, %v2367
      %v2602 = vadd.f32 %v2601, %v2369
      %2603 = vadd.xlane.f32.xlu0 %v2602
      %v2604 = vpop.xlane.xlu0 %2603
      %v2605 = vadd.f32 %v2371, %v2373
      %v2606 = vadd.f32 %v2605, %v2375
      %v2607 = vadd.f32 %v2606, %v2377
      %2608 = vadd.xlane.f32.xlu0 %v2607
      %v2609 = vpop.xlane.xlu0 %2608
      %v2610 = vadd.f32 %v2379, %v2381
      %v2611 = vadd.f32 %v2610, %v2383
      %v2612 = vadd.f32 %v2611, %v2385
      %2613 = vadd.xlane.f32.xlu0 %v2612
      %v2614 = vpop.xlane.xlu0 %2613
      %v2615 = vadd.f32 %v2387, %v2389
      %v2616 = vadd.f32 %v2615, %v2391
      %v2617 = vadd.f32 %v2616, %v2393
      %2618 = vadd.xlane.f32.xlu0 %v2617
      %v2619 = vpop.xlane.xlu0 %2618
      %v2620 = vadd.f32 %v2395, %v2397
      %v2621 = vadd.f32 %v2620, %v2399
      %v2622 = vadd.f32 %v2621, %v2401
      %2623 = vadd.xlane.f32.xlu0 %v2622
      %v2624 = vpop.xlane.xlu0 %2623
      %v2625 = vadd.f32 %v2403, %v2405
      %v2626 = vadd.f32 %v2625, %v2407
      %v2627 = vadd.f32 %v2626, %v2409
      %2628 = vadd.xlane.f32.xlu0 %v2627
      %v2629 = vpop.xlane.xlu0 %2628
      %v2630 = vadd.f32 %v2411, %v2413
      %v2631 = vadd.f32 %v2630, %v2415
      %v2632 = vadd.f32 %v2631, %v2417
      %2633 = vadd.xlane.f32.xlu0 %v2632
      %v2634 = vpop.xlane.xlu0 %2633
      %v2635 = vadd.f32 %v2419, %v2421
      %v2636 = vadd.f32 %v2635, %v2423
      %v2637 = vadd.f32 %v2636, %v2425
      %2638 = vadd.xlane.f32.xlu0 %v2637
      %v2639 = vpop.xlane.xlu0 %2638
      %v2640 = vadd.f32 %v2427, %v2429
      %v2641 = vadd.f32 %v2640, %v2431
      %v2642 = vadd.f32 %v2641, %v2433
      %2643 = vadd.xlane.f32.xlu0 %v2642
      %v2644 = vpop.xlane.xlu0 %2643
      %v2645 = vadd.f32 %v2435, %v2437
      %v2646 = vadd.f32 %v2645, %v2439
      %v2647 = vadd.f32 %v2646, %v2441
      %2648 = vadd.xlane.f32.xlu0 %v2647
      %v2649 = vpop.xlane.xlu0 %2648
      %v2650 = vadd.f32 %v2443, %v2445
      %v2651 = vadd.f32 %v2650, %v2447
      %v2652 = vadd.f32 %v2651, %v2449
      %2653 = vadd.xlane.f32.xlu0 %v2652
      %v2654 = vpop.xlane.xlu0 %2653
      %v2655 = vadd.f32 %v2451, %v2453
      %v2656 = vadd.f32 %v2655, %v2455
      %v2657 = vadd.f32 %v2656, %v2457
      %2658 = vadd.xlane.f32.xlu0 %v2657
      %v2659 = vpop.xlane.xlu0 %2658
      %v2660 = vadd.f32 %v2459, %v2461
      %v2661 = vadd.f32 %v2660, %v2463
      %v2662 = vadd.f32 %v2661, %v2465
      %2663 = vadd.xlane.f32.xlu0 %v2662
      %v2664 = vpop.xlane.xlu0 %2663
      %v2665 = vadd.f32 %v2467, %v2469
      %v2666 = vadd.f32 %v2665, %v2471
      %v2667 = vadd.f32 %v2666, %v2473
      %2668 = vadd.xlane.f32.xlu0 %v2667
      %v2669 = vpop.xlane.xlu0 %2668
      %v2670 = vadd.f32 %v2475, %v2477
      %v2671 = vadd.f32 %v2670, %v2479
      %v2672 = vadd.f32 %v2671, %v2481
      %2673 = vadd.xlane.f32.xlu0 %v2672
      %v2674 = vpop.xlane.xlu0 %2673
      %v2675 = vadd.f32 %v2483, %v2485
      %v2676 = vadd.f32 %v2675, %v2487
      %v2677 = vadd.f32 %v2676, %v2489
      %2678 = vadd.xlane.f32.xlu0 %v2677
      %v2679 = vpop.xlane.xlu0 %2678
      %v2680 = vadd.f32 %v2491, %v2493
      %v2681 = vadd.f32 %v2680, %v2495
      %v2682 = vadd.f32 %v2681, %v2497
      %2683 = vadd.xlane.f32.xlu0 %v2682
      %v2684 = vpop.xlane.xlu0 %2683
      %v2685 = vadd.f32 %v2499, %v2501
      %v2686 = vadd.f32 %v2685, %v2503
      %v2687 = vadd.f32 %v2686, %v2505
      %2688 = vadd.xlane.f32.xlu0 %v2687
      %v2689 = vpop.xlane.xlu0 %2688
      %v2690 = vadd.f32 %v2507, %v2509
      %v2691 = vadd.f32 %v2690, %v2511
      %v2692 = vadd.f32 %v2691, %v2513
      %2693 = vadd.xlane.f32.xlu0 %v2692
      %v2694 = vpop.xlane.xlu0 %2693
      %v2695 = vadd.f32 %v2515, %v2517
      %v2696 = vadd.f32 %v2695, %v2519
      %v2697 = vadd.f32 %v2696, %v2521
      %2698 = vadd.xlane.f32.xlu0 %v2697
      %v2699 = vpop.xlane.xlu0 %2698
      %v2700 = vadd.f32 %v2523, %v2525
      %v2701 = vadd.f32 %v2700, %v2527
      %v2702 = vadd.f32 %v2701, %v2529
      %2703 = vadd.xlane.f32.xlu0 %v2702
      %v2704 = vpop.xlane.xlu0 %2703
      %v2705 = vadd.f32 %v2531, %v2533
      %v2706 = vadd.f32 %v2705, %v2535
      %v2707 = vadd.f32 %v2706, %v2537
      %2708 = vadd.xlane.f32.xlu0 %v2707
      %v2709 = vpop.xlane.xlu0 %2708
      %v2710 = vadd.f32 %v2539, %v2541
      %v2711 = vadd.f32 %v2710, %v2543
      %v2712 = vadd.f32 %v2711, %v2545
      %2713 = vadd.xlane.f32.xlu0 %v2712
      %v2714 = vpop.xlane.xlu0 %2713
      %v2715 = vadd.f32 %v2547, %v2549
      %v2716 = vadd.f32 %v2715, %v2551
      %v2717 = vadd.f32 %v2716, %v2553
      %2718 = vadd.xlane.f32.xlu0 %v2717
      %v2719 = vpop.xlane.xlu0 %2718
      %v2720 = vadd.f32 %v2555, %v2557
      %v2721 = vadd.f32 %v2720, %v2559
      %v2722 = vadd.f32 %v2721, %v2561
      %2723 = vadd.xlane.f32.xlu0 %v2722
      %v2724 = vpop.xlane.xlu0 %2723
      %v2725 = vadd.f32 %v2563, %v2565
      %v2726 = vadd.f32 %v2725, %v2567
      %v2727 = vadd.f32 %v2726, %v2569
      %2728 = vadd.xlane.f32.xlu0 %v2727
      %v2729 = vpop.xlane.xlu0 %2728
      %v2730 = vadd.f32 %v1994, %v2574
      %v2731 = vadd.f32 %v1995, %v2579
      %v2732 = vadd.f32 %v1996, %v2584
      %v2733 = vadd.f32 %v1997, %v2589
      %v2734 = vadd.f32 %v1998, %v2594
      %v2735 = vadd.f32 %v1999, %v2599
      %v2736 = vadd.f32 %v2000, %v2604
      %v2737 = vadd.f32 %v2001, %v2609
      %v2738 = vadd.f32 %v2002, %v2614
      %v2739 = vadd.f32 %v2003, %v2619
      %v2740 = vadd.f32 %v2004, %v2624
      %v2741 = vadd.f32 %v2005, %v2629
      %v2742 = vadd.f32 %v2006, %v2634
      %v2743 = vadd.f32 %v2007, %v2639
      %v2744 = vadd.f32 %v2008, %v2644
      %v2745 = vadd.f32 %v2009, %v2649
      %v2746 = vadd.f32 %v2010, %v2654
      %v2747 = vadd.f32 %v2011, %v2659
      %v2748 = vadd.f32 %v2012, %v2664
      %v2749 = vadd.f32 %v2013, %v2669
      %v2750 = vadd.f32 %v2014, %v2674
      %v2751 = vadd.f32 %v2015, %v2679
      %v2752 = vadd.f32 %v2016, %v2684
      %v2753 = vadd.f32 %v2017, %v2689
      %v2754 = vadd.f32 %v2018, %v2694
      %v2755 = vadd.f32 %v2019, %v2699
      %v2756 = vadd.f32 %v2020, %v2704
      %v2757 = vadd.f32 %v2021, %v2709
      %v2758 = vadd.f32 %v2022, %v2714
      %v2759 = vadd.f32 %v2023, %v2719
      %v2760 = vadd.f32 %v2024, %v2724
      %v2761 = vadd.f32 %v2025, %v2729
      %2762 = vst.msk [vmem:[#allocation3] sm:$0xff] %vm1609, %v2730
      %2763 = vst.msk [vmem:[#allocation3 + $0x8] sm:$0xff] %vm1609, %v2731
      %2764 = vst.msk [vmem:[#allocation3 + $0x10] sm:$0xff] %vm1609, %v2732
      %2765 = vst.msk [vmem:[#allocation3 + $0x18] sm:$0xff] %vm1609, %v2733
      %2766 = vst.msk [vmem:[#allocation3 + $0x20] sm:$0xff] %vm1609, %v2734
      %2767 = vst.msk [vmem:[#allocation3 + $0x28] sm:$0xff] %vm1609, %v2735
      %2768 = vst.msk [vmem:[#allocation3 + $0x30] sm:$0xff] %vm1609, %v2736
      %2769 = vst.msk [vmem:[#allocation3 + $0x38] sm:$0xff] %vm1609, %v2737
      %2770 = vst.msk [vmem:[#allocation3 + $0x40] sm:$0xff] %vm1609, %v2738
      %2771 = vst.msk [vmem:[#allocation3 + $0x48] sm:$0xff] %vm1609, %v2739
      %2772 = vst.msk [vmem:[#allocation3 + $0x50] sm:$0xff] %vm1609, %v2740
      %2773 = vst.msk [vmem:[#allocation3 + $0x58] sm:$0xff] %vm1609, %v2741
      %2774 = vst.msk [vmem:[#allocation3 + $0x60] sm:$0xff] %vm1609, %v2742
      %2775 = vst.msk [vmem:[#allocation3 + $0x68] sm:$0xff] %vm1609, %v2743
      %2776 = vst.msk [vmem:[#allocation3 + $0x70] sm:$0xff] %vm1609, %v2744
      %2777 = vst.msk [vmem:[#allocation3 + $0x78] sm:$0xff] %vm1609, %v2745
      %2778 = vst.msk [vmem:[#allocation3 + $0x80] sm:$0xff] %vm1609, %v2746
      %2779 = vst.msk [vmem:[#allocation3 + $0x88] sm:$0xff] %vm1609, %v2747
      %2780 = vst.msk [vmem:[#allocation3 + $0x90] sm:$0xff] %vm1609, %v2748
      %2781 = vst.msk [vmem:[#allocation3 + $0x98] sm:$0xff] %vm1609, %v2749
      %2782 = vst.msk [vmem:[#allocation3 + $0xa0] sm:$0xff] %vm1609, %v2750
      %2783 = vst.msk [vmem:[#allocation3 + $0xa8] sm:$0xff] %vm1609, %v2751
      %2784 = vst.msk [vmem:[#allocation3 + $0xb0] sm:$0xff] %vm1609, %v2752
      %2785 = vst.msk [vmem:[#allocation3 + $0xb8] sm:$0xff] %vm1609, %v2753
      %2786 = vst.msk [vmem:[#allocation3 + $0xc0] sm:$0xff] %vm1609, %v2754
      %2787 = vst.msk [vmem:[#allocation3 + $0xc8] sm:$0xff] %vm1609, %v2755
      %2788 = vst.msk [vmem:[#allocation3 + $0xd0] sm:$0xff] %vm1609, %v2756
      %2789 = vst.msk [vmem:[#allocation3 + $0xd8] sm:$0xff] %vm1609, %v2757
      %2790 = vst.msk [vmem:[#allocation3 + $0xe0] sm:$0xff] %vm1609, %v2758
      %2791 = vst.msk [vmem:[#allocation3 + $0xe8] sm:$0xff] %vm1609, %v2759
      %2792 = vst.msk [vmem:[#allocation3 + $0xf0] sm:$0xff] %vm1609, %v2760
      %2793 = vst.msk [vmem:[#allocation3 + $0xf8] sm:$0xff] %vm1609, %v2761
      %2794 = vst.msk [vmem:[#allocation2] sm:$0xff] %vm1609, %v1834
      %2795 = vst.msk [vmem:[#allocation2 + $0x8] sm:$0xff] %vm1609, %v1835
      %2796 = vst.msk [vmem:[#allocation2 + $0x10] sm:$0xff] %vm1609, %v1836
      %2797 = vst.msk [vmem:[#allocation2 + $0x18] sm:$0xff] %vm1609, %v1837
      %2798 = vst.msk [vmem:[#allocation2 + $0x20] sm:$0xff] %vm1609, %v1838
      %2799 = vst.msk [vmem:[#allocation2 + $0x28] sm:$0xff] %vm1609, %v1839
      %2800 = vst.msk [vmem:[#allocation2 + $0x30] sm:$0xff] %vm1609, %v1840
      %2801 = vst.msk [vmem:[#allocation2 + $0x38] sm:$0xff] %vm1609, %v1841
      %2802 = vst.msk [vmem:[#allocation2 + $0x40] sm:$0xff] %vm1609, %v1842
      %2803 = vst.msk [vmem:[#allocation2 + $0x48] sm:$0xff] %vm1609, %v1843
      %2804 = vst.msk [vmem:[#allocation2 + $0x50] sm:$0xff] %vm1609, %v1844
      %2805 = vst.msk [vmem:[#allocation2 + $0x58] sm:$0xff] %vm1609, %v1845
      %2806 = vst.msk [vmem:[#allocation2 + $0x60] sm:$0xff] %vm1609, %v1846
      %2807 = vst.msk [vmem:[#allocation2 + $0x68] sm:$0xff] %vm1609, %v1847
      %2808 = vst.msk [vmem:[#allocation2 + $0x70] sm:$0xff] %vm1609, %v1848
      %2809 = vst.msk [vmem:[#allocation2 + $0x78] sm:$0xff] %vm1609, %v1849
      %2810 = vst.msk [vmem:[#allocation2 + $0x80] sm:$0xff] %vm1609, %v1850
      %2811 = vst.msk [vmem:[#allocation2 + $0x88] sm:$0xff] %vm1609, %v1851
      %2812 = vst.msk [vmem:[#allocation2 + $0x90] sm:$0xff] %vm1609, %v1852
      %2813 = vst.msk [vmem:[#allocation2 + $0x98] sm:$0xff] %vm1609, %v1853
      %2814 = vst.msk [vmem:[#allocation2 + $0xa0] sm:$0xff] %vm1609, %v1854
      %2815 = vst.msk [vmem:[#allocation2 + $0xa8] sm:$0xff] %vm1609, %v1855
      %2816 = vst.msk [vmem:[#allocation2 + $0xb0] sm:$0xff] %vm1609, %v1856
      %2817 = vst.msk [vmem:[#allocation2 + $0xb8] sm:$0xff] %vm1609, %v1857
      %2818 = vst.msk [vmem:[#allocation2 + $0xc0] sm:$0xff] %vm1609, %v1858
      %2819 = vst.msk [vmem:[#allocation2 + $0xc8] sm:$0xff] %vm1609, %v1859
      %2820 = vst.msk [vmem:[#allocation2 + $0xd0] sm:$0xff] %vm1609, %v1860
      %2821 = vst.msk [vmem:[#allocation2 + $0xd8] sm:$0xff] %vm1609, %v1861
      %2822 = vst.msk [vmem:[#allocation2 + $0xe0] sm:$0xff] %vm1609, %v1862
      %2823 = vst.msk [vmem:[#allocation2 + $0xe8] sm:$0xff] %vm1609, %v1863
      %2824 = vst.msk [vmem:[#allocation2 + $0xf0] sm:$0xff] %vm1609, %v1864
      %2825 = vst.msk [vmem:[#allocation2 + $0xf8] sm:$0xff] %vm1609, %v1865
      // Predicated region
      $region37: #{spin_forward.1} parent=31 // pred_check
        %p2826 = pneg %p276
      $region38: #{spin_forward.1} parent=31 // pred_check_branch
        %2828 = sbr.rel (%p2826) target = $region40
      $region39: #{spin_forward.1} parent=31 // pred_region
        %v2829 = vld [vmem:[#allocation4] sm:$0xff]
        %v2830 = vld [vmem:[#allocation4 + $0x8] sm:$0xff]
        %v2831 = vld [vmem:[#allocation4 + $0x10] sm:$0xff]
        %v2832 = vld [vmem:[#allocation4 + $0x18] sm:$0xff]
        %v2833 = vld [vmem:[#allocation4 + $0x20] sm:$0xff]
        %v2834 = vld [vmem:[#allocation4 + $0x28] sm:$0xff]
        %v2835 = vld [vmem:[#allocation4 + $0x30] sm:$0xff]
        %v2836 = vld [vmem:[#allocation4 + $0x38] sm:$0xff]
        %v2837 = vld [vmem:[#allocation4 + $0x40] sm:$0xff]
        %v2838 = vld [vmem:[#allocation4 + $0x48] sm:$0xff]
        %v2839 = vld [vmem:[#allocation4 + $0x50] sm:$0xff]
        %v2840 = vld [vmem:[#allocation4 + $0x58] sm:$0xff]
        %v2841 = vld [vmem:[#allocation4 + $0x60] sm:$0xff]
        %v2842 = vld [vmem:[#allocation4 + $0x68] sm:$0xff]
        %v2843 = vld [vmem:[#allocation4 + $0x70] sm:$0xff]
        %v2844 = vld [vmem:[#allocation4 + $0x78] sm:$0xff]
        %v2845 = vld [vmem:[#allocation4 + $0x80] sm:$0xff]
        %v2846 = vld [vmem:[#allocation4 + $0x88] sm:$0xff]
        %v2847 = vld [vmem:[#allocation4 + $0x90] sm:$0xff]
        %v2848 = vld [vmem:[#allocation4 + $0x98] sm:$0xff]
        %v2849 = vld [vmem:[#allocation4 + $0xa0] sm:$0xff]
        %v2850 = vld [vmem:[#allocation4 + $0xa8] sm:$0xff]
        %v2851 = vld [vmem:[#allocation4 + $0xb0] sm:$0xff]
        %v2852 = vld [vmem:[#allocation4 + $0xb8] sm:$0xff]
        %v2853 = vld [vmem:[#allocation4 + $0xc0] sm:$0xff]
        %v2854 = vld [vmem:[#allocation4 + $0xc8] sm:$0xff]
        %v2855 = vld [vmem:[#allocation4 + $0xd0] sm:$0xff]
        %v2856 = vld [vmem:[#allocation4 + $0xd8] sm:$0xff]
        %v2857 = vld [vmem:[#allocation4 + $0xe0] sm:$0xff]
        %v2858 = vld [vmem:[#allocation4 + $0xe8] sm:$0xff]
        %v2859 = vld [vmem:[#allocation4 + $0xf0] sm:$0xff]
        %v2860 = vld [vmem:[#allocation4 + $0xf8] sm:$0xff]
        %v2861 = vld [vmem:[#allocation2] sm:$0xff]
        %v2862 = vld [vmem:[#allocation2 + $0x8] sm:$0xff]
        %v2863 = vld [vmem:[#allocation2 + $0x10] sm:$0xff]
        %v2864 = vld [vmem:[#allocation2 + $0x18] sm:$0xff]
        %v2865 = vld [vmem:[#allocation2 + $0x20] sm:$0xff]
        %v2866 = vld [vmem:[#allocation2 + $0x28] sm:$0xff]
        %v2867 = vld [vmem:[#allocation2 + $0x30] sm:$0xff]
        %v2868 = vld [vmem:[#allocation2 + $0x38] sm:$0xff]
        %v2869 = vld [vmem:[#allocation2 + $0x40] sm:$0xff]
        %v2870 = vld [vmem:[#allocation2 + $0x48] sm:$0xff]
        %v2871 = vld [vmem:[#allocation2 + $0x50] sm:$0xff]
        %v2872 = vld [vmem:[#allocation2 + $0x58] sm:$0xff]
        %v2873 = vld [vmem:[#allocation2 + $0x60] sm:$0xff]
        %v2874 = vld [vmem:[#allocation2 + $0x68] sm:$0xff]
        %v2875 = vld [vmem:[#allocation2 + $0x70] sm:$0xff]
        %v2876 = vld [vmem:[#allocation2 + $0x78] sm:$0xff]
        %v2877 = vld [vmem:[#allocation2 + $0x80] sm:$0xff]
        %v2878 = vld [vmem:[#allocation2 + $0x88] sm:$0xff]
        %v2879 = vld [vmem:[#allocation2 + $0x90] sm:$0xff]
        %v2880 = vld [vmem:[#allocation2 + $0x98] sm:$0xff]
        %v2881 = vld [vmem:[#allocation2 + $0xa0] sm:$0xff]
        %v2882 = vld [vmem:[#allocation2 + $0xa8] sm:$0xff]
        %v2883 = vld [vmem:[#allocation2 + $0xb0] sm:$0xff]
        %v2884 = vld [vmem:[#allocation2 + $0xb8] sm:$0xff]
        %v2885 = vld [vmem:[#allocation2 + $0xc0] sm:$0xff]
        %v2886 = vld [vmem:[#allocation2 + $0xc8] sm:$0xff]
        %v2887 = vld [vmem:[#allocation2 + $0xd0] sm:$0xff]
        %v2888 = vld [vmem:[#allocation2 + $0xd8] sm:$0xff]
        %v2889 = vld [vmem:[#allocation2 + $0xe0] sm:$0xff]
        %v2890 = vld [vmem:[#allocation2 + $0xe8] sm:$0xff]
        %v2891 = vld [vmem:[#allocation2 + $0xf0] sm:$0xff]
        %v2892 = vld [vmem:[#allocation2 + $0xf8] sm:$0xff]
        %v2893 = vld [vmem:[#allocation3] sm:$0xff]
        %v2894 = vld [vmem:[#allocation3 + $0x8] sm:$0xff]
        %v2895 = vld [vmem:[#allocation3 + $0x10] sm:$0xff]
        %v2896 = vld [vmem:[#allocation3 + $0x18] sm:$0xff]
        %v2897 = vld [vmem:[#allocation3 + $0x20] sm:$0xff]
        %v2898 = vld [vmem:[#allocation3 + $0x28] sm:$0xff]
        %v2899 = vld [vmem:[#allocation3 + $0x30] sm:$0xff]
        %v2900 = vld [vmem:[#allocation3 + $0x38] sm:$0xff]
        %v2901 = vld [vmem:[#allocation3 + $0x40] sm:$0xff]
        %v2902 = vld [vmem:[#allocation3 + $0x48] sm:$0xff]
        %v2903 = vld [vmem:[#allocation3 + $0x50] sm:$0xff]
        %v2904 = vld [vmem:[#allocation3 + $0x58] sm:$0xff]
        %v2905 = vld [vmem:[#allocation3 + $0x60] sm:$0xff]
        %v2906 = vld [vmem:[#allocation3 + $0x68] sm:$0xff]
        %v2907 = vld [vmem:[#allocation3 + $0x70] sm:$0xff]
        %v2908 = vld [vmem:[#allocation3 + $0x78] sm:$0xff]
        %v2909 = vld [vmem:[#allocation3 + $0x80] sm:$0xff]
        %v2910 = vld [vmem:[#allocation3 + $0x88] sm:$0xff]
        %v2911 = vld [vmem:[#allocation3 + $0x90] sm:$0xff]
        %v2912 = vld [vmem:[#allocation3 + $0x98] sm:$0xff]
        %v2913 = vld [vmem:[#allocation3 + $0xa0] sm:$0xff]
        %v2914 = vld [vmem:[#allocation3 + $0xa8] sm:$0xff]
        %v2915 = vld [vmem:[#allocation3 + $0xb0] sm:$0xff]
        %v2916 = vld [vmem:[#allocation3 + $0xb8] sm:$0xff]
        %v2917 = vld [vmem:[#allocation3 + $0xc0] sm:$0xff]
        %v2918 = vld [vmem:[#allocation3 + $0xc8] sm:$0xff]
        %v2919 = vld [vmem:[#allocation3 + $0xd0] sm:$0xff]
        %v2920 = vld [vmem:[#allocation3 + $0xd8] sm:$0xff]
        %v2921 = vld [vmem:[#allocation3 + $0xe0] sm:$0xff]
        %v2922 = vld [vmem:[#allocation3 + $0xe8] sm:$0xff]
        %v2923 = vld [vmem:[#allocation3 + $0xf0] sm:$0xff]
        %v2924 = vld [vmem:[#allocation3 + $0xf8] sm:$0xff]
        %v2925 = vlog2.pop %v2893
        %v2926 = vmul.f32 %v2925, 0.6931472
        %v2927 = vlog2.pop %v2894
        %v2928 = vmul.f32 %v2927, 0.6931472
        %v2929 = vlog2.pop %v2895
        %v2930 = vmul.f32 %v2929, 0.6931472
        %v2931 = vlog2.pop %v2896
        %v2932 = vmul.f32 %v2931, 0.6931472
        %v2933 = vlog2.pop %v2897
        %v2934 = vmul.f32 %v2933, 0.6931472
        %v2935 = vlog2.pop %v2898
        %v2936 = vmul.f32 %v2935, 0.6931472
        %v2937 = vlog2.pop %v2899
        %v2938 = vmul.f32 %v2937, 0.6931472
        %v2939 = vlog2.pop %v2900
        %v2940 = vmul.f32 %v2939, 0.6931472
        %v2941 = vlog2.pop %v2901
        %v2942 = vmul.f32 %v2941, 0.6931472
        %v2943 = vlog2.pop %v2902
        %v2944 = vmul.f32 %v2943, 0.6931472
        %v2945 = vlog2.pop %v2903
        %v2946 = vmul.f32 %v2945, 0.6931472
        %v2947 = vlog2.pop %v2904
        %v2948 = vmul.f32 %v2947, 0.6931472
        %v2949 = vlog2.pop %v2905
        %v2950 = vmul.f32 %v2949, 0.6931472
        %v2951 = vlog2.pop %v2906
        %v2952 = vmul.f32 %v2951, 0.6931472
        %v2953 = vlog2.pop %v2907
        %v2954 = vmul.f32 %v2953, 0.6931472
        %v2955 = vlog2.pop %v2908
        %v2956 = vmul.f32 %v2955, 0.6931472
        %v2957 = vlog2.pop %v2909
        %v2958 = vmul.f32 %v2957, 0.6931472
        %v2959 = vlog2.pop %v2910
        %v2960 = vmul.f32 %v2959, 0.6931472
        %v2961 = vlog2.pop %v2911
        %v2962 = vmul.f32 %v2961, 0.6931472
        %v2963 = vlog2.pop %v2912
        %v2964 = vmul.f32 %v2963, 0.6931472
        %v2965 = vlog2.pop %v2913
        %v2966 = vmul.f32 %v2965, 0.6931472
        %v2967 = vlog2.pop %v2914
        %v2968 = vmul.f32 %v2967, 0.6931472
        %v2969 = vlog2.pop %v2915
        %v2970 = vmul.f32 %v2969, 0.6931472
        %v2971 = vlog2.pop %v2916
        %v2972 = vmul.f32 %v2971, 0.6931472
        %v2973 = vlog2.pop %v2917
        %v2974 = vmul.f32 %v2973, 0.6931472
        %v2975 = vlog2.pop %v2918
        %v2976 = vmul.f32 %v2975, 0.6931472
        %v2977 = vlog2.pop %v2919
        %v2978 = vmul.f32 %v2977, 0.6931472
        %v2979 = vlog2.pop %v2920
        %v2980 = vmul.f32 %v2979, 0.6931472
        %v2981 = vlog2.pop %v2921
        %v2982 = vmul.f32 %v2981, 0.6931472
        %v2983 = vlog2.pop %v2922
        %v2984 = vmul.f32 %v2983, 0.6931472
        %v2985 = vlog2.pop %v2923
        %v2986 = vmul.f32 %v2985, 0.6931472
        %v2987 = vlog2.pop %v2924
        %v2988 = vmul.f32 %v2987, 0.6931472
        %v2989 = vadd.f32 %v2861, %v2926
        %v2990 = vadd.f32 %v2862, %v2928
        %v2991 = vadd.f32 %v2863, %v2930
        %v2992 = vadd.f32 %v2864, %v2932
        %v2993 = vadd.f32 %v2865, %v2934
        %v2994 = vadd.f32 %v2866, %v2936
        %v2995 = vadd.f32 %v2867, %v2938
        %v2996 = vadd.f32 %v2868, %v2940
        %v2997 = vadd.f32 %v2869, %v2942
        %v2998 = vadd.f32 %v2870, %v2944
        %v2999 = vadd.f32 %v2871, %v2946
        %v3000 = vadd.f32 %v2872, %v2948
        %v3001 = vadd.f32 %v2873, %v2950
        %v3002 = vadd.f32 %v2874, %v2952
        %v3003 = vadd.f32 %v2875, %v2954
        %v3004 = vadd.f32 %v2876, %v2956
        %v3005 = vadd.f32 %v2877, %v2958
        %v3006 = vadd.f32 %v2878, %v2960
        %v3007 = vadd.f32 %v2879, %v2962
        %v3008 = vadd.f32 %v2880, %v2964
        %v3009 = vadd.f32 %v2881, %v2966
        %v3010 = vadd.f32 %v2882, %v2968
        %v3011 = vadd.f32 %v2883, %v2970
        %v3012 = vadd.f32 %v2884, %v2972
        %v3013 = vadd.f32 %v2885, %v2974
        %v3014 = vadd.f32 %v2886, %v2976
        %v3015 = vadd.f32 %v2887, %v2978
        %v3016 = vadd.f32 %v2888, %v2980
        %v3017 = vadd.f32 %v2889, %v2982
        %v3018 = vadd.f32 %v2890, %v2984
        %v3019 = vadd.f32 %v2891, %v2986
        %v3020 = vadd.f32 %v2892, %v2988
        %v3021 = vsub.f32 %v2829, %v2989
        %v3022 = vsub.f32 %v2830, %v2990
        %v3023 = vsub.f32 %v2831, %v2991
        %v3024 = vsub.f32 %v2832, %v2992
        %v3025 = vsub.f32 %v2833, %v2993
        %v3026 = vsub.f32 %v2834, %v2994
        %v3027 = vsub.f32 %v2835, %v2995
        %v3028 = vsub.f32 %v2836, %v2996
        %v3029 = vsub.f32 %v2837, %v2997
        %v3030 = vsub.f32 %v2838, %v2998
        %v3031 = vsub.f32 %v2839, %v2999
        %v3032 = vsub.f32 %v2840, %v3000
        %v3033 = vsub.f32 %v2841, %v3001
        %v3034 = vsub.f32 %v2842, %v3002
        %v3035 = vsub.f32 %v2843, %v3003
        %v3036 = vsub.f32 %v2844, %v3004
        %v3037 = vsub.f32 %v2845, %v3005
        %v3038 = vsub.f32 %v2846, %v3006
        %v3039 = vsub.f32 %v2847, %v3007
        %v3040 = vsub.f32 %v2848, %v3008
        %v3041 = vsub.f32 %v2849, %v3009
        %v3042 = vsub.f32 %v2850, %v3010
        %v3043 = vsub.f32 %v2851, %v3011
        %v3044 = vsub.f32 %v2852, %v3012
        %v3045 = vsub.f32 %v2853, %v3013
        %v3046 = vsub.f32 %v2854, %v3014
        %v3047 = vsub.f32 %v2855, %v3015
        %v3048 = vsub.f32 %v2856, %v3016
        %v3049 = vsub.f32 %v2857, %v3017
        %v3050 = vsub.f32 %v2858, %v3018
        %v3051 = vsub.f32 %v2859, %v3019
        %v3052 = vsub.f32 %v2860, %v3020
        %3053 = vst.msk [vmem:[%s273] sm:$0xff] %vm1609, %v3021
        %3054 = vst.msk [vmem:[%s273 + $0x8] sm:$0xff] %vm1609, %v3022
        %3055 = vst.msk [vmem:[%s273 + $0x10] sm:$0xff] %vm1609, %v3023
        %3056 = vst.msk [vmem:[%s273 + $0x18] sm:$0xff] %vm1609, %v3024
        %3057 = vst.msk [vmem:[%s273 + $0x20] sm:$0xff] %vm1609, %v3025
        %3058 = vst.msk [vmem:[%s273 + $0x28] sm:$0xff] %vm1609, %v3026
        %3059 = vst.msk [vmem:[%s273 + $0x30] sm:$0xff] %vm1609, %v3027
        %3060 = vst.msk [vmem:[%s273 + $0x38] sm:$0xff] %vm1609, %v3028
        %3061 = vst.msk [vmem:[%s273 + $0x40] sm:$0xff] %vm1609, %v3029
        %3062 = vst.msk [vmem:[%s273 + $0x48] sm:$0xff] %vm1609, %v3030
        %3063 = vst.msk [vmem:[%s273 + $0x50] sm:$0xff] %vm1609, %v3031
        %3064 = vst.msk [vmem:[%s273 + $0x58] sm:$0xff] %vm1609, %v3032
        %3065 = vst.msk [vmem:[%s273 + $0x60] sm:$0xff] %vm1609, %v3033
        %3066 = vst.msk [vmem:[%s273 + $0x68] sm:$0xff] %vm1609, %v3034
        %3067 = vst.msk [vmem:[%s273 + $0x70] sm:$0xff] %vm1609, %v3035
        %3068 = vst.msk [vmem:[%s273 + $0x78] sm:$0xff] %vm1609, %v3036
        %3069 = vst.msk [vmem:[%s273 + $0x80] sm:$0xff] %vm1609, %v3037
        %3070 = vst.msk [vmem:[%s273 + $0x88] sm:$0xff] %vm1609, %v3038
        %3071 = vst.msk [vmem:[%s273 + $0x90] sm:$0xff] %vm1609, %v3039
        %3072 = vst.msk [vmem:[%s273 + $0x98] sm:$0xff] %vm1609, %v3040
        %3073 = vst.msk [vmem:[%s273 + $0xa0] sm:$0xff] %vm1609, %v3041
        %3074 = vst.msk [vmem:[%s273 + $0xa8] sm:$0xff] %vm1609, %v3042
        %3075 = vst.msk [vmem:[%s273 + $0xb0] sm:$0xff] %vm1609, %v3043
        %3076 = vst.msk [vmem:[%s273 + $0xb8] sm:$0xff] %vm1609, %v3044
        %3077 = vst.msk [vmem:[%s273 + $0xc0] sm:$0xff] %vm1609, %v3045
        %3078 = vst.msk [vmem:[%s273 + $0xc8] sm:$0xff] %vm1609, %v3046
        %3079 = vst.msk [vmem:[%s273 + $0xd0] sm:$0xff] %vm1609, %v3047
        %3080 = vst.msk [vmem:[%s273 + $0xd8] sm:$0xff] %vm1609, %v3048
        %3081 = vst.msk [vmem:[%s273 + $0xe0] sm:$0xff] %vm1609, %v3049
        %3082 = vst.msk [vmem:[%s273 + $0xe8] sm:$0xff] %vm1609, %v3050
        %3083 = vst.msk [vmem:[%s273 + $0xf0] sm:$0xff] %vm1609, %v3051
        %3084 = vst.msk [vmem:[%s273 + $0xf8] sm:$0xff] %vm1609, %v3052
      $region40: #{spin_forward.1} parent=31 // pred_fallthru
        _
      %s3085 = smul.u32 32, %s20
      %p3086 = scmp.lt.s32.totalorder %s19, 1
      %s3087 = scalar_select %p3086, %s19, 1
      %p3088 = scmp.lt.s32.totalorder %s3085, 31
      %s3089 = scalar_select %p3088, %s3085, 31
      %s3090 = smul.addr %s3087, 32
      %s3091 = sadd.s32 %s3089, %s3090
      %s3092 = smul.addr %s3091, 8
      %s3093 = scalar_lea.vmem %s3, %s3092
      // Predicated region
      $region41: #{spin_forward.1} parent=31 // pred_check
        %p3094 = pneg %p135
      $region42: #{spin_forward.1} parent=31 // pred_check_branch
        %3096 = sbr.rel (%p3094) target = $region44
      $region43: #{spin_forward.1} parent=31 // pred_region
        %s3097 = smul.u32 32, %s20
      $region44: #{spin_forward.1} parent=31 // pred_fallthru
        _
    $region32: #{spin_forward.1} parent=5 // pred_fallthru
      _
    %p3098 = scmp.le.s32.totalorder 2, %s9
    // Predicated region
    $region45: #{spin_forward.1} parent=5 // pred_check
      %p3099 = pneg %p3098
    $region46: #{spin_forward.1} parent=5 // pred_check_branch
      %3101 = sbr.rel (%p3099) target = $region48
    $region47: #{spin_forward.1} parent=5 // pred_region
      %s3102 = ssub.s32 %s9, 2
      // Predicated region
      $region49: #{spin_forward.1} parent=47 // pred_check
        %p3103 = pneg %p141
      $region50: #{spin_forward.1} parent=47 // pred_check_branch
        %3105 = sbr.rel (%p3103) target = $region52
      $region51: #{spin_forward.1} parent=47 // pred_region
        %s3106 = smul.u32 32, %s23
        %p3107 = scmp.lt.s32.totalorder %s22, 1
        %s3108 = scalar_select %p3107, %s22, 1
        %p3109 = scmp.lt.s32.totalorder %s3106, 31
        %s3110 = scalar_select %p3109, %s3106, 31
        %s3111 = smul.addr %s3108, 32
        %s3112 = sadd.s32 %s3110, %s3111
        %s3113 = smul.addr %s3112, 8
        %s3114 = scalar_lea.vmem %s3, %s3113
      $region52: #{spin_forward.1} parent=47 // pred_fallthru
        _
    $region48: #{spin_forward.1} parent=5 // pred_fallthru
      _
  $region6: #{spin_forward.1} parent=0 // loop_footer
    %s13 = sadd.s32 1, %s9
  $region7: #{spin_forward.1} parent=0 // loop_footer_branch
    %8 = sbr.rel target = $region3
  $region8: #{spin_forward.1} parent=0 // loop_exit
    _

</llo_original>
